<compile_context>
chip_gen: v6e
topology: v6e:2x2x1
jax: 0.10.0
libtpu: 0.0.40
codegen_flags: <defaults>
</compile_context>

<pallas_src>
import functools
import math

import jax
import jax.numpy as jnp
from jax import lax
from jax.experimental import pallas as pl
from jax.experimental.pallas import tpu as pltpu

# ---------------------------------------------------------------------------
# Small deterministic config
# ---------------------------------------------------------------------------
D_MODEL = 32          # model width
N_HEADS = 2
HEAD_K = 16           # key head dim
HEAD_V = 16           # value head dim (expand_v = 1)
CONV_K = 4            # short-conv kernel size
MLP_HIDDEN = 4 * D_MODEL
LAYER_DEPTH = 2
LAYER_NORM_SCALING = True
RMS_EPS = float(jnp.finfo(jnp.float32).eps)   # matches F.rms_norm(eps=None) in fp32
GATED_NORM_EPS = 1e-5
QK_NORM_EPS = 1e-6

QKV_DIM = 3 * N_HEADS * HEAD_K               # 96  (= q|k|v channels, conv'd)
GATE_DIM = N_HEADS * HEAD_V                  # 32
PROJ_DIM = QKV_DIM + GATE_DIM                # 128 (= q|k|v|gate)
PROJ_ALL = PROJ_DIM + 2 * N_HEADS            # 132 (= q|k|v|gate|beta|a), one matmul

MATMUL_DTYPE = jnp.bfloat16                  # MXU operand dtype (f32 accumulate)


def _mm(a, b):
    """MXU matmul: bf16 operands, f32 accumulation."""
    return jnp.dot(a.astype(MATMUL_DTYPE), b.astype(MATMUL_DTYPE),
                   preferred_element_type=jnp.float32)


def _sigmoid(x):
    return 1.0 / (1.0 + jnp.exp(-x))


def _softplus(x):
    # numerically stable softplus from exp/log/abs/max only
    return jnp.maximum(x, 0.0) + jnp.log(1.0 + jnp.exp(-jnp.abs(x)))


# ---------------------------------------------------------------------------
# Fused Block kernel: one grid step == n_batch sequences (rows = n_batch * T)
# ---------------------------------------------------------------------------
def _block_kernel(x_ref, w_all_ref, convw_ref, alog_ref, dtb_ref,
                  wo_ref, wfc_ref, wproj_ref, o_ref, *, lns, t_len, n_batch):
    h, dk, dv = N_HEADS, HEAD_K, HEAD_V
    rows, d = x_ref.shape                                           # rows = n_batch*T

    x = x_ref[...].astype(jnp.float32)                              # (rows, D)

    # ---- RMSNorm 1 (weightless) * layer_norm_scaling
    xn = lns * x * lax.rsqrt(jnp.mean(x * x, -1, keepdims=True) + RMS_EPS)

    # ---- one fused bf16 projection [q|k|v|gate|beta|a]  (D x 132)
    pro = _mm(xn, w_all_ref[...])                                   # (rows, 132) f32

    qkv = pro[:, :QKV_DIM]                                          # (rows, 96)
    gate = pro[:, QKV_DIM:PROJ_DIM]                                 # (rows, H*Dv)
    beta_all = _sigmoid(pro[:, PROJ_DIM:PROJ_DIM + h])              # (rows, H)
    a_pre = pro[:, PROJ_DIM + h:PROJ_ALL] + dtb_ref[...].astype(jnp.float32)
    neg_a = -jnp.exp(alog_ref[...].astype(jnp.float32))             # (1, H)
    decay_all = jnp.exp(neg_a * _softplus(a_pre))                   # (rows, H)

    conv_w = convw_ref[...].astype(jnp.float32)                     # (K, 96)

    # causal per-shift row masks (zero the first `shift` rows of a sequence),
    # hoisted out of all loops (JAX does not CSE broadcasts).
    seq_ids = lax.broadcasted_iota(jnp.int32, (t_len, 1), 0)
    shift_mask = [(seq_ids >= s).astype(jnp.float32) for s in range(1, CONV_K)]

    scale = dk ** -0.5
    o_heads = []                                   # per-batch (T, H*Dv) outputs
    for be in range(n_batch):                      # static: sequences in this block
        r0 = be * t_len
        qkv_b = qkv[r0:r0 + t_len, :]              # (T, 96)

        # ---- depthwise causal short conv (XLU roll + VPU mask, no MXU) + SiLU
        conv = qkv_b * conv_w[CONV_K - 1:CONV_K, :]          # shift-0 tap
        for i in range(CONV_K - 1):                          # static taps
            s = CONV_K - 1 - i
            rolled = pltpu.roll(qkv_b, shift=s, axis=0)      # rolled[t] = qkv_b[t-s]
            conv = conv + (rolled * shift_mask[s - 1]) * conv_w[i:i + 1, :]
        qkv_c = conv * _sigmoid(conv)                        # SiLU

        # ---- per-head gated delta-rule recurrence, entirely VPU/XLU
        head_outs = []
        for hh in range(h):                                   # static (H = 2)
            q_h = qkv_c[:, hh * dk:(hh + 1) * dk]
            k_h = qkv_c[:, h * dk + hh * dk: h * dk + (hh + 1) * dk]
            v_h = qkv_c[:, 2 * h * dk + hh * dv: 2 * h * dk + (hh + 1) * dv]
            beta_h = beta_all[r0:r0 + t_len, hh:hh + 1]       # (T, 1)
            dec_h = decay_all[r0:r0 + t_len, hh:hh + 1]       # (T, 1)

            # qk L2 norm + q scale, vectorized over all T before the loop
            qn = q_h * lax.rsqrt(jnp.sum(q_h * q_h, -1, keepdims=True)
                                 + QK_NORM_EPS) * scale
            kn = k_h * lax.rsqrt(jnp.sum(k_h * k_h, -1, keepdims=True)
                                 + QK_NORM_EPS)
            # one transpose per head, OUTSIDE the time loop: step t only
            # slices a (dk, 1) column (no per-step relayout, no MXU).
            qT = qn.T                                         # (dk, T)
            kT = kn.T                                         # (dk, T)

            state = jnp.zeros((dk, dv), jnp.float32)          # f32 state
            o_rows = []
            for t in range(t_len):                            # static unroll (T tiny)
                k_col = kT[:, t:t + 1]                        # (dk, 1)
                state = state * dec_h[t:t + 1, :]             # gated decay
                # k . state  -> broadcast-mul + sublane reduce (XLU), no MXU
                v_pred = jnp.sum(k_col * state, axis=0, keepdims=True)   # (1, dv)
                delta = (v_h[t:t + 1, :] - v_pred) * beta_h[t:t + 1, :]  # delta rule
                state = state + k_col * delta                 # outer product (dk,1)x(1,dv)
                o_rows.append(jnp.sum(qT[:, t:t + 1] * state,
                                      axis=0, keepdims=True))            # (1, dv)
            head_outs.append(jnp.concatenate(o_rows, axis=0))            # (T, dv)
        o_heads.append(jnp.concatenate(head_outs, axis=1))               # (T, H*Dv)

    o_all = o_heads[0] if n_batch == 1 else jnp.concatenate(o_heads, axis=0)

    # ---- gated (weightless) RMSNorm per head + SiLU(gate), one o_proj matmul
    parts = []
    for hh in range(h):
        o_h = o_all[:, hh * dv:(hh + 1) * dv]
        g_h = gate[:, hh * dv:(hh + 1) * dv]
        o_n = o_h * lax.rsqrt(jnp.mean(o_h * o_h, -1, keepdims=True) + GATED_NORM_EPS)
        parts.append(o_n * (g_h * _sigmoid(g_h)))
    o_gated = jnp.concatenate(parts, axis=1)                             # (rows, H*Dv)

    x1 = x + _mm(o_gated, wo_ref[...])                                   # residual 1

    # ---- RMSNorm 2 + ReLU^2 MLP + residual 2, single bulk store
    xn2 = lns * x1 * lax.rsqrt(jnp.mean(x1 * x1, -1, keepdims=True) + RMS_EPS)
    hid = _mm(xn2, wfc_ref[...])
    hid = jnp.maximum(hid, 0.0)
    hid = hid * hid
    o_ref[...] = (x1 + _mm(hid, wproj_ref[...])).astype(o_ref.dtype)


# ---------------------------------------------------------------------------
# Wrapper
# ---------------------------------------------------------------------------
def block_forward(x, p, num_blocks=None):
    b, t, d = x.shape
    h = N_HEADS
    lns = (1.0 / math.sqrt(LAYER_DEPTH)) if LAYER_NORM_SCALING else 1.0

    if num_blocks is None:
        # Single-TC v5e/v6e: fully collapse the batch grid (1 step, M = B*T).
        # v7x (2 TensorCores): use 2 parallel steps for B >= 4 (pass num_blocks=2
        # explicitly for small even B if targeting v7x).
        num_blocks = 2 if (b >= 4 and b % 2 == 0) else 1
    assert b % num_blocks == 0
    n_batch = b // num_blocks                  # sequences per grid step
    rows = n_batch * t

    # Fold ALL small projections into one lane-dense bf16 weight (D x 132).
    w_all = jnp.concatenate(
        [p["wq"], p["wk"], p["wv"], p["wg"], p["wb"], p["wa"]],
        axis=1).astype(MATMUL_DTYPE)                                     # (D, 132)
    conv_w = jnp.concatenate([p["conv_q"], p["conv_k"], p["conv_v"]], axis=1)  # (K, 96)
    a_log = p["A_log"].reshape(1, h)
    dt_b = p["dt_bias"].reshape(1, h)
    wo = p["wo"].astype(MATMUL_DTYPE)
    w_fc = p["w_fc"].astype(MATMUL_DTYPE)
    w_proj = p["w_proj"].astype(MATMUL_DTYPE)

    x2d = x.reshape(b * t, d)                  # (B*T, D): matmuls see M = rows

    def const_spec(shape):                     # resident (grid-invariant) weights
        nd = len(shape)
        return pl.BlockSpec(shape, lambda i, _nd=nd: (0,) * _nd)

    out = pl.pallas_call(
        functools.partial(_block_kernel, lns=lns, t_len=t, n_batch=n_batch),
        out_shape=jax.ShapeDtypeStruct((b * t, d), x.dtype),
        grid=(num_blocks,),
        in_specs=[
            pl.BlockSpec((rows, d), lambda i: (i, 0)),       # x rows for this block
            const_spec(w_all.shape),
            const_spec(conv_w.shape),
            const_spec(a_log.shape),
            const_spec(dt_b.shape),
            const_spec(wo.shape),
            const_spec(w_fc.shape),
            const_spec(w_proj.shape),
        ],
        out_specs=pl.BlockSpec((rows, d), lambda i: (i, 0)),
        compiler_params=pltpu.CompilerParams(
            dimension_semantics=("parallel",)),              # v7x: 2 TCs
    )(x2d, w_all, conv_w, a_log, dt_b, wo, w_fc, w_proj)
    return out.reshape(b, t, d)


def init_params(key):
    ks = jax.random.split(key, 12)
    s = 0.02
    f32 = jnp.float32
    return {
        "wq": jax.random.normal(ks[0], (D_MODEL, N_HEADS * HEAD_K), f32) * s,
        "wk": jax.random.normal(ks[1], (D_MODEL, N_HEADS * HEAD_K), f32) * s,
        "wv": jax.random.normal(ks[2], (D_MODEL, N_HEADS * HEAD_V), f32) * s,
        "wb": jax.random.normal(ks[3], (D_MODEL, N_HEADS), f32) * s,
        "wa": jax.random.normal(ks[4], (D_MODEL, N_HEADS), f32) * s,
        "wg": jax.random.normal(ks[5], (D_MODEL, N_HEADS * HEAD_V), f32) * s,
        "wo": jax.random.normal(ks[6], (N_HEADS * HEAD_V, D_MODEL), f32) * s,
        "conv_q": jax.random.normal(ks[7], (CONV_K, N_HEADS * HEAD_K), f32) * 0.1,
        "conv_k": jax.random.normal(ks[8], (CONV_K, N_HEADS * HEAD_K), f32) * 0.1,
        "conv_v": jax.random.normal(ks[9], (CONV_K, N_HEADS * HEAD_V), f32) * 0.1,
        "A_log": jnp.log(jnp.arange(1, N_HEADS + 1, dtype=f32)),
        "dt_bias": jnp.linspace(-2.0, 0.0, N_HEADS, dtype=f32),
        "w_fc": jax.random.normal(ks[10], (D_MODEL, MLP_HIDDEN), f32) * s,
        "w_proj": jax.random.normal(ks[11], (MLP_HIDDEN, D_MODEL), f32) * s,
    }


if __name__ == "__main__":
    key = jax.random.PRNGKey(0)
    pkey, xkey = jax.random.split(key)
    params = init_params(pkey)
    x = jax.random.normal(xkey, (2, 8, D_MODEL), jnp.float32)       # (B, T, D)

    fwd = jax.jit(block_forward)
    y = jax.block_until_ready(fwd(x, params))

    assert y.shape == x.shape
    assert bool(jnp.all(jnp.isfinite(y)))
    print("KERNEL_OK")
</pallas_src>

<mosaic_0001>
module attributes {stable_mosaic.version = 11 : i64} {
  func.func @_block_kernel(%arg0: i32, %arg1: memref<16x32xf32, #tpu.memory_space<vmem>>, %arg2: memref<32x132xbf16, #tpu.memory_space<vmem>>, %arg3: memref<4x96xf32, #tpu.memory_space<vmem>>, %arg4: memref<1x2xf32, #tpu.memory_space<vmem>>, %arg5: memref<1x2xf32, #tpu.memory_space<vmem>>, %arg6: memref<32x32xbf16, #tpu.memory_space<vmem>>, %arg7: memref<32x128xbf16, #tpu.memory_space<vmem>>, %arg8: memref<128x32xbf16, #tpu.memory_space<vmem>>, %arg9: memref<16x32xf32, #tpu.memory_space<vmem>>) attributes {dimension_semantics = [#tpu.dimension_semantics<parallel>], iteration_bounds = array<i64: 1>, scalar_prefetch = 0 : i64, scratch_operands = 0 : i64, tpu.core_type = #tpu.core_type<tc>, window_params = [{transform_indices = @transform_0, window_bounds = array<i64: 16, 32>}, {pipeline_mode = #tpu.pipeline_mode<synchronous>, transform_indices = @transform_1, window_bounds = array<i64: 32, 132>}, {pipeline_mode = #tpu.pipeline_mode<synchronous>, transform_indices = @transform_2, window_bounds = array<i64: 4, 96>}, {pipeline_mode = #tpu.pipeline_mode<synchronous>, transform_indices = @transform_3, window_bounds = array<i64: 1, 2>}, {pipeline_mode = #tpu.pipeline_mode<synchronous>, transform_indices = @transform_4, window_bounds = array<i64: 1, 2>}, {pipeline_mode = #tpu.pipeline_mode<synchronous>, transform_indices = @transform_5, window_bounds = array<i64: 32, 32>}, {pipeline_mode = #tpu.pipeline_mode<synchronous>, transform_indices = @transform_6, window_bounds = array<i64: 32, 128>}, {pipeline_mode = #tpu.pipeline_mode<synchronous>, transform_indices = @transform_7, window_bounds = array<i64: 128, 32>}, {transform_indices = @transform_8, window_bounds = array<i64: 16, 32>}]} {
    %c0 = arith.constant 0 : index
    %c0_0 = arith.constant 0 : index
    %0 = vector.load %arg1[%c0, %c0_0] : memref<16x32xf32, #tpu.memory_space<vmem>>, vector<16x32xf32>
    %cst = arith.constant 0.707106769 : f32
    %1 = vector.broadcast %cst : f32 to vector<16x32xf32>
    %2 = arith.mulf %1, %0 : vector<16x32xf32>
    %3 = arith.mulf %0, %0 : vector<16x32xf32>
    %cst_1 = arith.constant dense<0.000000e+00> : vector<16xf32>
    %4 = vector.multi_reduction <add>, %3, %cst_1 [1] : vector<16x32xf32> to vector<16xf32>
    %5 = vector.shape_cast %4 : vector<16xf32> to vector<16x1xf32>
    %cst_2 = arith.constant 3.200000e+01 : f32
    %6 = vector.broadcast %cst_2 : f32 to vector<16x1xf32>
    %7 = arith.divf %5, %6 : vector<16x1xf32>
    %cst_3 = arith.constant 1.1920929E-7 : f32
    %8 = vector.broadcast %cst_3 : f32 to vector<16x1xf32>
    %9 = arith.addf %7, %8 : vector<16x1xf32>
    %10 = math.rsqrt %9 : vector<16x1xf32>
    %11 = vector.broadcast %10 : vector<16x1xf32> to vector<16x32xf32>
    %12 = arith.mulf %2, %11 : vector<16x32xf32>
    %c0_4 = arith.constant 0 : index
    %c0_5 = arith.constant 0 : index
    %13 = vector.load %arg2[%c0_4, %c0_5] : memref<32x132xbf16, #tpu.memory_space<vmem>>, vector<32x132xbf16>
    %14 = arith.truncf %12 : vector<16x32xf32> to vector<16x32xbf16>
    %cst_6 = arith.constant dense<0.000000e+00> : vector<16x132xf32>
    %15 = tpu.matmul %14, %13, %cst_6 {dimension_numbers = #tpu.dot_dimension_numbers<[1], [0], [0], [1], [0, 0, 1, 1], [], []>} : vector<16x32xbf16>, vector<32x132xbf16>, vector<16x132xf32> -> vector<16x132xf32>
    %16 = vector.extract_strided_slice %15 {offsets = [0, 0], sizes = [16, 96], strides = [1, 1]} : vector<16x132xf32> to vector<16x96xf32>
    %17 = vector.extract_strided_slice %15 {offsets = [0, 96], sizes = [16, 32], strides = [1, 1]} : vector<16x132xf32> to vector<16x32xf32>
    %18 = vector.extract_strided_slice %15 {offsets = [0, 128], sizes = [16, 2], strides = [1, 1]} : vector<16x132xf32> to vector<16x2xf32>
    %cst_7 = arith.constant 0.000000e+00 : f32
    %19 = vector.broadcast %cst_7 : f32 to vector<16x2xf32>
    %20 = arith.subf %19, %18 : vector<16x2xf32>
    %21 = math.exp %20 : vector<16x2xf32>
    %cst_8 = arith.constant 1.000000e+00 : f32
    %22 = vector.broadcast %cst_8 : f32 to vector<16x2xf32>
    %23 = arith.addf %22, %21 : vector<16x2xf32>
    %cst_9 = arith.constant 1.000000e+00 : f32
    %24 = vector.broadcast %cst_9 : f32 to vector<16x2xf32>
    %25 = arith.divf %24, %23 : vector<16x2xf32>
    %26 = vector.extract_strided_slice %15 {offsets = [0, 130], sizes = [16, 2], strides = [1, 1]} : vector<16x132xf32> to vector<16x2xf32>
    %c0_10 = arith.constant 0 : index
    %c0_11 = arith.constant 0 : index
    %27 = vector.load %arg5[%c0_10, %c0_11] : memref<1x2xf32, #tpu.memory_space<vmem>>, vector<1x2xf32>
    %28 = vector.broadcast %27 : vector<1x2xf32> to vector<16x2xf32>
    %29 = arith.addf %26, %28 : vector<16x2xf32>
    %c0_12 = arith.constant 0 : index
    %c0_13 = arith.constant 0 : index
    %30 = vector.load %arg4[%c0_12, %c0_13] : memref<1x2xf32, #tpu.memory_space<vmem>>, vector<1x2xf32>
    %31 = math.exp %30 : vector<1x2xf32>
    %cst_14 = arith.constant 0.000000e+00 : f32
    %32 = vector.broadcast %cst_14 : f32 to vector<1x2xf32>
    %33 = arith.subf %32, %31 : vector<1x2xf32>
    %cst_15 = arith.constant 0.000000e+00 : f32
    %34 = vector.broadcast %cst_15 : f32 to vector<16x2xf32>
    %35 = arith.maximumf %29, %34 : vector<16x2xf32>
    %36 = math.absf %29 : vector<16x2xf32>
    %cst_16 = arith.constant 0.000000e+00 : f32
    %37 = vector.broadcast %cst_16 : f32 to vector<16x2xf32>
    %38 = arith.subf %37, %36 : vector<16x2xf32>
    %39 = math.exp %38 : vector<16x2xf32>
    %cst_17 = arith.constant 1.000000e+00 : f32
    %40 = vector.broadcast %cst_17 : f32 to vector<16x2xf32>
    %41 = arith.addf %40, %39 : vector<16x2xf32>
    %42 = math.log %41 : vector<16x2xf32>
    %43 = arith.addf %35, %42 : vector<16x2xf32>
    %44 = vector.broadcast %33 : vector<1x2xf32> to vector<16x2xf32>
    %45 = arith.mulf %44, %43 : vector<16x2xf32>
    %46 = math.exp %45 : vector<16x2xf32>
    %c0_18 = arith.constant 0 : index
    %c0_19 = arith.constant 0 : index
    %47 = vector.load %arg3[%c0_18, %c0_19] : memref<4x96xf32, #tpu.memory_space<vmem>>, vector<4x96xf32>
    %48 = tpu.iota {dimensions = array<i32: 0>} : vector<8x1xi32>
    %c1_i32 = arith.constant 1 : i32
    %49 = vector.broadcast %c1_i32 : i32 to vector<8x1xi32>
    %50 = arith.cmpi sge, %48, %49 : vector<8x1xi32>
    %51 = arith.extui %50 : vector<8x1xi1> to vector<8x1xi32>
    %52 = arith.sitofp %51 : vector<8x1xi32> to vector<8x1xf32>
    %c2_i32 = arith.constant 2 : i32
    %53 = vector.broadcast %c2_i32 : i32 to vector<8x1xi32>
    %54 = arith.cmpi sge, %48, %53 : vector<8x1xi32>
    %55 = arith.extui %54 : vector<8x1xi1> to vector<8x1xi32>
    %56 = arith.sitofp %55 : vector<8x1xi32> to vector<8x1xf32>
    %c3_i32 = arith.constant 3 : i32
    %57 = vector.broadcast %c3_i32 : i32 to vector<8x1xi32>
    %58 = arith.cmpi sge, %48, %57 : vector<8x1xi32>
    %59 = arith.extui %58 : vector<8x1xi1> to vector<8x1xi32>
    %60 = arith.sitofp %59 : vector<8x1xi32> to vector<8x1xf32>
    %61 = vector.extract_strided_slice %16 {offsets = [0, 0], sizes = [8, 96], strides = [1, 1]} : vector<16x96xf32> to vector<8x96xf32>
    %62 = vector.extract_strided_slice %47 {offsets = [3, 0], sizes = [1, 96], strides = [1, 1]} : vector<4x96xf32> to vector<1x96xf32>
    %63 = vector.broadcast %62 : vector<1x96xf32> to vector<8x96xf32>
    %64 = arith.mulf %61, %63 : vector<8x96xf32>
    %c3_i32_20 = arith.constant 3 : i32
    %65 = tpu.dynamic_rotate %61 by %c3_i32_20 dim 0 : vector<8x96xf32>, i32 -> vector<8x96xf32>
    %66 = vector.broadcast %60 : vector<8x1xf32> to vector<8x96xf32>
    %67 = arith.mulf %65, %66 : vector<8x96xf32>
    %68 = vector.extract_strided_slice %47 {offsets = [0, 0], sizes = [1, 96], strides = [1, 1]} : vector<4x96xf32> to vector<1x96xf32>
    %69 = vector.broadcast %68 : vector<1x96xf32> to vector<8x96xf32>
    %70 = arith.mulf %67, %69 : vector<8x96xf32>
    %71 = arith.addf %64, %70 : vector<8x96xf32>
    %c2_i32_21 = arith.constant 2 : i32
    %72 = tpu.dynamic_rotate %61 by %c2_i32_21 dim 0 : vector<8x96xf32>, i32 -> vector<8x96xf32>
    %73 = vector.broadcast %56 : vector<8x1xf32> to vector<8x96xf32>
    %74 = arith.mulf %72, %73 : vector<8x96xf32>
    %75 = vector.extract_strided_slice %47 {offsets = [1, 0], sizes = [1, 96], strides = [1, 1]} : vector<4x96xf32> to vector<1x96xf32>
    %76 = vector.broadcast %75 : vector<1x96xf32> to vector<8x96xf32>
    %77 = arith.mulf %74, %76 : vector<8x96xf32>
    %78 = arith.addf %71, %77 : vector<8x96xf32>
    %c1_i32_22 = arith.constant 1 : i32
    %79 = tpu.dynamic_rotate %61 by %c1_i32_22 dim 0 : vector<8x96xf32>, i32 -> vector<8x96xf32>
    %80 = vector.broadcast %52 : vector<8x1xf32> to vector<8x96xf32>
    %81 = arith.mulf %79, %80 : vector<8x96xf32>
    %82 = vector.extract_strided_slice %47 {offsets = [2, 0], sizes = [1, 96], strides = [1, 1]} : vector<4x96xf32> to vector<1x96xf32>
    %83 = vector.broadcast %82 : vector<1x96xf32> to vector<8x96xf32>
    %84 = arith.mulf %81, %83 : vector<8x96xf32>
    %85 = arith.addf %78, %84 : vector<8x96xf32>
    %cst_23 = arith.constant 0.000000e+00 : f32
    %86 = vector.broadcast %cst_23 : f32 to vector<8x96xf32>
    %87 = arith.subf %86, %85 : vector<8x96xf32>
    %88 = math.exp %87 : vector<8x96xf32>
    %cst_24 = arith.constant 1.000000e+00 : f32
    %89 = vector.broadcast %cst_24 : f32 to vector<8x96xf32>
    %90 = arith.addf %89, %88 : vector<8x96xf32>
    %cst_25 = arith.constant 1.000000e+00 : f32
    %91 = vector.broadcast %cst_25 : f32 to vector<8x96xf32>
    %92 = arith.divf %91, %90 : vector<8x96xf32>
    %93 = arith.mulf %85, %92 : vector<8x96xf32>
    %94 = vector.extract_strided_slice %93 {offsets = [0, 0], sizes = [8, 16], strides = [1, 1]} : vector<8x96xf32> to vector<8x16xf32>
    %95 = vector.extract_strided_slice %93 {offsets = [0, 32], sizes = [8, 16], strides = [1, 1]} : vector<8x96xf32> to vector<8x16xf32>
    %96 = vector.extract_strided_slice %93 {offsets = [0, 64], sizes = [8, 16], strides = [1, 1]} : vector<8x96xf32> to vector<8x16xf32>
    %97 = vector.extract_strided_slice %25 {offsets = [0, 0], sizes = [8, 1], strides = [1, 1]} : vector<16x2xf32> to vector<8x1xf32>
    %98 = vector.extract_strided_slice %46 {offsets = [0, 0], sizes = [8, 1], strides = [1, 1]} : vector<16x2xf32> to vector<8x1xf32>
    %99 = arith.mulf %94, %94 : vector<8x16xf32>
    %cst_26 = arith.constant dense<0.000000e+00> : vector<8xf32>
    %100 = vector.multi_reduction <add>, %99, %cst_26 [1] : vector<8x16xf32> to vector<8xf32>
    %101 = vector.shape_cast %100 : vector<8xf32> to vector<8x1xf32>
    %cst_27 = arith.constant 9.99999997E-7 : f32
    %102 = vector.broadcast %cst_27 : f32 to vector<8x1xf32>
    %103 = arith.addf %101, %102 : vector<8x1xf32>
    %104 = math.rsqrt %103 : vector<8x1xf32>
    %105 = vector.broadcast %104 : vector<8x1xf32> to vector<8x16xf32>
    %106 = arith.mulf %94, %105 : vector<8x16xf32>
    %cst_28 = arith.constant 2.500000e-01 : f32
    %107 = vector.broadcast %cst_28 : f32 to vector<8x16xf32>
    %108 = arith.mulf %106, %107 : vector<8x16xf32>
    %109 = arith.mulf %95, %95 : vector<8x16xf32>
    %cst_29 = arith.constant dense<0.000000e+00> : vector<8xf32>
    %110 = vector.multi_reduction <add>, %109, %cst_29 [1] : vector<8x16xf32> to vector<8xf32>
    %111 = vector.shape_cast %110 : vector<8xf32> to vector<8x1xf32>
    %cst_30 = arith.constant 9.99999997E-7 : f32
    %112 = vector.broadcast %cst_30 : f32 to vector<8x1xf32>
    %113 = arith.addf %111, %112 : vector<8x1xf32>
    %114 = math.rsqrt %113 : vector<8x1xf32>
    %115 = vector.broadcast %114 : vector<8x1xf32> to vector<8x16xf32>
    %116 = arith.mulf %95, %115 : vector<8x16xf32>
    %117 = tpu.transpose %108, [1, 0] : vector<8x16xf32> -> vector<16x8xf32>
    %118 = tpu.transpose %116, [1, 0] : vector<8x16xf32> -> vector<16x8xf32>
    %cst_31 = arith.constant 0.000000e+00 : f32
    %119 = vector.broadcast %cst_31 : f32 to vector<16x16xf32>
    %120 = vector.extract_strided_slice %118 {offsets = [0, 0], sizes = [16, 1], strides = [1, 1]} : vector<16x8xf32> to vector<16x1xf32>
    %121 = vector.extract_strided_slice %98 {offsets = [0, 0], sizes = [1, 1], strides = [1, 1]} : vector<8x1xf32> to vector<1x1xf32>
    %122 = vector.broadcast %121 : vector<1x1xf32> to vector<16x16xf32>
    %123 = arith.mulf %119, %122 : vector<16x16xf32>
    %124 = vector.broadcast %120 : vector<16x1xf32> to vector<16x16xf32>
    %125 = arith.mulf %124, %123 : vector<16x16xf32>
    %cst_32 = arith.constant dense<0.000000e+00> : vector<16xf32>
    %126 = vector.multi_reduction <add>, %125, %cst_32 [0] : vector<16x16xf32> to vector<16xf32>
    %127 = vector.shape_cast %126 : vector<16xf32> to vector<1x16xf32>
    %128 = vector.extract_strided_slice %96 {offsets = [0, 0], sizes = [1, 16], strides = [1, 1]} : vector<8x16xf32> to vector<1x16xf32>
    %129 = arith.subf %128, %127 : vector<1x16xf32>
    %130 = vector.extract_strided_slice %97 {offsets = [0, 0], sizes = [1, 1], strides = [1, 1]} : vector<8x1xf32> to vector<1x1xf32>
    %131 = vector.broadcast %130 : vector<1x1xf32> to vector<1x16xf32>
    %132 = arith.mulf %129, %131 : vector<1x16xf32>
    %133 = vector.broadcast %120 : vector<16x1xf32> to vector<16x16xf32>
    %134 = vector.broadcast %132 : vector<1x16xf32> to vector<16x16xf32>
    %135 = arith.mulf %133, %134 : vector<16x16xf32>
    %136 = arith.addf %123, %135 : vector<16x16xf32>
    %137 = vector.extract_strided_slice %117 {offsets = [0, 0], sizes = [16, 1], strides = [1, 1]} : vector<16x8xf32> to vector<16x1xf32>
    %138 = vector.broadcast %137 : vector<16x1xf32> to vector<16x16xf32>
    %139 = arith.mulf %138, %136 : vector<16x16xf32>
    %cst_33 = arith.constant dense<0.000000e+00> : vector<16xf32>
    %140 = vector.multi_reduction <add>, %139, %cst_33 [0] : vector<16x16xf32> to vector<16xf32>
    %141 = vector.shape_cast %140 : vector<16xf32> to vector<1x16xf32>
    %142 = vector.extract_strided_slice %118 {offsets = [0, 1], sizes = [16, 1], strides = [1, 1]} : vector<16x8xf32> to vector<16x1xf32>
    %143 = vector.extract_strided_slice %98 {offsets = [1, 0], sizes = [1, 1], strides = [1, 1]} : vector<8x1xf32> to vector<1x1xf32>
    %144 = vector.broadcast %143 : vector<1x1xf32> to vector<16x16xf32>
    %145 = arith.mulf %136, %144 : vector<16x16xf32>
    %146 = vector.broadcast %142 : vector<16x1xf32> to vector<16x16xf32>
    %147 = arith.mulf %146, %145 : vector<16x16xf32>
    %cst_34 = arith.constant dense<0.000000e+00> : vector<16xf32>
    %148 = vector.multi_reduction <add>, %147, %cst_34 [0] : vector<16x16xf32> to vector<16xf32>
    %149 = vector.shape_cast %148 : vector<16xf32> to vector<1x16xf32>
    %150 = vector.extract_strided_slice %96 {offsets = [1, 0], sizes = [1, 16], strides = [1, 1]} : vector<8x16xf32> to vector<1x16xf32>
    %151 = arith.subf %150, %149 : vector<1x16xf32>
    %152 = vector.extract_strided_slice %97 {offsets = [1, 0], sizes = [1, 1], strides = [1, 1]} : vector<8x1xf32> to vector<1x1xf32>
    %153 = vector.broadcast %152 : vector<1x1xf32> to vector<1x16xf32>
    %154 = arith.mulf %151, %153 : vector<1x16xf32>
    %155 = vector.broadcast %142 : vector<16x1xf32> to vector<16x16xf32>
    %156 = vector.broadcast %154 : vector<1x16xf32> to vector<16x16xf32>
    %157 = arith.mulf %155, %156 : vector<16x16xf32>
    %158 = arith.addf %145, %157 : vector<16x16xf32>
    %159 = vector.extract_strided_slice %117 {offsets = [0, 1], sizes = [16, 1], strides = [1, 1]} : vector<16x8xf32> to vector<16x1xf32>
    %160 = vector.broadcast %159 : vector<16x1xf32> to vector<16x16xf32>
    %161 = arith.mulf %160, %158 : vector<16x16xf32>
    %cst_35 = arith.constant dense<0.000000e+00> : vector<16xf32>
    %162 = vector.multi_reduction <add>, %161, %cst_35 [0] : vector<16x16xf32> to vector<16xf32>
    %163 = vector.shape_cast %162 : vector<16xf32> to vector<1x16xf32>
    %164 = vector.extract_strided_slice %118 {offsets = [0, 2], sizes = [16, 1], strides = [1, 1]} : vector<16x8xf32> to vector<16x1xf32>
    %165 = vector.extract_strided_slice %98 {offsets = [2, 0], sizes = [1, 1], strides = [1, 1]} : vector<8x1xf32> to vector<1x1xf32>
    %166 = vector.broadcast %165 : vector<1x1xf32> to vector<16x16xf32>
    %167 = arith.mulf %158, %166 : vector<16x16xf32>
    %168 = vector.broadcast %164 : vector<16x1xf32> to vector<16x16xf32>
    %169 = arith.mulf %168, %167 : vector<16x16xf32>
    %cst_36 = arith.constant dense<0.000000e+00> : vector<16xf32>
    %170 = vector.multi_reduction <add>, %169, %cst_36 [0] : vector<16x16xf32> to vector<16xf32>
    %171 = vector.shape_cast %170 : vector<16xf32> to vector<1x16xf32>
    %172 = vector.extract_strided_slice %96 {offsets = [2, 0], sizes = [1, 16], strides = [1, 1]} : vector<8x16xf32> to vector<1x16xf32>
    %173 = arith.subf %172, %171 : vector<1x16xf32>
    %174 = vector.extract_strided_slice %97 {offsets = [2, 0], sizes = [1, 1], strides = [1, 1]} : vector<8x1xf32> to vector<1x1xf32>
    %175 = vector.broadcast %174 : vector<1x1xf32> to vector<1x16xf32>
    %176 = arith.mulf %173, %175 : vector<1x16xf32>
    %177 = vector.broadcast %164 : vector<16x1xf32> to vector<16x16xf32>
    %178 = vector.broadcast %176 : vector<1x16xf32> to vector<16x16xf32>
    %179 = arith.mulf %177, %178 : vector<16x16xf32>
    %180 = arith.addf %167, %179 : vector<16x16xf32>
    %181 = vector.extract_strided_slice %117 {offsets = [0, 2], sizes = [16, 1], strides = [1, 1]} : vector<16x8xf32> to vector<16x1xf32>
    %182 = vector.broadcast %181 : vector<16x1xf32> to vector<16x16xf32>
    %183 = arith.mulf %182, %180 : vector<16x16xf32>
    %cst_37 = arith.constant dense<0.000000e+00> : vector<16xf32>
    %184 = vector.multi_reduction <add>, %183, %cst_37 [0] : vector<16x16xf32> to vector<16xf32>
    %185 = vector.shape_cast %184 : vector<16xf32> to vector<1x16xf32>
    %186 = vector.extract_strided_slice %118 {offsets = [0, 3], sizes = [16, 1], strides = [1, 1]} : vector<16x8xf32> to vector<16x1xf32>
    %187 = vector.extract_strided_slice %98 {offsets = [3, 0], sizes = [1, 1], strides = [1, 1]} : vector<8x1xf32> to vector<1x1xf32>
    %188 = vector.broadcast %187 : vector<1x1xf32> to vector<16x16xf32>
    %189 = arith.mulf %180, %188 : vector<16x16xf32>
    %190 = vector.broadcast %186 : vector<16x1xf32> to vector<16x16xf32>
    %191 = arith.mulf %190, %189 : vector<16x16xf32>
    %cst_38 = arith.constant dense<0.000000e+00> : vector<16xf32>
    %192 = vector.multi_reduction <add>, %191, %cst_38 [0] : vector<16x16xf32> to vector<16xf32>
    %193 = vector.shape_cast %192 : vector<16xf32> to vector<1x16xf32>
    %194 = vector.extract_strided_slice %96 {offsets = [3, 0], sizes = [1, 16], strides = [1, 1]} : vector<8x16xf32> to vector<1x16xf32>
    %195 = arith.subf %194, %193 : vector<1x16xf32>
    %196 = vector.extract_strided_slice %97 {offsets = [3, 0], sizes = [1, 1], strides = [1, 1]} : vector<8x1xf32> to vector<1x1xf32>
    %197 = vector.broadcast %196 : vector<1x1xf32> to vector<1x16xf32>
    %198 = arith.mulf %195, %197 : vector<1x16xf32>
    %199 = vector.broadcast %186 : vector<16x1xf32> to vector<16x16xf32>
    %200 = vector.broadcast %198 : vector<1x16xf32> to vector<16x16xf32>
    %201 = arith.mulf %199, %200 : vector<16x16xf32>
    %202 = arith.addf %189, %201 : vector<16x16xf32>
    %203 = vector.extract_strided_slice %117 {offsets = [0, 3], sizes = [16, 1], strides = [1, 1]} : vector<16x8xf32> to vector<16x1xf32>
    %204 = vector.broadcast %203 : vector<16x1xf32> to vector<16x16xf32>
    %205 = arith.mulf %204, %202 : vector<16x16xf32>
    %cst_39 = arith.constant dense<0.000000e+00> : vector<16xf32>
    %206 = vector.multi_reduction <add>, %205, %cst_39 [0] : vector<16x16xf32> to vector<16xf32>
    %207 = vector.shape_cast %206 : vector<16xf32> to vector<1x16xf32>
    %208 = vector.extract_strided_slice %118 {offsets = [0, 4], sizes = [16, 1], strides = [1, 1]} : vector<16x8xf32> to vector<16x1xf32>
    %209 = vector.extract_strided_slice %98 {offsets = [4, 0], sizes = [1, 1], strides = [1, 1]} : vector<8x1xf32> to vector<1x1xf32>
    %210 = vector.broadcast %209 : vector<1x1xf32> to vector<16x16xf32>
    %211 = arith.mulf %202, %210 : vector<16x16xf32>
    %212 = vector.broadcast %208 : vector<16x1xf32> to vector<16x16xf32>
    %213 = arith.mulf %212, %211 : vector<16x16xf32>
    %cst_40 = arith.constant dense<0.000000e+00> : vector<16xf32>
    %214 = vector.multi_reduction <add>, %213, %cst_40 [0] : vector<16x16xf32> to vector<16xf32>
    %215 = vector.shape_cast %214 : vector<16xf32> to vector<1x16xf32>
    %216 = vector.extract_strided_slice %96 {offsets = [4, 0], sizes = [1, 16], strides = [1, 1]} : vector<8x16xf32> to vector<1x16xf32>
    %217 = arith.subf %216, %215 : vector<1x16xf32>
    %218 = vector.extract_strided_slice %97 {offsets = [4, 0], sizes = [1, 1], strides = [1, 1]} : vector<8x1xf32> to vector<1x1xf32>
    %219 = vector.broadcast %218 : vector<1x1xf32> to vector<1x16xf32>
    %220 = arith.mulf %217, %219 : vector<1x16xf32>
    %221 = vector.broadcast %208 : vector<16x1xf32> to vector<16x16xf32>
    %222 = vector.broadcast %220 : vector<1x16xf32> to vector<16x16xf32>
    %223 = arith.mulf %221, %222 : vector<16x16xf32>
    %224 = arith.addf %211, %223 : vector<16x16xf32>
    %225 = vector.extract_strided_slice %117 {offsets = [0, 4], sizes = [16, 1], strides = [1, 1]} : vector<16x8xf32> to vector<16x1xf32>
    %226 = vector.broadcast %225 : vector<16x1xf32> to vector<16x16xf32>
    %227 = arith.mulf %226, %224 : vector<16x16xf32>
    %cst_41 = arith.constant dense<0.000000e+00> : vector<16xf32>
    %228 = vector.multi_reduction <add>, %227, %cst_41 [0] : vector<16x16xf32> to vector<16xf32>
    %229 = vector.shape_cast %228 : vector<16xf32> to vector<1x16xf32>
    %230 = vector.extract_strided_slice %118 {offsets = [0, 5], sizes = [16, 1], strides = [1, 1]} : vector<16x8xf32> to vector<16x1xf32>
    %231 = vector.extract_strided_slice %98 {offsets = [5, 0], sizes = [1, 1], strides = [1, 1]} : vector<8x1xf32> to vector<1x1xf32>
    %232 = vector.broadcast %231 : vector<1x1xf32> to vector<16x16xf32>
    %233 = arith.mulf %224, %232 : vector<16x16xf32>
    %234 = vector.broadcast %230 : vector<16x1xf32> to vector<16x16xf32>
    %235 = arith.mulf %234, %233 : vector<16x16xf32>
    %cst_42 = arith.constant dense<0.000000e+00> : vector<16xf32>
    %236 = vector.multi_reduction <add>, %235, %cst_42 [0] : vector<16x16xf32> to vector<16xf32>
    %237 = vector.shape_cast %236 : vector<16xf32> to vector<1x16xf32>
    %238 = vector.extract_strided_slice %96 {offsets = [5, 0], sizes = [1, 16], strides = [1, 1]} : vector<8x16xf32> to vector<1x16xf32>
    %239 = arith.subf %238, %237 : vector<1x16xf32>
    %240 = vector.extract_strided_slice %97 {offsets = [5, 0], sizes = [1, 1], strides = [1, 1]} : vector<8x1xf32> to vector<1x1xf32>
    %241 = vector.broadcast %240 : vector<1x1xf32> to vector<1x16xf32>
    %242 = arith.mulf %239, %241 : vector<1x16xf32>
    %243 = vector.broadcast %230 : vector<16x1xf32> to vector<16x16xf32>
    %244 = vector.broadcast %242 : vector<1x16xf32> to vector<16x16xf32>
    %245 = arith.mulf %243, %244 : vector<16x16xf32>
    %246 = arith.addf %233, %245 : vector<16x16xf32>
    %247 = vector.extract_strided_slice %117 {offsets = [0, 5], sizes = [16, 1], strides = [1, 1]} : vector<16x8xf32> to vector<16x1xf32>
    %248 = vector.broadcast %247 : vector<16x1xf32> to vector<16x16xf32>
    %249 = arith.mulf %248, %246 : vector<16x16xf32>
    %cst_43 = arith.constant dense<0.000000e+00> : vector<16xf32>
    %250 = vector.multi_reduction <add>, %249, %cst_43 [0] : vector<16x16xf32> to vector<16xf32>
    %251 = vector.shape_cast %250 : vector<16xf32> to vector<1x16xf32>
    %252 = vector.extract_strided_slice %118 {offsets = [0, 6], sizes = [16, 1], strides = [1, 1]} : vector<16x8xf32> to vector<16x1xf32>
    %253 = vector.extract_strided_slice %98 {offsets = [6, 0], sizes = [1, 1], strides = [1, 1]} : vector<8x1xf32> to vector<1x1xf32>
    %254 = vector.broadcast %253 : vector<1x1xf32> to vector<16x16xf32>
    %255 = arith.mulf %246, %254 : vector<16x16xf32>
    %256 = vector.broadcast %252 : vector<16x1xf32> to vector<16x16xf32>
    %257 = arith.mulf %256, %255 : vector<16x16xf32>
    %cst_44 = arith.constant dense<0.000000e+00> : vector<16xf32>
    %258 = vector.multi_reduction <add>, %257, %cst_44 [0] : vector<16x16xf32> to vector<16xf32>
    %259 = vector.shape_cast %258 : vector<16xf32> to vector<1x16xf32>
    %260 = vector.extract_strided_slice %96 {offsets = [6, 0], sizes = [1, 16], strides = [1, 1]} : vector<8x16xf32> to vector<1x16xf32>
    %261 = arith.subf %260, %259 : vector<1x16xf32>
    %262 = vector.extract_strided_slice %97 {offsets = [6, 0], sizes = [1, 1], strides = [1, 1]} : vector<8x1xf32> to vector<1x1xf32>
    %263 = vector.broadcast %262 : vector<1x1xf32> to vector<1x16xf32>
    %264 = arith.mulf %261, %263 : vector<1x16xf32>
    %265 = vector.broadcast %252 : vector<16x1xf32> to vector<16x16xf32>
    %266 = vector.broadcast %264 : vector<1x16xf32> to vector<16x16xf32>
    %267 = arith.mulf %265, %266 : vector<16x16xf32>
    %268 = arith.addf %255, %267 : vector<16x16xf32>
    %269 = vector.extract_strided_slice %117 {offsets = [0, 6], sizes = [16, 1], strides = [1, 1]} : vector<16x8xf32> to vector<16x1xf32>
    %270 = vector.broadcast %269 : vector<16x1xf32> to vector<16x16xf32>
    %271 = arith.mulf %270, %268 : vector<16x16xf32>
    %cst_45 = arith.constant dense<0.000000e+00> : vector<16xf32>
    %272 = vector.multi_reduction <add>, %271, %cst_45 [0] : vector<16x16xf32> to vector<16xf32>
    %273 = vector.shape_cast %272 : vector<16xf32> to vector<1x16xf32>
    %274 = vector.extract_strided_slice %118 {offsets = [0, 7], sizes = [16, 1], strides = [1, 1]} : vector<16x8xf32> to vector<16x1xf32>
    %275 = vector.extract_strided_slice %98 {offsets = [7, 0], sizes = [1, 1], strides = [1, 1]} : vector<8x1xf32> to vector<1x1xf32>
    %276 = vector.broadcast %275 : vector<1x1xf32> to vector<16x16xf32>
    %277 = arith.mulf %268, %276 : vector<16x16xf32>
    %278 = vector.broadcast %274 : vector<16x1xf32> to vector<16x16xf32>
    %279 = arith.mulf %278, %277 : vector<16x16xf32>
    %cst_46 = arith.constant dense<0.000000e+00> : vector<16xf32>
    %280 = vector.multi_reduction <add>, %279, %cst_46 [0] : vector<16x16xf32> to vector<16xf32>
    %281 = vector.shape_cast %280 : vector<16xf32> to vector<1x16xf32>
    %282 = vector.extract_strided_slice %96 {offsets = [7, 0], sizes = [1, 16], strides = [1, 1]} : vector<8x16xf32> to vector<1x16xf32>
    %283 = arith.subf %282, %281 : vector<1x16xf32>
    %284 = vector.extract_strided_slice %97 {offsets = [7, 0], sizes = [1, 1], strides = [1, 1]} : vector<8x1xf32> to vector<1x1xf32>
    %285 = vector.broadcast %284 : vector<1x1xf32> to vector<1x16xf32>
    %286 = arith.mulf %283, %285 : vector<1x16xf32>
    %287 = vector.broadcast %274 : vector<16x1xf32> to vector<16x16xf32>
    %288 = vector.broadcast %286 : vector<1x16xf32> to vector<16x16xf32>
    %289 = arith.mulf %287, %288 : vector<16x16xf32>
    %290 = arith.addf %277, %289 : vector<16x16xf32>
    %291 = vector.extract_strided_slice %117 {offsets = [0, 7], sizes = [16, 1], strides = [1, 1]} : vector<16x8xf32> to vector<16x1xf32>
    %292 = vector.broadcast %291 : vector<16x1xf32> to vector<16x16xf32>
    %293 = arith.mulf %292, %290 : vector<16x16xf32>
    %cst_47 = arith.constant dense<0.000000e+00> : vector<16xf32>
    %294 = vector.multi_reduction <add>, %293, %cst_47 [0] : vector<16x16xf32> to vector<16xf32>
    %295 = vector.shape_cast %294 : vector<16xf32> to vector<1x16xf32>
    %296 = tpu.concatenate %141, %163, %185, %207, %229, %251, %273, %295 in 0 : vector<1x16xf32>, vector<1x16xf32>, vector<1x16xf32>, vector<1x16xf32>, vector<1x16xf32>, vector<1x16xf32>, vector<1x16xf32>, vector<1x16xf32> -> vector<8x16xf32>
    %297 = vector.extract_strided_slice %93 {offsets = [0, 16], sizes = [8, 16], strides = [1, 1]} : vector<8x96xf32> to vector<8x16xf32>
    %298 = vector.extract_strided_slice %93 {offsets = [0, 48], sizes = [8, 16], strides = [1, 1]} : vector<8x96xf32> to vector<8x16xf32>
    %299 = vector.extract_strided_slice %93 {offsets = [0, 80], sizes = [8, 16], strides = [1, 1]} : vector<8x96xf32> to vector<8x16xf32>
    %300 = vector.extract_strided_slice %25 {offsets = [0, 1], sizes = [8, 1], strides = [1, 1]} : vector<16x2xf32> to vector<8x1xf32>
    %301 = vector.extract_strided_slice %46 {offsets = [0, 1], sizes = [8, 1], strides = [1, 1]} : vector<16x2xf32> to vector<8x1xf32>
    %302 = arith.mulf %297, %297 : vector<8x16xf32>
    %cst_48 = arith.constant dense<0.000000e+00> : vector<8xf32>
    %303 = vector.multi_reduction <add>, %302, %cst_48 [1] : vector<8x16xf32> to vector<8xf32>
    %304 = vector.shape_cast %303 : vector<8xf32> to vector<8x1xf32>
    %cst_49 = arith.constant 9.99999997E-7 : f32
    %305 = vector.broadcast %cst_49 : f32 to vector<8x1xf32>
    %306 = arith.addf %304, %305 : vector<8x1xf32>
    %307 = math.rsqrt %306 : vector<8x1xf32>
    %308 = vector.broadcast %307 : vector<8x1xf32> to vector<8x16xf32>
    %309 = arith.mulf %297, %308 : vector<8x16xf32>
    %cst_50 = arith.constant 2.500000e-01 : f32
    %310 = vector.broadcast %cst_50 : f32 to vector<8x16xf32>
    %311 = arith.mulf %309, %310 : vector<8x16xf32>
    %312 = arith.mulf %298, %298 : vector<8x16xf32>
    %cst_51 = arith.constant dense<0.000000e+00> : vector<8xf32>
    %313 = vector.multi_reduction <add>, %312, %cst_51 [1] : vector<8x16xf32> to vector<8xf32>
    %314 = vector.shape_cast %313 : vector<8xf32> to vector<8x1xf32>
    %cst_52 = arith.constant 9.99999997E-7 : f32
    %315 = vector.broadcast %cst_52 : f32 to vector<8x1xf32>
    %316 = arith.addf %314, %315 : vector<8x1xf32>
    %317 = math.rsqrt %316 : vector<8x1xf32>
    %318 = vector.broadcast %317 : vector<8x1xf32> to vector<8x16xf32>
    %319 = arith.mulf %298, %318 : vector<8x16xf32>
    %320 = tpu.transpose %311, [1, 0] : vector<8x16xf32> -> vector<16x8xf32>
    %321 = tpu.transpose %319, [1, 0] : vector<8x16xf32> -> vector<16x8xf32>
    %cst_53 = arith.constant 0.000000e+00 : f32
    %322 = vector.broadcast %cst_53 : f32 to vector<16x16xf32>
    %323 = vector.extract_strided_slice %321 {offsets = [0, 0], sizes = [16, 1], strides = [1, 1]} : vector<16x8xf32> to vector<16x1xf32>
    %324 = vector.extract_strided_slice %301 {offsets = [0, 0], sizes = [1, 1], strides = [1, 1]} : vector<8x1xf32> to vector<1x1xf32>
    %325 = vector.broadcast %324 : vector<1x1xf32> to vector<16x16xf32>
    %326 = arith.mulf %322, %325 : vector<16x16xf32>
    %327 = vector.broadcast %323 : vector<16x1xf32> to vector<16x16xf32>
    %328 = arith.mulf %327, %326 : vector<16x16xf32>
    %cst_54 = arith.constant dense<0.000000e+00> : vector<16xf32>
    %329 = vector.multi_reduction <add>, %328, %cst_54 [0] : vector<16x16xf32> to vector<16xf32>
    %330 = vector.shape_cast %329 : vector<16xf32> to vector<1x16xf32>
    %331 = vector.extract_strided_slice %299 {offsets = [0, 0], sizes = [1, 16], strides = [1, 1]} : vector<8x16xf32> to vector<1x16xf32>
    %332 = arith.subf %331, %330 : vector<1x16xf32>
    %333 = vector.extract_strided_slice %300 {offsets = [0, 0], sizes = [1, 1], strides = [1, 1]} : vector<8x1xf32> to vector<1x1xf32>
    %334 = vector.broadcast %333 : vector<1x1xf32> to vector<1x16xf32>
    %335 = arith.mulf %332, %334 : vector<1x16xf32>
    %336 = vector.broadcast %323 : vector<16x1xf32> to vector<16x16xf32>
    %337 = vector.broadcast %335 : vector<1x16xf32> to vector<16x16xf32>
    %338 = arith.mulf %336, %337 : vector<16x16xf32>
    %339 = arith.addf %326, %338 : vector<16x16xf32>
    %340 = vector.extract_strided_slice %320 {offsets = [0, 0], sizes = [16, 1], strides = [1, 1]} : vector<16x8xf32> to vector<16x1xf32>
    %341 = vector.broadcast %340 : vector<16x1xf32> to vector<16x16xf32>
    %342 = arith.mulf %341, %339 : vector<16x16xf32>
    %cst_55 = arith.constant dense<0.000000e+00> : vector<16xf32>
    %343 = vector.multi_reduction <add>, %342, %cst_55 [0] : vector<16x16xf32> to vector<16xf32>
    %344 = vector.shape_cast %343 : vector<16xf32> to vector<1x16xf32>
    %345 = vector.extract_strided_slice %321 {offsets = [0, 1], sizes = [16, 1], strides = [1, 1]} : vector<16x8xf32> to vector<16x1xf32>
    %346 = vector.extract_strided_slice %301 {offsets = [1, 0], sizes = [1, 1], strides = [1, 1]} : vector<8x1xf32> to vector<1x1xf32>
    %347 = vector.broadcast %346 : vector<1x1xf32> to vector<16x16xf32>
    %348 = arith.mulf %339, %347 : vector<16x16xf32>
    %349 = vector.broadcast %345 : vector<16x1xf32> to vector<16x16xf32>
    %350 = arith.mulf %349, %348 : vector<16x16xf32>
    %cst_56 = arith.constant dense<0.000000e+00> : vector<16xf32>
    %351 = vector.multi_reduction <add>, %350, %cst_56 [0] : vector<16x16xf32> to vector<16xf32>
    %352 = vector.shape_cast %351 : vector<16xf32> to vector<1x16xf32>
    %353 = vector.extract_strided_slice %299 {offsets = [1, 0], sizes = [1, 16], strides = [1, 1]} : vector<8x16xf32> to vector<1x16xf32>
    %354 = arith.subf %353, %352 : vector<1x16xf32>
    %355 = vector.extract_strided_slice %300 {offsets = [1, 0], sizes = [1, 1], strides = [1, 1]} : vector<8x1xf32> to vector<1x1xf32>
    %356 = vector.broadcast %355 : vector<1x1xf32> to vector<1x16xf32>
    %357 = arith.mulf %354, %356 : vector<1x16xf32>
    %358 = vector.broadcast %345 : vector<16x1xf32> to vector<16x16xf32>
    %359 = vector.broadcast %357 : vector<1x16xf32> to vector<16x16xf32>
    %360 = arith.mulf %358, %359 : vector<16x16xf32>
    %361 = arith.addf %348, %360 : vector<16x16xf32>
    %362 = vector.extract_strided_slice %320 {offsets = [0, 1], sizes = [16, 1], strides = [1, 1]} : vector<16x8xf32> to vector<16x1xf32>
    %363 = vector.broadcast %362 : vector<16x1xf32> to vector<16x16xf32>
    %364 = arith.mulf %363, %361 : vector<16x16xf32>
    %cst_57 = arith.constant dense<0.000000e+00> : vector<16xf32>
    %365 = vector.multi_reduction <add>, %364, %cst_57 [0] : vector<16x16xf32> to vector<16xf32>
    %366 = vector.shape_cast %365 : vector<16xf32> to vector<1x16xf32>
    %367 = vector.extract_strided_slice %321 {offsets = [0, 2], sizes = [16, 1], strides = [1, 1]} : vector<16x8xf32> to vector<16x1xf32>
    %368 = vector.extract_strided_slice %301 {offsets = [2, 0], sizes = [1, 1], strides = [1, 1]} : vector<8x1xf32> to vector<1x1xf32>
    %369 = vector.broadcast %368 : vector<1x1xf32> to vector<16x16xf32>
    %370 = arith.mulf %361, %369 : vector<16x16xf32>
    %371 = vector.broadcast %367 : vector<16x1xf32> to vector<16x16xf32>
    %372 = arith.mulf %371, %370 : vector<16x16xf32>
    %cst_58 = arith.constant dense<0.000000e+00> : vector<16xf32>
    %373 = vector.multi_reduction <add>, %372, %cst_58 [0] : vector<16x16xf32> to vector<16xf32>
    %374 = vector.shape_cast %373 : vector<16xf32> to vector<1x16xf32>
    %375 = vector.extract_strided_slice %299 {offsets = [2, 0], sizes = [1, 16], strides = [1, 1]} : vector<8x16xf32> to vector<1x16xf32>
    %376 = arith.subf %375, %374 : vector<1x16xf32>
    %377 = vector.extract_strided_slice %300 {offsets = [2, 0], sizes = [1, 1], strides = [1, 1]} : vector<8x1xf32> to vector<1x1xf32>
    %378 = vector.broadcast %377 : vector<1x1xf32> to vector<1x16xf32>
    %379 = arith.mulf %376, %378 : vector<1x16xf32>
    %380 = vector.broadcast %367 : vector<16x1xf32> to vector<16x16xf32>
    %381 = vector.broadcast %379 : vector<1x16xf32> to vector<16x16xf32>
    %382 = arith.mulf %380, %381 : vector<16x16xf32>
    %383 = arith.addf %370, %382 : vector<16x16xf32>
    %384 = vector.extract_strided_slice %320 {offsets = [0, 2], sizes = [16, 1], strides = [1, 1]} : vector<16x8xf32> to vector<16x1xf32>
    %385 = vector.broadcast %384 : vector<16x1xf32> to vector<16x16xf32>
    %386 = arith.mulf %385, %383 : vector<16x16xf32>
    %cst_59 = arith.constant dense<0.000000e+00> : vector<16xf32>
    %387 = vector.multi_reduction <add>, %386, %cst_59 [0] : vector<16x16xf32> to vector<16xf32>
    %388 = vector.shape_cast %387 : vector<16xf32> to vector<1x16xf32>
    %389 = vector.extract_strided_slice %321 {offsets = [0, 3], sizes = [16, 1], strides = [1, 1]} : vector<16x8xf32> to vector<16x1xf32>
    %390 = vector.extract_strided_slice %301 {offsets = [3, 0], sizes = [1, 1], strides = [1, 1]} : vector<8x1xf32> to vector<1x1xf32>
    %391 = vector.broadcast %390 : vector<1x1xf32> to vector<16x16xf32>
    %392 = arith.mulf %383, %391 : vector<16x16xf32>
    %393 = vector.broadcast %389 : vector<16x1xf32> to vector<16x16xf32>
    %394 = arith.mulf %393, %392 : vector<16x16xf32>
    %cst_60 = arith.constant dense<0.000000e+00> : vector<16xf32>
    %395 = vector.multi_reduction <add>, %394, %cst_60 [0] : vector<16x16xf32> to vector<16xf32>
    %396 = vector.shape_cast %395 : vector<16xf32> to vector<1x16xf32>
    %397 = vector.extract_strided_slice %299 {offsets = [3, 0], sizes = [1, 16], strides = [1, 1]} : vector<8x16xf32> to vector<1x16xf32>
    %398 = arith.subf %397, %396 : vector<1x16xf32>
    %399 = vector.extract_strided_slice %300 {offsets = [3, 0], sizes = [1, 1], strides = [1, 1]} : vector<8x1xf32> to vector<1x1xf32>
    %400 = vector.broadcast %399 : vector<1x1xf32> to vector<1x16xf32>
    %401 = arith.mulf %398, %400 : vector<1x16xf32>
    %402 = vector.broadcast %389 : vector<16x1xf32> to vector<16x16xf32>
    %403 = vector.broadcast %401 : vector<1x16xf32> to vector<16x16xf32>
    %404 = arith.mulf %402, %403 : vector<16x16xf32>
    %405 = arith.addf %392, %404 : vector<16x16xf32>
    %406 = vector.extract_strided_slice %320 {offsets = [0, 3], sizes = [16, 1], strides = [1, 1]} : vector<16x8xf32> to vector<16x1xf32>
    %407 = vector.broadcast %406 : vector<16x1xf32> to vector<16x16xf32>
    %408 = arith.mulf %407, %405 : vector<16x16xf32>
    %cst_61 = arith.constant dense<0.000000e+00> : vector<16xf32>
    %409 = vector.multi_reduction <add>, %408, %cst_61 [0] : vector<16x16xf32> to vector<16xf32>
    %410 = vector.shape_cast %409 : vector<16xf32> to vector<1x16xf32>
    %411 = vector.extract_strided_slice %321 {offsets = [0, 4], sizes = [16, 1], strides = [1, 1]} : vector<16x8xf32> to vector<16x1xf32>
    %412 = vector.extract_strided_slice %301 {offsets = [4, 0], sizes = [1, 1], strides = [1, 1]} : vector<8x1xf32> to vector<1x1xf32>
    %413 = vector.broadcast %412 : vector<1x1xf32> to vector<16x16xf32>
    %414 = arith.mulf %405, %413 : vector<16x16xf32>
    %415 = vector.broadcast %411 : vector<16x1xf32> to vector<16x16xf32>
    %416 = arith.mulf %415, %414 : vector<16x16xf32>
    %cst_62 = arith.constant dense<0.000000e+00> : vector<16xf32>
    %417 = vector.multi_reduction <add>, %416, %cst_62 [0] : vector<16x16xf32> to vector<16xf32>
    %418 = vector.shape_cast %417 : vector<16xf32> to vector<1x16xf32>
    %419 = vector.extract_strided_slice %299 {offsets = [4, 0], sizes = [1, 16], strides = [1, 1]} : vector<8x16xf32> to vector<1x16xf32>
    %420 = arith.subf %419, %418 : vector<1x16xf32>
    %421 = vector.extract_strided_slice %300 {offsets = [4, 0], sizes = [1, 1], strides = [1, 1]} : vector<8x1xf32> to vector<1x1xf32>
    %422 = vector.broadcast %421 : vector<1x1xf32> to vector<1x16xf32>
    %423 = arith.mulf %420, %422 : vector<1x16xf32>
    %424 = vector.broadcast %411 : vector<16x1xf32> to vector<16x16xf32>
    %425 = vector.broadcast %423 : vector<1x16xf32> to vector<16x16xf32>
    %426 = arith.mulf %424, %425 : vector<16x16xf32>
    %427 = arith.addf %414, %426 : vector<16x16xf32>
    %428 = vector.extract_strided_slice %320 {offsets = [0, 4], sizes = [16, 1], strides = [1, 1]} : vector<16x8xf32> to vector<16x1xf32>
    %429 = vector.broadcast %428 : vector<16x1xf32> to vector<16x16xf32>
    %430 = arith.mulf %429, %427 : vector<16x16xf32>
    %cst_63 = arith.constant dense<0.000000e+00> : vector<16xf32>
    %431 = vector.multi_reduction <add>, %430, %cst_63 [0] : vector<16x16xf32> to vector<16xf32>
    %432 = vector.shape_cast %431 : vector<16xf32> to vector<1x16xf32>
    %433 = vector.extract_strided_slice %321 {offsets = [0, 5], sizes = [16, 1], strides = [1, 1]} : vector<16x8xf32> to vector<16x1xf32>
    %434 = vector.extract_strided_slice %301 {offsets = [5, 0], sizes = [1, 1], strides = [1, 1]} : vector<8x1xf32> to vector<1x1xf32>
    %435 = vector.broadcast %434 : vector<1x1xf32> to vector<16x16xf32>
    %436 = arith.mulf %427, %435 : vector<16x16xf32>
    %437 = vector.broadcast %433 : vector<16x1xf32> to vector<16x16xf32>
    %438 = arith.mulf %437, %436 : vector<16x16xf32>
    %cst_64 = arith.constant dense<0.000000e+00> : vector<16xf32>
    %439 = vector.multi_reduction <add>, %438, %cst_64 [0] : vector<16x16xf32> to vector<16xf32>
    %440 = vector.shape_cast %439 : vector<16xf32> to vector<1x16xf32>
    %441 = vector.extract_strided_slice %299 {offsets = [5, 0], sizes = [1, 16], strides = [1, 1]} : vector<8x16xf32> to vector<1x16xf32>
    %442 = arith.subf %441, %440 : vector<1x16xf32>
    %443 = vector.extract_strided_slice %300 {offsets = [5, 0], sizes = [1, 1], strides = [1, 1]} : vector<8x1xf32> to vector<1x1xf32>
    %444 = vector.broadcast %443 : vector<1x1xf32> to vector<1x16xf32>
    %445 = arith.mulf %442, %444 : vector<1x16xf32>
    %446 = vector.broadcast %433 : vector<16x1xf32> to vector<16x16xf32>
    %447 = vector.broadcast %445 : vector<1x16xf32> to vector<16x16xf32>
    %448 = arith.mulf %446, %447 : vector<16x16xf32>
    %449 = arith.addf %436, %448 : vector<16x16xf32>
    %450 = vector.extract_strided_slice %320 {offsets = [0, 5], sizes = [16, 1], strides = [1, 1]} : vector<16x8xf32> to vector<16x1xf32>
    %451 = vector.broadcast %450 : vector<16x1xf32> to vector<16x16xf32>
    %452 = arith.mulf %451, %449 : vector<16x16xf32>
    %cst_65 = arith.constant dense<0.000000e+00> : vector<16xf32>
    %453 = vector.multi_reduction <add>, %452, %cst_65 [0] : vector<16x16xf32> to vector<16xf32>
    %454 = vector.shape_cast %453 : vector<16xf32> to vector<1x16xf32>
    %455 = vector.extract_strided_slice %321 {offsets = [0, 6], sizes = [16, 1], strides = [1, 1]} : vector<16x8xf32> to vector<16x1xf32>
    %456 = vector.extract_strided_slice %301 {offsets = [6, 0], sizes = [1, 1], strides = [1, 1]} : vector<8x1xf32> to vector<1x1xf32>
    %457 = vector.broadcast %456 : vector<1x1xf32> to vector<16x16xf32>
    %458 = arith.mulf %449, %457 : vector<16x16xf32>
    %459 = vector.broadcast %455 : vector<16x1xf32> to vector<16x16xf32>
    %460 = arith.mulf %459, %458 : vector<16x16xf32>
    %cst_66 = arith.constant dense<0.000000e+00> : vector<16xf32>
    %461 = vector.multi_reduction <add>, %460, %cst_66 [0] : vector<16x16xf32> to vector<16xf32>
    %462 = vector.shape_cast %461 : vector<16xf32> to vector<1x16xf32>
    %463 = vector.extract_strided_slice %299 {offsets = [6, 0], sizes = [1, 16], strides = [1, 1]} : vector<8x16xf32> to vector<1x16xf32>
    %464 = arith.subf %463, %462 : vector<1x16xf32>
    %465 = vector.extract_strided_slice %300 {offsets = [6, 0], sizes = [1, 1], strides = [1, 1]} : vector<8x1xf32> to vector<1x1xf32>
    %466 = vector.broadcast %465 : vector<1x1xf32> to vector<1x16xf32>
    %467 = arith.mulf %464, %466 : vector<1x16xf32>
    %468 = vector.broadcast %455 : vector<16x1xf32> to vector<16x16xf32>
    %469 = vector.broadcast %467 : vector<1x16xf32> to vector<16x16xf32>
    %470 = arith.mulf %468, %469 : vector<16x16xf32>
    %471 = arith.addf %458, %470 : vector<16x16xf32>
    %472 = vector.extract_strided_slice %320 {offsets = [0, 6], sizes = [16, 1], strides = [1, 1]} : vector<16x8xf32> to vector<16x1xf32>
    %473 = vector.broadcast %472 : vector<16x1xf32> to vector<16x16xf32>
    %474 = arith.mulf %473, %471 : vector<16x16xf32>
    %cst_67 = arith.constant dense<0.000000e+00> : vector<16xf32>
    %475 = vector.multi_reduction <add>, %474, %cst_67 [0] : vector<16x16xf32> to vector<16xf32>
    %476 = vector.shape_cast %475 : vector<16xf32> to vector<1x16xf32>
    %477 = vector.extract_strided_slice %321 {offsets = [0, 7], sizes = [16, 1], strides = [1, 1]} : vector<16x8xf32> to vector<16x1xf32>
    %478 = vector.extract_strided_slice %301 {offsets = [7, 0], sizes = [1, 1], strides = [1, 1]} : vector<8x1xf32> to vector<1x1xf32>
    %479 = vector.broadcast %478 : vector<1x1xf32> to vector<16x16xf32>
    %480 = arith.mulf %471, %479 : vector<16x16xf32>
    %481 = vector.broadcast %477 : vector<16x1xf32> to vector<16x16xf32>
    %482 = arith.mulf %481, %480 : vector<16x16xf32>
    %cst_68 = arith.constant dense<0.000000e+00> : vector<16xf32>
    %483 = vector.multi_reduction <add>, %482, %cst_68 [0] : vector<16x16xf32> to vector<16xf32>
    %484 = vector.shape_cast %483 : vector<16xf32> to vector<1x16xf32>
    %485 = vector.extract_strided_slice %299 {offsets = [7, 0], sizes = [1, 16], strides = [1, 1]} : vector<8x16xf32> to vector<1x16xf32>
    %486 = arith.subf %485, %484 : vector<1x16xf32>
    %487 = vector.extract_strided_slice %300 {offsets = [7, 0], sizes = [1, 1], strides = [1, 1]} : vector<8x1xf32> to vector<1x1xf32>
    %488 = vector.broadcast %487 : vector<1x1xf32> to vector<1x16xf32>
    %489 = arith.mulf %486, %488 : vector<1x16xf32>
    %490 = vector.broadcast %477 : vector<16x1xf32> to vector<16x16xf32>
    %491 = vector.broadcast %489 : vector<1x16xf32> to vector<16x16xf32>
    %492 = arith.mulf %490, %491 : vector<16x16xf32>
    %493 = arith.addf %480, %492 : vector<16x16xf32>
    %494 = vector.extract_strided_slice %320 {offsets = [0, 7], sizes = [16, 1], strides = [1, 1]} : vector<16x8xf32> to vector<16x1xf32>
    %495 = vector.broadcast %494 : vector<16x1xf32> to vector<16x16xf32>
    %496 = arith.mulf %495, %493 : vector<16x16xf32>
    %cst_69 = arith.constant dense<0.000000e+00> : vector<16xf32>
    %497 = vector.multi_reduction <add>, %496, %cst_69 [0] : vector<16x16xf32> to vector<16xf32>
    %498 = vector.shape_cast %497 : vector<16xf32> to vector<1x16xf32>
    %499 = tpu.concatenate %344, %366, %388, %410, %432, %454, %476, %498 in 0 : vector<1x16xf32>, vector<1x16xf32>, vector<1x16xf32>, vector<1x16xf32>, vector<1x16xf32>, vector<1x16xf32>, vector<1x16xf32>, vector<1x16xf32> -> vector<8x16xf32>
    %500 = tpu.concatenate %296, %499 in 1 : vector<8x16xf32>, vector<8x16xf32> -> vector<8x32xf32>
    %501 = vector.extract_strided_slice %16 {offsets = [8, 0], sizes = [8, 96], strides = [1, 1]} : vector<16x96xf32> to vector<8x96xf32>
    %502 = vector.extract_strided_slice %47 {offsets = [3, 0], sizes = [1, 96], strides = [1, 1]} : vector<4x96xf32> to vector<1x96xf32>
    %503 = vector.broadcast %502 : vector<1x96xf32> to vector<8x96xf32>
    %504 = arith.mulf %501, %503 : vector<8x96xf32>
    %c3_i32_70 = arith.constant 3 : i32
    %505 = tpu.dynamic_rotate %501 by %c3_i32_70 dim 0 : vector<8x96xf32>, i32 -> vector<8x96xf32>
    %506 = vector.broadcast %60 : vector<8x1xf32> to vector<8x96xf32>
    %507 = arith.mulf %505, %506 : vector<8x96xf32>
    %508 = vector.extract_strided_slice %47 {offsets = [0, 0], sizes = [1, 96], strides = [1, 1]} : vector<4x96xf32> to vector<1x96xf32>
    %509 = vector.broadcast %508 : vector<1x96xf32> to vector<8x96xf32>
    %510 = arith.mulf %507, %509 : vector<8x96xf32>
    %511 = arith.addf %504, %510 : vector<8x96xf32>
    %c2_i32_71 = arith.constant 2 : i32
    %512 = tpu.dynamic_rotate %501 by %c2_i32_71 dim 0 : vector<8x96xf32>, i32 -> vector<8x96xf32>
    %513 = vector.broadcast %56 : vector<8x1xf32> to vector<8x96xf32>
    %514 = arith.mulf %512, %513 : vector<8x96xf32>
    %515 = vector.extract_strided_slice %47 {offsets = [1, 0], sizes = [1, 96], strides = [1, 1]} : vector<4x96xf32> to vector<1x96xf32>
    %516 = vector.broadcast %515 : vector<1x96xf32> to vector<8x96xf32>
    %517 = arith.mulf %514, %516 : vector<8x96xf32>
    %518 = arith.addf %511, %517 : vector<8x96xf32>
    %c1_i32_72 = arith.constant 1 : i32
    %519 = tpu.dynamic_rotate %501 by %c1_i32_72 dim 0 : vector<8x96xf32>, i32 -> vector<8x96xf32>
    %520 = vector.broadcast %52 : vector<8x1xf32> to vector<8x96xf32>
    %521 = arith.mulf %519, %520 : vector<8x96xf32>
    %522 = vector.extract_strided_slice %47 {offsets = [2, 0], sizes = [1, 96], strides = [1, 1]} : vector<4x96xf32> to vector<1x96xf32>
    %523 = vector.broadcast %522 : vector<1x96xf32> to vector<8x96xf32>
    %524 = arith.mulf %521, %523 : vector<8x96xf32>
    %525 = arith.addf %518, %524 : vector<8x96xf32>
    %cst_73 = arith.constant 0.000000e+00 : f32
    %526 = vector.broadcast %cst_73 : f32 to vector<8x96xf32>
    %527 = arith.subf %526, %525 : vector<8x96xf32>
    %528 = math.exp %527 : vector<8x96xf32>
    %cst_74 = arith.constant 1.000000e+00 : f32
    %529 = vector.broadcast %cst_74 : f32 to vector<8x96xf32>
    %530 = arith.addf %529, %528 : vector<8x96xf32>
    %cst_75 = arith.constant 1.000000e+00 : f32
    %531 = vector.broadcast %cst_75 : f32 to vector<8x96xf32>
    %532 = arith.divf %531, %530 : vector<8x96xf32>
    %533 = arith.mulf %525, %532 : vector<8x96xf32>
    %534 = vector.extract_strided_slice %533 {offsets = [0, 0], sizes = [8, 16], strides = [1, 1]} : vector<8x96xf32> to vector<8x16xf32>
    %535 = vector.extract_strided_slice %533 {offsets = [0, 32], sizes = [8, 16], strides = [1, 1]} : vector<8x96xf32> to vector<8x16xf32>
    %536 = vector.extract_strided_slice %533 {offsets = [0, 64], sizes = [8, 16], strides = [1, 1]} : vector<8x96xf32> to vector<8x16xf32>
    %537 = vector.extract_strided_slice %25 {offsets = [8, 0], sizes = [8, 1], strides = [1, 1]} : vector<16x2xf32> to vector<8x1xf32>
    %538 = vector.extract_strided_slice %46 {offsets = [8, 0], sizes = [8, 1], strides = [1, 1]} : vector<16x2xf32> to vector<8x1xf32>
    %539 = arith.mulf %534, %534 : vector<8x16xf32>
    %cst_76 = arith.constant dense<0.000000e+00> : vector<8xf32>
    %540 = vector.multi_reduction <add>, %539, %cst_76 [1] : vector<8x16xf32> to vector<8xf32>
    %541 = vector.shape_cast %540 : vector<8xf32> to vector<8x1xf32>
    %cst_77 = arith.constant 9.99999997E-7 : f32
    %542 = vector.broadcast %cst_77 : f32 to vector<8x1xf32>
    %543 = arith.addf %541, %542 : vector<8x1xf32>
    %544 = math.rsqrt %543 : vector<8x1xf32>
    %545 = vector.broadcast %544 : vector<8x1xf32> to vector<8x16xf32>
    %546 = arith.mulf %534, %545 : vector<8x16xf32>
    %cst_78 = arith.constant 2.500000e-01 : f32
    %547 = vector.broadcast %cst_78 : f32 to vector<8x16xf32>
    %548 = arith.mulf %546, %547 : vector<8x16xf32>
    %549 = arith.mulf %535, %535 : vector<8x16xf32>
    %cst_79 = arith.constant dense<0.000000e+00> : vector<8xf32>
    %550 = vector.multi_reduction <add>, %549, %cst_79 [1] : vector<8x16xf32> to vector<8xf32>
    %551 = vector.shape_cast %550 : vector<8xf32> to vector<8x1xf32>
    %cst_80 = arith.constant 9.99999997E-7 : f32
    %552 = vector.broadcast %cst_80 : f32 to vector<8x1xf32>
    %553 = arith.addf %551, %552 : vector<8x1xf32>
    %554 = math.rsqrt %553 : vector<8x1xf32>
    %555 = vector.broadcast %554 : vector<8x1xf32> to vector<8x16xf32>
    %556 = arith.mulf %535, %555 : vector<8x16xf32>
    %557 = tpu.transpose %548, [1, 0] : vector<8x16xf32> -> vector<16x8xf32>
    %558 = tpu.transpose %556, [1, 0] : vector<8x16xf32> -> vector<16x8xf32>
    %cst_81 = arith.constant 0.000000e+00 : f32
    %559 = vector.broadcast %cst_81 : f32 to vector<16x16xf32>
    %560 = vector.extract_strided_slice %558 {offsets = [0, 0], sizes = [16, 1], strides = [1, 1]} : vector<16x8xf32> to vector<16x1xf32>
    %561 = vector.extract_strided_slice %538 {offsets = [0, 0], sizes = [1, 1], strides = [1, 1]} : vector<8x1xf32> to vector<1x1xf32>
    %562 = vector.broadcast %561 : vector<1x1xf32> to vector<16x16xf32>
    %563 = arith.mulf %559, %562 : vector<16x16xf32>
    %564 = vector.broadcast %560 : vector<16x1xf32> to vector<16x16xf32>
    %565 = arith.mulf %564, %563 : vector<16x16xf32>
    %cst_82 = arith.constant dense<0.000000e+00> : vector<16xf32>
    %566 = vector.multi_reduction <add>, %565, %cst_82 [0] : vector<16x16xf32> to vector<16xf32>
    %567 = vector.shape_cast %566 : vector<16xf32> to vector<1x16xf32>
    %568 = vector.extract_strided_slice %536 {offsets = [0, 0], sizes = [1, 16], strides = [1, 1]} : vector<8x16xf32> to vector<1x16xf32>
    %569 = arith.subf %568, %567 : vector<1x16xf32>
    %570 = vector.extract_strided_slice %537 {offsets = [0, 0], sizes = [1, 1], strides = [1, 1]} : vector<8x1xf32> to vector<1x1xf32>
    %571 = vector.broadcast %570 : vector<1x1xf32> to vector<1x16xf32>
    %572 = arith.mulf %569, %571 : vector<1x16xf32>
    %573 = vector.broadcast %560 : vector<16x1xf32> to vector<16x16xf32>
    %574 = vector.broadcast %572 : vector<1x16xf32> to vector<16x16xf32>
    %575 = arith.mulf %573, %574 : vector<16x16xf32>
    %576 = arith.addf %563, %575 : vector<16x16xf32>
    %577 = vector.extract_strided_slice %557 {offsets = [0, 0], sizes = [16, 1], strides = [1, 1]} : vector<16x8xf32> to vector<16x1xf32>
    %578 = vector.broadcast %577 : vector<16x1xf32> to vector<16x16xf32>
    %579 = arith.mulf %578, %576 : vector<16x16xf32>
    %cst_83 = arith.constant dense<0.000000e+00> : vector<16xf32>
    %580 = vector.multi_reduction <add>, %579, %cst_83 [0] : vector<16x16xf32> to vector<16xf32>
    %581 = vector.shape_cast %580 : vector<16xf32> to vector<1x16xf32>
    %582 = vector.extract_strided_slice %558 {offsets = [0, 1], sizes = [16, 1], strides = [1, 1]} : vector<16x8xf32> to vector<16x1xf32>
    %583 = vector.extract_strided_slice %538 {offsets = [1, 0], sizes = [1, 1], strides = [1, 1]} : vector<8x1xf32> to vector<1x1xf32>
    %584 = vector.broadcast %583 : vector<1x1xf32> to vector<16x16xf32>
    %585 = arith.mulf %576, %584 : vector<16x16xf32>
    %586 = vector.broadcast %582 : vector<16x1xf32> to vector<16x16xf32>
    %587 = arith.mulf %586, %585 : vector<16x16xf32>
    %cst_84 = arith.constant dense<0.000000e+00> : vector<16xf32>
    %588 = vector.multi_reduction <add>, %587, %cst_84 [0] : vector<16x16xf32> to vector<16xf32>
    %589 = vector.shape_cast %588 : vector<16xf32> to vector<1x16xf32>
    %590 = vector.extract_strided_slice %536 {offsets = [1, 0], sizes = [1, 16], strides = [1, 1]} : vector<8x16xf32> to vector<1x16xf32>
    %591 = arith.subf %590, %589 : vector<1x16xf32>
    %592 = vector.extract_strided_slice %537 {offsets = [1, 0], sizes = [1, 1], strides = [1, 1]} : vector<8x1xf32> to vector<1x1xf32>
    %593 = vector.broadcast %592 : vector<1x1xf32> to vector<1x16xf32>
    %594 = arith.mulf %591, %593 : vector<1x16xf32>
    %595 = vector.broadcast %582 : vector<16x1xf32> to vector<16x16xf32>
    %596 = vector.broadcast %594 : vector<1x16xf32> to vector<16x16xf32>
    %597 = arith.mulf %595, %596 : vector<16x16xf32>
    %598 = arith.addf %585, %597 : vector<16x16xf32>
    %599 = vector.extract_strided_slice %557 {offsets = [0, 1], sizes = [16, 1], strides = [1, 1]} : vector<16x8xf32> to vector<16x1xf32>
    %600 = vector.broadcast %599 : vector<16x1xf32> to vector<16x16xf32>
    %601 = arith.mulf %600, %598 : vector<16x16xf32>
    %cst_85 = arith.constant dense<0.000000e+00> : vector<16xf32>
    %602 = vector.multi_reduction <add>, %601, %cst_85 [0] : vector<16x16xf32> to vector<16xf32>
    %603 = vector.shape_cast %602 : vector<16xf32> to vector<1x16xf32>
    %604 = vector.extract_strided_slice %558 {offsets = [0, 2], sizes = [16, 1], strides = [1, 1]} : vector<16x8xf32> to vector<16x1xf32>
    %605 = vector.extract_strided_slice %538 {offsets = [2, 0], sizes = [1, 1], strides = [1, 1]} : vector<8x1xf32> to vector<1x1xf32>
    %606 = vector.broadcast %605 : vector<1x1xf32> to vector<16x16xf32>
    %607 = arith.mulf %598, %606 : vector<16x16xf32>
    %608 = vector.broadcast %604 : vector<16x1xf32> to vector<16x16xf32>
    %609 = arith.mulf %608, %607 : vector<16x16xf32>
    %cst_86 = arith.constant dense<0.000000e+00> : vector<16xf32>
    %610 = vector.multi_reduction <add>, %609, %cst_86 [0] : vector<16x16xf32> to vector<16xf32>
    %611 = vector.shape_cast %610 : vector<16xf32> to vector<1x16xf32>
    %612 = vector.extract_strided_slice %536 {offsets = [2, 0], sizes = [1, 16], strides = [1, 1]} : vector<8x16xf32> to vector<1x16xf32>
    %613 = arith.subf %612, %611 : vector<1x16xf32>
    %614 = vector.extract_strided_slice %537 {offsets = [2, 0], sizes = [1, 1], strides = [1, 1]} : vector<8x1xf32> to vector<1x1xf32>
    %615 = vector.broadcast %614 : vector<1x1xf32> to vector<1x16xf32>
    %616 = arith.mulf %613, %615 : vector<1x16xf32>
    %617 = vector.broadcast %604 : vector<16x1xf32> to vector<16x16xf32>
    %618 = vector.broadcast %616 : vector<1x16xf32> to vector<16x16xf32>
    %619 = arith.mulf %617, %618 : vector<16x16xf32>
    %620 = arith.addf %607, %619 : vector<16x16xf32>
    %621 = vector.extract_strided_slice %557 {offsets = [0, 2], sizes = [16, 1], strides = [1, 1]} : vector<16x8xf32> to vector<16x1xf32>
    %622 = vector.broadcast %621 : vector<16x1xf32> to vector<16x16xf32>
    %623 = arith.mulf %622, %620 : vector<16x16xf32>
    %cst_87 = arith.constant dense<0.000000e+00> : vector<16xf32>
    %624 = vector.multi_reduction <add>, %623, %cst_87 [0] : vector<16x16xf32> to vector<16xf32>
    %625 = vector.shape_cast %624 : vector<16xf32> to vector<1x16xf32>
    %626 = vector.extract_strided_slice %558 {offsets = [0, 3], sizes = [16, 1], strides = [1, 1]} : vector<16x8xf32> to vector<16x1xf32>
    %627 = vector.extract_strided_slice %538 {offsets = [3, 0], sizes = [1, 1], strides = [1, 1]} : vector<8x1xf32> to vector<1x1xf32>
    %628 = vector.broadcast %627 : vector<1x1xf32> to vector<16x16xf32>
    %629 = arith.mulf %620, %628 : vector<16x16xf32>
    %630 = vector.broadcast %626 : vector<16x1xf32> to vector<16x16xf32>
    %631 = arith.mulf %630, %629 : vector<16x16xf32>
    %cst_88 = arith.constant dense<0.000000e+00> : vector<16xf32>
    %632 = vector.multi_reduction <add>, %631, %cst_88 [0] : vector<16x16xf32> to vector<16xf32>
    %633 = vector.shape_cast %632 : vector<16xf32> to vector<1x16xf32>
    %634 = vector.extract_strided_slice %536 {offsets = [3, 0], sizes = [1, 16], strides = [1, 1]} : vector<8x16xf32> to vector<1x16xf32>
    %635 = arith.subf %634, %633 : vector<1x16xf32>
    %636 = vector.extract_strided_slice %537 {offsets = [3, 0], sizes = [1, 1], strides = [1, 1]} : vector<8x1xf32> to vector<1x1xf32>
    %637 = vector.broadcast %636 : vector<1x1xf32> to vector<1x16xf32>
    %638 = arith.mulf %635, %637 : vector<1x16xf32>
    %639 = vector.broadcast %626 : vector<16x1xf32> to vector<16x16xf32>
    %640 = vector.broadcast %638 : vector<1x16xf32> to vector<16x16xf32>
    %641 = arith.mulf %639, %640 : vector<16x16xf32>
    %642 = arith.addf %629, %641 : vector<16x16xf32>
    %643 = vector.extract_strided_slice %557 {offsets = [0, 3], sizes = [16, 1], strides = [1, 1]} : vector<16x8xf32> to vector<16x1xf32>
    %644 = vector.broadcast %643 : vector<16x1xf32> to vector<16x16xf32>
    %645 = arith.mulf %644, %642 : vector<16x16xf32>
    %cst_89 = arith.constant dense<0.000000e+00> : vector<16xf32>
    %646 = vector.multi_reduction <add>, %645, %cst_89 [0] : vector<16x16xf32> to vector<16xf32>
    %647 = vector.shape_cast %646 : vector<16xf32> to vector<1x16xf32>
    %648 = vector.extract_strided_slice %558 {offsets = [0, 4], sizes = [16, 1], strides = [1, 1]} : vector<16x8xf32> to vector<16x1xf32>
    %649 = vector.extract_strided_slice %538 {offsets = [4, 0], sizes = [1, 1], strides = [1, 1]} : vector<8x1xf32> to vector<1x1xf32>
    %650 = vector.broadcast %649 : vector<1x1xf32> to vector<16x16xf32>
    %651 = arith.mulf %642, %650 : vector<16x16xf32>
    %652 = vector.broadcast %648 : vector<16x1xf32> to vector<16x16xf32>
    %653 = arith.mulf %652, %651 : vector<16x16xf32>
    %cst_90 = arith.constant dense<0.000000e+00> : vector<16xf32>
    %654 = vector.multi_reduction <add>, %653, %cst_90 [0] : vector<16x16xf32> to vector<16xf32>
    %655 = vector.shape_cast %654 : vector<16xf32> to vector<1x16xf32>
    %656 = vector.extract_strided_slice %536 {offsets = [4, 0], sizes = [1, 16], strides = [1, 1]} : vector<8x16xf32> to vector<1x16xf32>
    %657 = arith.subf %656, %655 : vector<1x16xf32>
    %658 = vector.extract_strided_slice %537 {offsets = [4, 0], sizes = [1, 1], strides = [1, 1]} : vector<8x1xf32> to vector<1x1xf32>
    %659 = vector.broadcast %658 : vector<1x1xf32> to vector<1x16xf32>
    %660 = arith.mulf %657, %659 : vector<1x16xf32>
    %661 = vector.broadcast %648 : vector<16x1xf32> to vector<16x16xf32>
    %662 = vector.broadcast %660 : vector<1x16xf32> to vector<16x16xf32>
    %663 = arith.mulf %661, %662 : vector<16x16xf32>
    %664 = arith.addf %651, %663 : vector<16x16xf32>
    %665 = vector.extract_strided_slice %557 {offsets = [0, 4], sizes = [16, 1], strides = [1, 1]} : vector<16x8xf32> to vector<16x1xf32>
    %666 = vector.broadcast %665 : vector<16x1xf32> to vector<16x16xf32>
    %667 = arith.mulf %666, %664 : vector<16x16xf32>
    %cst_91 = arith.constant dense<0.000000e+00> : vector<16xf32>
    %668 = vector.multi_reduction <add>, %667, %cst_91 [0] : vector<16x16xf32> to vector<16xf32>
    %669 = vector.shape_cast %668 : vector<16xf32> to vector<1x16xf32>
    %670 = vector.extract_strided_slice %558 {offsets = [0, 5], sizes = [16, 1], strides = [1, 1]} : vector<16x8xf32> to vector<16x1xf32>
    %671 = vector.extract_strided_slice %538 {offsets = [5, 0], sizes = [1, 1], strides = [1, 1]} : vector<8x1xf32> to vector<1x1xf32>
    %672 = vector.broadcast %671 : vector<1x1xf32> to vector<16x16xf32>
    %673 = arith.mulf %664, %672 : vector<16x16xf32>
    %674 = vector.broadcast %670 : vector<16x1xf32> to vector<16x16xf32>
    %675 = arith.mulf %674, %673 : vector<16x16xf32>
    %cst_92 = arith.constant dense<0.000000e+00> : vector<16xf32>
    %676 = vector.multi_reduction <add>, %675, %cst_92 [0] : vector<16x16xf32> to vector<16xf32>
    %677 = vector.shape_cast %676 : vector<16xf32> to vector<1x16xf32>
    %678 = vector.extract_strided_slice %536 {offsets = [5, 0], sizes = [1, 16], strides = [1, 1]} : vector<8x16xf32> to vector<1x16xf32>
    %679 = arith.subf %678, %677 : vector<1x16xf32>
    %680 = vector.extract_strided_slice %537 {offsets = [5, 0], sizes = [1, 1], strides = [1, 1]} : vector<8x1xf32> to vector<1x1xf32>
    %681 = vector.broadcast %680 : vector<1x1xf32> to vector<1x16xf32>
    %682 = arith.mulf %679, %681 : vector<1x16xf32>
    %683 = vector.broadcast %670 : vector<16x1xf32> to vector<16x16xf32>
    %684 = vector.broadcast %682 : vector<1x16xf32> to vector<16x16xf32>
    %685 = arith.mulf %683, %684 : vector<16x16xf32>
    %686 = arith.addf %673, %685 : vector<16x16xf32>
    %687 = vector.extract_strided_slice %557 {offsets = [0, 5], sizes = [16, 1], strides = [1, 1]} : vector<16x8xf32> to vector<16x1xf32>
    %688 = vector.broadcast %687 : vector<16x1xf32> to vector<16x16xf32>
    %689 = arith.mulf %688, %686 : vector<16x16xf32>
    %cst_93 = arith.constant dense<0.000000e+00> : vector<16xf32>
    %690 = vector.multi_reduction <add>, %689, %cst_93 [0] : vector<16x16xf32> to vector<16xf32>
    %691 = vector.shape_cast %690 : vector<16xf32> to vector<1x16xf32>
    %692 = vector.extract_strided_slice %558 {offsets = [0, 6], sizes = [16, 1], strides = [1, 1]} : vector<16x8xf32> to vector<16x1xf32>
    %693 = vector.extract_strided_slice %538 {offsets = [6, 0], sizes = [1, 1], strides = [1, 1]} : vector<8x1xf32> to vector<1x1xf32>
    %694 = vector.broadcast %693 : vector<1x1xf32> to vector<16x16xf32>
    %695 = arith.mulf %686, %694 : vector<16x16xf32>
    %696 = vector.broadcast %692 : vector<16x1xf32> to vector<16x16xf32>
    %697 = arith.mulf %696, %695 : vector<16x16xf32>
    %cst_94 = arith.constant dense<0.000000e+00> : vector<16xf32>
    %698 = vector.multi_reduction <add>, %697, %cst_94 [0] : vector<16x16xf32> to vector<16xf32>
    %699 = vector.shape_cast %698 : vector<16xf32> to vector<1x16xf32>
    %700 = vector.extract_strided_slice %536 {offsets = [6, 0], sizes = [1, 16], strides = [1, 1]} : vector<8x16xf32> to vector<1x16xf32>
    %701 = arith.subf %700, %699 : vector<1x16xf32>
    %702 = vector.extract_strided_slice %537 {offsets = [6, 0], sizes = [1, 1], strides = [1, 1]} : vector<8x1xf32> to vector<1x1xf32>
    %703 = vector.broadcast %702 : vector<1x1xf32> to vector<1x16xf32>
    %704 = arith.mulf %701, %703 : vector<1x16xf32>
    %705 = vector.broadcast %692 : vector<16x1xf32> to vector<16x16xf32>
    %706 = vector.broadcast %704 : vector<1x16xf32> to vector<16x16xf32>
    %707 = arith.mulf %705, %706 : vector<16x16xf32>
    %708 = arith.addf %695, %707 : vector<16x16xf32>
    %709 = vector.extract_strided_slice %557 {offsets = [0, 6], sizes = [16, 1], strides = [1, 1]} : vector<16x8xf32> to vector<16x1xf32>
    %710 = vector.broadcast %709 : vector<16x1xf32> to vector<16x16xf32>
    %711 = arith.mulf %710, %708 : vector<16x16xf32>
    %cst_95 = arith.constant dense<0.000000e+00> : vector<16xf32>
    %712 = vector.multi_reduction <add>, %711, %cst_95 [0] : vector<16x16xf32> to vector<16xf32>
    %713 = vector.shape_cast %712 : vector<16xf32> to vector<1x16xf32>
    %714 = vector.extract_strided_slice %558 {offsets = [0, 7], sizes = [16, 1], strides = [1, 1]} : vector<16x8xf32> to vector<16x1xf32>
    %715 = vector.extract_strided_slice %538 {offsets = [7, 0], sizes = [1, 1], strides = [1, 1]} : vector<8x1xf32> to vector<1x1xf32>
    %716 = vector.broadcast %715 : vector<1x1xf32> to vector<16x16xf32>
    %717 = arith.mulf %708, %716 : vector<16x16xf32>
    %718 = vector.broadcast %714 : vector<16x1xf32> to vector<16x16xf32>
    %719 = arith.mulf %718, %717 : vector<16x16xf32>
    %cst_96 = arith.constant dense<0.000000e+00> : vector<16xf32>
    %720 = vector.multi_reduction <add>, %719, %cst_96 [0] : vector<16x16xf32> to vector<16xf32>
    %721 = vector.shape_cast %720 : vector<16xf32> to vector<1x16xf32>
    %722 = vector.extract_strided_slice %536 {offsets = [7, 0], sizes = [1, 16], strides = [1, 1]} : vector<8x16xf32> to vector<1x16xf32>
    %723 = arith.subf %722, %721 : vector<1x16xf32>
    %724 = vector.extract_strided_slice %537 {offsets = [7, 0], sizes = [1, 1], strides = [1, 1]} : vector<8x1xf32> to vector<1x1xf32>
    %725 = vector.broadcast %724 : vector<1x1xf32> to vector<1x16xf32>
    %726 = arith.mulf %723, %725 : vector<1x16xf32>
    %727 = vector.broadcast %714 : vector<16x1xf32> to vector<16x16xf32>
    %728 = vector.broadcast %726 : vector<1x16xf32> to vector<16x16xf32>
    %729 = arith.mulf %727, %728 : vector<16x16xf32>
    %730 = arith.addf %717, %729 : vector<16x16xf32>
    %731 = vector.extract_strided_slice %557 {offsets = [0, 7], sizes = [16, 1], strides = [1, 1]} : vector<16x8xf32> to vector<16x1xf32>
    %732 = vector.broadcast %731 : vector<16x1xf32> to vector<16x16xf32>
    %733 = arith.mulf %732, %730 : vector<16x16xf32>
    %cst_97 = arith.constant dense<0.000000e+00> : vector<16xf32>
    %734 = vector.multi_reduction <add>, %733, %cst_97 [0] : vector<16x16xf32> to vector<16xf32>
    %735 = vector.shape_cast %734 : vector<16xf32> to vector<1x16xf32>
    %736 = tpu.concatenate %581, %603, %625, %647, %669, %691, %713, %735 in 0 : vector<1x16xf32>, vector<1x16xf32>, vector<1x16xf32>, vector<1x16xf32>, vector<1x16xf32>, vector<1x16xf32>, vector<1x16xf32>, vector<1x16xf32> -> vector<8x16xf32>
    %737 = vector.extract_strided_slice %533 {offsets = [0, 16], sizes = [8, 16], strides = [1, 1]} : vector<8x96xf32> to vector<8x16xf32>
    %738 = vector.extract_strided_slice %533 {offsets = [0, 48], sizes = [8, 16], strides = [1, 1]} : vector<8x96xf32> to vector<8x16xf32>
    %739 = vector.extract_strided_slice %533 {offsets = [0, 80], sizes = [8, 16], strides = [1, 1]} : vector<8x96xf32> to vector<8x16xf32>
    %740 = vector.extract_strided_slice %25 {offsets = [8, 1], sizes = [8, 1], strides = [1, 1]} : vector<16x2xf32> to vector<8x1xf32>
    %741 = vector.extract_strided_slice %46 {offsets = [8, 1], sizes = [8, 1], strides = [1, 1]} : vector<16x2xf32> to vector<8x1xf32>
    %742 = arith.mulf %737, %737 : vector<8x16xf32>
    %cst_98 = arith.constant dense<0.000000e+00> : vector<8xf32>
    %743 = vector.multi_reduction <add>, %742, %cst_98 [1] : vector<8x16xf32> to vector<8xf32>
    %744 = vector.shape_cast %743 : vector<8xf32> to vector<8x1xf32>
    %cst_99 = arith.constant 9.99999997E-7 : f32
    %745 = vector.broadcast %cst_99 : f32 to vector<8x1xf32>
    %746 = arith.addf %744, %745 : vector<8x1xf32>
    %747 = math.rsqrt %746 : vector<8x1xf32>
    %748 = vector.broadcast %747 : vector<8x1xf32> to vector<8x16xf32>
    %749 = arith.mulf %737, %748 : vector<8x16xf32>
    %cst_100 = arith.constant 2.500000e-01 : f32
    %750 = vector.broadcast %cst_100 : f32 to vector<8x16xf32>
    %751 = arith.mulf %749, %750 : vector<8x16xf32>
    %752 = arith.mulf %738, %738 : vector<8x16xf32>
    %cst_101 = arith.constant dense<0.000000e+00> : vector<8xf32>
    %753 = vector.multi_reduction <add>, %752, %cst_101 [1] : vector<8x16xf32> to vector<8xf32>
    %754 = vector.shape_cast %753 : vector<8xf32> to vector<8x1xf32>
    %cst_102 = arith.constant 9.99999997E-7 : f32
    %755 = vector.broadcast %cst_102 : f32 to vector<8x1xf32>
    %756 = arith.addf %754, %755 : vector<8x1xf32>
    %757 = math.rsqrt %756 : vector<8x1xf32>
    %758 = vector.broadcast %757 : vector<8x1xf32> to vector<8x16xf32>
    %759 = arith.mulf %738, %758 : vector<8x16xf32>
    %760 = tpu.transpose %751, [1, 0] : vector<8x16xf32> -> vector<16x8xf32>
    %761 = tpu.transpose %759, [1, 0] : vector<8x16xf32> -> vector<16x8xf32>
    %cst_103 = arith.constant 0.000000e+00 : f32
    %762 = vector.broadcast %cst_103 : f32 to vector<16x16xf32>
    %763 = vector.extract_strided_slice %761 {offsets = [0, 0], sizes = [16, 1], strides = [1, 1]} : vector<16x8xf32> to vector<16x1xf32>
    %764 = vector.extract_strided_slice %741 {offsets = [0, 0], sizes = [1, 1], strides = [1, 1]} : vector<8x1xf32> to vector<1x1xf32>
    %765 = vector.broadcast %764 : vector<1x1xf32> to vector<16x16xf32>
    %766 = arith.mulf %762, %765 : vector<16x16xf32>
    %767 = vector.broadcast %763 : vector<16x1xf32> to vector<16x16xf32>
    %768 = arith.mulf %767, %766 : vector<16x16xf32>
    %cst_104 = arith.constant dense<0.000000e+00> : vector<16xf32>
    %769 = vector.multi_reduction <add>, %768, %cst_104 [0] : vector<16x16xf32> to vector<16xf32>
    %770 = vector.shape_cast %769 : vector<16xf32> to vector<1x16xf32>
    %771 = vector.extract_strided_slice %739 {offsets = [0, 0], sizes = [1, 16], strides = [1, 1]} : vector<8x16xf32> to vector<1x16xf32>
    %772 = arith.subf %771, %770 : vector<1x16xf32>
    %773 = vector.extract_strided_slice %740 {offsets = [0, 0], sizes = [1, 1], strides = [1, 1]} : vector<8x1xf32> to vector<1x1xf32>
    %774 = vector.broadcast %773 : vector<1x1xf32> to vector<1x16xf32>
    %775 = arith.mulf %772, %774 : vector<1x16xf32>
    %776 = vector.broadcast %763 : vector<16x1xf32> to vector<16x16xf32>
    %777 = vector.broadcast %775 : vector<1x16xf32> to vector<16x16xf32>
    %778 = arith.mulf %776, %777 : vector<16x16xf32>
    %779 = arith.addf %766, %778 : vector<16x16xf32>
    %780 = vector.extract_strided_slice %760 {offsets = [0, 0], sizes = [16, 1], strides = [1, 1]} : vector<16x8xf32> to vector<16x1xf32>
    %781 = vector.broadcast %780 : vector<16x1xf32> to vector<16x16xf32>
    %782 = arith.mulf %781, %779 : vector<16x16xf32>
    %cst_105 = arith.constant dense<0.000000e+00> : vector<16xf32>
    %783 = vector.multi_reduction <add>, %782, %cst_105 [0] : vector<16x16xf32> to vector<16xf32>
    %784 = vector.shape_cast %783 : vector<16xf32> to vector<1x16xf32>
    %785 = vector.extract_strided_slice %761 {offsets = [0, 1], sizes = [16, 1], strides = [1, 1]} : vector<16x8xf32> to vector<16x1xf32>
    %786 = vector.extract_strided_slice %741 {offsets = [1, 0], sizes = [1, 1], strides = [1, 1]} : vector<8x1xf32> to vector<1x1xf32>
    %787 = vector.broadcast %786 : vector<1x1xf32> to vector<16x16xf32>
    %788 = arith.mulf %779, %787 : vector<16x16xf32>
    %789 = vector.broadcast %785 : vector<16x1xf32> to vector<16x16xf32>
    %790 = arith.mulf %789, %788 : vector<16x16xf32>
    %cst_106 = arith.constant dense<0.000000e+00> : vector<16xf32>
    %791 = vector.multi_reduction <add>, %790, %cst_106 [0] : vector<16x16xf32> to vector<16xf32>
    %792 = vector.shape_cast %791 : vector<16xf32> to vector<1x16xf32>
    %793 = vector.extract_strided_slice %739 {offsets = [1, 0], sizes = [1, 16], strides = [1, 1]} : vector<8x16xf32> to vector<1x16xf32>
    %794 = arith.subf %793, %792 : vector<1x16xf32>
    %795 = vector.extract_strided_slice %740 {offsets = [1, 0], sizes = [1, 1], strides = [1, 1]} : vector<8x1xf32> to vector<1x1xf32>
    %796 = vector.broadcast %795 : vector<1x1xf32> to vector<1x16xf32>
    %797 = arith.mulf %794, %796 : vector<1x16xf32>
    %798 = vector.broadcast %785 : vector<16x1xf32> to vector<16x16xf32>
    %799 = vector.broadcast %797 : vector<1x16xf32> to vector<16x16xf32>
    %800 = arith.mulf %798, %799 : vector<16x16xf32>
    %801 = arith.addf %788, %800 : vector<16x16xf32>
    %802 = vector.extract_strided_slice %760 {offsets = [0, 1], sizes = [16, 1], strides = [1, 1]} : vector<16x8xf32> to vector<16x1xf32>
    %803 = vector.broadcast %802 : vector<16x1xf32> to vector<16x16xf32>
    %804 = arith.mulf %803, %801 : vector<16x16xf32>
    %cst_107 = arith.constant dense<0.000000e+00> : vector<16xf32>
    %805 = vector.multi_reduction <add>, %804, %cst_107 [0] : vector<16x16xf32> to vector<16xf32>
    %806 = vector.shape_cast %805 : vector<16xf32> to vector<1x16xf32>
    %807 = vector.extract_strided_slice %761 {offsets = [0, 2], sizes = [16, 1], strides = [1, 1]} : vector<16x8xf32> to vector<16x1xf32>
    %808 = vector.extract_strided_slice %741 {offsets = [2, 0], sizes = [1, 1], strides = [1, 1]} : vector<8x1xf32> to vector<1x1xf32>
    %809 = vector.broadcast %808 : vector<1x1xf32> to vector<16x16xf32>
    %810 = arith.mulf %801, %809 : vector<16x16xf32>
    %811 = vector.broadcast %807 : vector<16x1xf32> to vector<16x16xf32>
    %812 = arith.mulf %811, %810 : vector<16x16xf32>
    %cst_108 = arith.constant dense<0.000000e+00> : vector<16xf32>
    %813 = vector.multi_reduction <add>, %812, %cst_108 [0] : vector<16x16xf32> to vector<16xf32>
    %814 = vector.shape_cast %813 : vector<16xf32> to vector<1x16xf32>
    %815 = vector.extract_strided_slice %739 {offsets = [2, 0], sizes = [1, 16], strides = [1, 1]} : vector<8x16xf32> to vector<1x16xf32>
    %816 = arith.subf %815, %814 : vector<1x16xf32>
    %817 = vector.extract_strided_slice %740 {offsets = [2, 0], sizes = [1, 1], strides = [1, 1]} : vector<8x1xf32> to vector<1x1xf32>
    %818 = vector.broadcast %817 : vector<1x1xf32> to vector<1x16xf32>
    %819 = arith.mulf %816, %818 : vector<1x16xf32>
    %820 = vector.broadcast %807 : vector<16x1xf32> to vector<16x16xf32>
    %821 = vector.broadcast %819 : vector<1x16xf32> to vector<16x16xf32>
    %822 = arith.mulf %820, %821 : vector<16x16xf32>
    %823 = arith.addf %810, %822 : vector<16x16xf32>
    %824 = vector.extract_strided_slice %760 {offsets = [0, 2], sizes = [16, 1], strides = [1, 1]} : vector<16x8xf32> to vector<16x1xf32>
    %825 = vector.broadcast %824 : vector<16x1xf32> to vector<16x16xf32>
    %826 = arith.mulf %825, %823 : vector<16x16xf32>
    %cst_109 = arith.constant dense<0.000000e+00> : vector<16xf32>
    %827 = vector.multi_reduction <add>, %826, %cst_109 [0] : vector<16x16xf32> to vector<16xf32>
    %828 = vector.shape_cast %827 : vector<16xf32> to vector<1x16xf32>
    %829 = vector.extract_strided_slice %761 {offsets = [0, 3], sizes = [16, 1], strides = [1, 1]} : vector<16x8xf32> to vector<16x1xf32>
    %830 = vector.extract_strided_slice %741 {offsets = [3, 0], sizes = [1, 1], strides = [1, 1]} : vector<8x1xf32> to vector<1x1xf32>
    %831 = vector.broadcast %830 : vector<1x1xf32> to vector<16x16xf32>
    %832 = arith.mulf %823, %831 : vector<16x16xf32>
    %833 = vector.broadcast %829 : vector<16x1xf32> to vector<16x16xf32>
    %834 = arith.mulf %833, %832 : vector<16x16xf32>
    %cst_110 = arith.constant dense<0.000000e+00> : vector<16xf32>
    %835 = vector.multi_reduction <add>, %834, %cst_110 [0] : vector<16x16xf32> to vector<16xf32>
    %836 = vector.shape_cast %835 : vector<16xf32> to vector<1x16xf32>
    %837 = vector.extract_strided_slice %739 {offsets = [3, 0], sizes = [1, 16], strides = [1, 1]} : vector<8x16xf32> to vector<1x16xf32>
    %838 = arith.subf %837, %836 : vector<1x16xf32>
    %839 = vector.extract_strided_slice %740 {offsets = [3, 0], sizes = [1, 1], strides = [1, 1]} : vector<8x1xf32> to vector<1x1xf32>
    %840 = vector.broadcast %839 : vector<1x1xf32> to vector<1x16xf32>
    %841 = arith.mulf %838, %840 : vector<1x16xf32>
    %842 = vector.broadcast %829 : vector<16x1xf32> to vector<16x16xf32>
    %843 = vector.broadcast %841 : vector<1x16xf32> to vector<16x16xf32>
    %844 = arith.mulf %842, %843 : vector<16x16xf32>
    %845 = arith.addf %832, %844 : vector<16x16xf32>
    %846 = vector.extract_strided_slice %760 {offsets = [0, 3], sizes = [16, 1], strides = [1, 1]} : vector<16x8xf32> to vector<16x1xf32>
    %847 = vector.broadcast %846 : vector<16x1xf32> to vector<16x16xf32>
    %848 = arith.mulf %847, %845 : vector<16x16xf32>
    %cst_111 = arith.constant dense<0.000000e+00> : vector<16xf32>
    %849 = vector.multi_reduction <add>, %848, %cst_111 [0] : vector<16x16xf32> to vector<16xf32>
    %850 = vector.shape_cast %849 : vector<16xf32> to vector<1x16xf32>
    %851 = vector.extract_strided_slice %761 {offsets = [0, 4], sizes = [16, 1], strides = [1, 1]} : vector<16x8xf32> to vector<16x1xf32>
    %852 = vector.extract_strided_slice %741 {offsets = [4, 0], sizes = [1, 1], strides = [1, 1]} : vector<8x1xf32> to vector<1x1xf32>
    %853 = vector.broadcast %852 : vector<1x1xf32> to vector<16x16xf32>
    %854 = arith.mulf %845, %853 : vector<16x16xf32>
    %855 = vector.broadcast %851 : vector<16x1xf32> to vector<16x16xf32>
    %856 = arith.mulf %855, %854 : vector<16x16xf32>
    %cst_112 = arith.constant dense<0.000000e+00> : vector<16xf32>
    %857 = vector.multi_reduction <add>, %856, %cst_112 [0] : vector<16x16xf32> to vector<16xf32>
    %858 = vector.shape_cast %857 : vector<16xf32> to vector<1x16xf32>
    %859 = vector.extract_strided_slice %739 {offsets = [4, 0], sizes = [1, 16], strides = [1, 1]} : vector<8x16xf32> to vector<1x16xf32>
    %860 = arith.subf %859, %858 : vector<1x16xf32>
    %861 = vector.extract_strided_slice %740 {offsets = [4, 0], sizes = [1, 1], strides = [1, 1]} : vector<8x1xf32> to vector<1x1xf32>
    %862 = vector.broadcast %861 : vector<1x1xf32> to vector<1x16xf32>
    %863 = arith.mulf %860, %862 : vector<1x16xf32>
    %864 = vector.broadcast %851 : vector<16x1xf32> to vector<16x16xf32>
    %865 = vector.broadcast %863 : vector<1x16xf32> to vector<16x16xf32>
    %866 = arith.mulf %864, %865 : vector<16x16xf32>
    %867 = arith.addf %854, %866 : vector<16x16xf32>
    %868 = vector.extract_strided_slice %760 {offsets = [0, 4], sizes = [16, 1], strides = [1, 1]} : vector<16x8xf32> to vector<16x1xf32>
    %869 = vector.broadcast %868 : vector<16x1xf32> to vector<16x16xf32>
    %870 = arith.mulf %869, %867 : vector<16x16xf32>
    %cst_113 = arith.constant dense<0.000000e+00> : vector<16xf32>
    %871 = vector.multi_reduction <add>, %870, %cst_113 [0] : vector<16x16xf32> to vector<16xf32>
    %872 = vector.shape_cast %871 : vector<16xf32> to vector<1x16xf32>
    %873 = vector.extract_strided_slice %761 {offsets = [0, 5], sizes = [16, 1], strides = [1, 1]} : vector<16x8xf32> to vector<16x1xf32>
    %874 = vector.extract_strided_slice %741 {offsets = [5, 0], sizes = [1, 1], strides = [1, 1]} : vector<8x1xf32> to vector<1x1xf32>
    %875 = vector.broadcast %874 : vector<1x1xf32> to vector<16x16xf32>
    %876 = arith.mulf %867, %875 : vector<16x16xf32>
    %877 = vector.broadcast %873 : vector<16x1xf32> to vector<16x16xf32>
    %878 = arith.mulf %877, %876 : vector<16x16xf32>
    %cst_114 = arith.constant dense<0.000000e+00> : vector<16xf32>
    %879 = vector.multi_reduction <add>, %878, %cst_114 [0] : vector<16x16xf32> to vector<16xf32>
    %880 = vector.shape_cast %879 : vector<16xf32> to vector<1x16xf32>
    %881 = vector.extract_strided_slice %739 {offsets = [5, 0], sizes = [1, 16], strides = [1, 1]} : vector<8x16xf32> to vector<1x16xf32>
    %882 = arith.subf %881, %880 : vector<1x16xf32>
    %883 = vector.extract_strided_slice %740 {offsets = [5, 0], sizes = [1, 1], strides = [1, 1]} : vector<8x1xf32> to vector<1x1xf32>
    %884 = vector.broadcast %883 : vector<1x1xf32> to vector<1x16xf32>
    %885 = arith.mulf %882, %884 : vector<1x16xf32>
    %886 = vector.broadcast %873 : vector<16x1xf32> to vector<16x16xf32>
    %887 = vector.broadcast %885 : vector<1x16xf32> to vector<16x16xf32>
    %888 = arith.mulf %886, %887 : vector<16x16xf32>
    %889 = arith.addf %876, %888 : vector<16x16xf32>
    %890 = vector.extract_strided_slice %760 {offsets = [0, 5], sizes = [16, 1], strides = [1, 1]} : vector<16x8xf32> to vector<16x1xf32>
    %891 = vector.broadcast %890 : vector<16x1xf32> to vector<16x16xf32>
    %892 = arith.mulf %891, %889 : vector<16x16xf32>
    %cst_115 = arith.constant dense<0.000000e+00> : vector<16xf32>
    %893 = vector.multi_reduction <add>, %892, %cst_115 [0] : vector<16x16xf32> to vector<16xf32>
    %894 = vector.shape_cast %893 : vector<16xf32> to vector<1x16xf32>
    %895 = vector.extract_strided_slice %761 {offsets = [0, 6], sizes = [16, 1], strides = [1, 1]} : vector<16x8xf32> to vector<16x1xf32>
    %896 = vector.extract_strided_slice %741 {offsets = [6, 0], sizes = [1, 1], strides = [1, 1]} : vector<8x1xf32> to vector<1x1xf32>
    %897 = vector.broadcast %896 : vector<1x1xf32> to vector<16x16xf32>
    %898 = arith.mulf %889, %897 : vector<16x16xf32>
    %899 = vector.broadcast %895 : vector<16x1xf32> to vector<16x16xf32>
    %900 = arith.mulf %899, %898 : vector<16x16xf32>
    %cst_116 = arith.constant dense<0.000000e+00> : vector<16xf32>
    %901 = vector.multi_reduction <add>, %900, %cst_116 [0] : vector<16x16xf32> to vector<16xf32>
    %902 = vector.shape_cast %901 : vector<16xf32> to vector<1x16xf32>
    %903 = vector.extract_strided_slice %739 {offsets = [6, 0], sizes = [1, 16], strides = [1, 1]} : vector<8x16xf32> to vector<1x16xf32>
    %904 = arith.subf %903, %902 : vector<1x16xf32>
    %905 = vector.extract_strided_slice %740 {offsets = [6, 0], sizes = [1, 1], strides = [1, 1]} : vector<8x1xf32> to vector<1x1xf32>
    %906 = vector.broadcast %905 : vector<1x1xf32> to vector<1x16xf32>
    %907 = arith.mulf %904, %906 : vector<1x16xf32>
    %908 = vector.broadcast %895 : vector<16x1xf32> to vector<16x16xf32>
    %909 = vector.broadcast %907 : vector<1x16xf32> to vector<16x16xf32>
    %910 = arith.mulf %908, %909 : vector<16x16xf32>
    %911 = arith.addf %898, %910 : vector<16x16xf32>
    %912 = vector.extract_strided_slice %760 {offsets = [0, 6], sizes = [16, 1], strides = [1, 1]} : vector<16x8xf32> to vector<16x1xf32>
    %913 = vector.broadcast %912 : vector<16x1xf32> to vector<16x16xf32>
    %914 = arith.mulf %913, %911 : vector<16x16xf32>
    %cst_117 = arith.constant dense<0.000000e+00> : vector<16xf32>
    %915 = vector.multi_reduction <add>, %914, %cst_117 [0] : vector<16x16xf32> to vector<16xf32>
    %916 = vector.shape_cast %915 : vector<16xf32> to vector<1x16xf32>
    %917 = vector.extract_strided_slice %761 {offsets = [0, 7], sizes = [16, 1], strides = [1, 1]} : vector<16x8xf32> to vector<16x1xf32>
    %918 = vector.extract_strided_slice %741 {offsets = [7, 0], sizes = [1, 1], strides = [1, 1]} : vector<8x1xf32> to vector<1x1xf32>
    %919 = vector.broadcast %918 : vector<1x1xf32> to vector<16x16xf32>
    %920 = arith.mulf %911, %919 : vector<16x16xf32>
    %921 = vector.broadcast %917 : vector<16x1xf32> to vector<16x16xf32>
    %922 = arith.mulf %921, %920 : vector<16x16xf32>
    %cst_118 = arith.constant dense<0.000000e+00> : vector<16xf32>
    %923 = vector.multi_reduction <add>, %922, %cst_118 [0] : vector<16x16xf32> to vector<16xf32>
    %924 = vector.shape_cast %923 : vector<16xf32> to vector<1x16xf32>
    %925 = vector.extract_strided_slice %739 {offsets = [7, 0], sizes = [1, 16], strides = [1, 1]} : vector<8x16xf32> to vector<1x16xf32>
    %926 = arith.subf %925, %924 : vector<1x16xf32>
    %927 = vector.extract_strided_slice %740 {offsets = [7, 0], sizes = [1, 1], strides = [1, 1]} : vector<8x1xf32> to vector<1x1xf32>
    %928 = vector.broadcast %927 : vector<1x1xf32> to vector<1x16xf32>
    %929 = arith.mulf %926, %928 : vector<1x16xf32>
    %930 = vector.broadcast %917 : vector<16x1xf32> to vector<16x16xf32>
    %931 = vector.broadcast %929 : vector<1x16xf32> to vector<16x16xf32>
    %932 = arith.mulf %930, %931 : vector<16x16xf32>
    %933 = arith.addf %920, %932 : vector<16x16xf32>
    %934 = vector.extract_strided_slice %760 {offsets = [0, 7], sizes = [16, 1], strides = [1, 1]} : vector<16x8xf32> to vector<16x1xf32>
    %935 = vector.broadcast %934 : vector<16x1xf32> to vector<16x16xf32>
    %936 = arith.mulf %935, %933 : vector<16x16xf32>
    %cst_119 = arith.constant dense<0.000000e+00> : vector<16xf32>
    %937 = vector.multi_reduction <add>, %936, %cst_119 [0] : vector<16x16xf32> to vector<16xf32>
    %938 = vector.shape_cast %937 : vector<16xf32> to vector<1x16xf32>
    %939 = tpu.concatenate %784, %806, %828, %850, %872, %894, %916, %938 in 0 : vector<1x16xf32>, vector<1x16xf32>, vector<1x16xf32>, vector<1x16xf32>, vector<1x16xf32>, vector<1x16xf32>, vector<1x16xf32>, vector<1x16xf32> -> vector<8x16xf32>
    %940 = tpu.concatenate %736, %939 in 1 : vector<8x16xf32>, vector<8x16xf32> -> vector<8x32xf32>
    %941 = tpu.concatenate %500, %940 in 0 : vector<8x32xf32>, vector<8x32xf32> -> vector<16x32xf32>
    %942 = vector.extract_strided_slice %941 {offsets = [0, 0], sizes = [16, 16], strides = [1, 1]} : vector<16x32xf32> to vector<16x16xf32>
    %943 = vector.extract_strided_slice %17 {offsets = [0, 0], sizes = [16, 16], strides = [1, 1]} : vector<16x32xf32> to vector<16x16xf32>
    %944 = arith.mulf %942, %942 : vector<16x16xf32>
    %cst_120 = arith.constant dense<0.000000e+00> : vector<16xf32>
    %945 = vector.multi_reduction <add>, %944, %cst_120 [1] : vector<16x16xf32> to vector<16xf32>
    %946 = vector.shape_cast %945 : vector<16xf32> to vector<16x1xf32>
    %cst_121 = arith.constant 1.600000e+01 : f32
    %947 = vector.broadcast %cst_121 : f32 to vector<16x1xf32>
    %948 = arith.divf %946, %947 : vector<16x1xf32>
    %cst_122 = arith.constant 9.99999974E-6 : f32
    %949 = vector.broadcast %cst_122 : f32 to vector<16x1xf32>
    %950 = arith.addf %948, %949 : vector<16x1xf32>
    %951 = math.rsqrt %950 : vector<16x1xf32>
    %952 = vector.broadcast %951 : vector<16x1xf32> to vector<16x16xf32>
    %953 = arith.mulf %942, %952 : vector<16x16xf32>
    %cst_123 = arith.constant 0.000000e+00 : f32
    %954 = vector.broadcast %cst_123 : f32 to vector<16x16xf32>
    %955 = arith.subf %954, %943 : vector<16x16xf32>
    %956 = math.exp %955 : vector<16x16xf32>
    %cst_124 = arith.constant 1.000000e+00 : f32
    %957 = vector.broadcast %cst_124 : f32 to vector<16x16xf32>
    %958 = arith.addf %957, %956 : vector<16x16xf32>
    %cst_125 = arith.constant 1.000000e+00 : f32
    %959 = vector.broadcast %cst_125 : f32 to vector<16x16xf32>
    %960 = arith.divf %959, %958 : vector<16x16xf32>
    %961 = arith.mulf %943, %960 : vector<16x16xf32>
    %962 = arith.mulf %953, %961 : vector<16x16xf32>
    %963 = vector.extract_strided_slice %941 {offsets = [0, 16], sizes = [16, 16], strides = [1, 1]} : vector<16x32xf32> to vector<16x16xf32>
    %964 = vector.extract_strided_slice %17 {offsets = [0, 16], sizes = [16, 16], strides = [1, 1]} : vector<16x32xf32> to vector<16x16xf32>
    %965 = arith.mulf %963, %963 : vector<16x16xf32>
    %cst_126 = arith.constant dense<0.000000e+00> : vector<16xf32>
    %966 = vector.multi_reduction <add>, %965, %cst_126 [1] : vector<16x16xf32> to vector<16xf32>
    %967 = vector.shape_cast %966 : vector<16xf32> to vector<16x1xf32>
    %cst_127 = arith.constant 1.600000e+01 : f32
    %968 = vector.broadcast %cst_127 : f32 to vector<16x1xf32>
    %969 = arith.divf %967, %968 : vector<16x1xf32>
    %cst_128 = arith.constant 9.99999974E-6 : f32
    %970 = vector.broadcast %cst_128 : f32 to vector<16x1xf32>
    %971 = arith.addf %969, %970 : vector<16x1xf32>
    %972 = math.rsqrt %971 : vector<16x1xf32>
    %973 = vector.broadcast %972 : vector<16x1xf32> to vector<16x16xf32>
    %974 = arith.mulf %963, %973 : vector<16x16xf32>
    %cst_129 = arith.constant 0.000000e+00 : f32
    %975 = vector.broadcast %cst_129 : f32 to vector<16x16xf32>
    %976 = arith.subf %975, %964 : vector<16x16xf32>
    %977 = math.exp %976 : vector<16x16xf32>
    %cst_130 = arith.constant 1.000000e+00 : f32
    %978 = vector.broadcast %cst_130 : f32 to vector<16x16xf32>
    %979 = arith.addf %978, %977 : vector<16x16xf32>
    %cst_131 = arith.constant 1.000000e+00 : f32
    %980 = vector.broadcast %cst_131 : f32 to vector<16x16xf32>
    %981 = arith.divf %980, %979 : vector<16x16xf32>
    %982 = arith.mulf %964, %981 : vector<16x16xf32>
    %983 = arith.mulf %974, %982 : vector<16x16xf32>
    %984 = tpu.concatenate %962, %983 in 1 : vector<16x16xf32>, vector<16x16xf32> -> vector<16x32xf32>
    %c0_132 = arith.constant 0 : index
    %c0_133 = arith.constant 0 : index
    %985 = vector.load %arg6[%c0_132, %c0_133] : memref<32x32xbf16, #tpu.memory_space<vmem>>, vector<32x32xbf16>
    %986 = arith.truncf %984 : vector<16x32xf32> to vector<16x32xbf16>
    %cst_134 = arith.constant dense<0.000000e+00> : vector<16x32xf32>
    %987 = tpu.matmul %986, %985, %cst_134 {dimension_numbers = #tpu.dot_dimension_numbers<[1], [0], [0], [1], [0, 0, 1, 1], [], []>} : vector<16x32xbf16>, vector<32x32xbf16>, vector<16x32xf32> -> vector<16x32xf32>
    %988 = arith.addf %0, %987 : vector<16x32xf32>
    %cst_135 = arith.constant 0.707106769 : f32
    %989 = vector.broadcast %cst_135 : f32 to vector<16x32xf32>
    %990 = arith.mulf %989, %988 : vector<16x32xf32>
    %991 = arith.mulf %988, %988 : vector<16x32xf32>
    %cst_136 = arith.constant dense<0.000000e+00> : vector<16xf32>
    %992 = vector.multi_reduction <add>, %991, %cst_136 [1] : vector<16x32xf32> to vector<16xf32>
    %993 = vector.shape_cast %992 : vector<16xf32> to vector<16x1xf32>
    %cst_137 = arith.constant 3.200000e+01 : f32
    %994 = vector.broadcast %cst_137 : f32 to vector<16x1xf32>
    %995 = arith.divf %993, %994 : vector<16x1xf32>
    %cst_138 = arith.constant 1.1920929E-7 : f32
    %996 = vector.broadcast %cst_138 : f32 to vector<16x1xf32>
    %997 = arith.addf %995, %996 : vector<16x1xf32>
    %998 = math.rsqrt %997 : vector<16x1xf32>
    %999 = vector.broadcast %998 : vector<16x1xf32> to vector<16x32xf32>
    %1000 = arith.mulf %990, %999 : vector<16x32xf32>
    %c0_139 = arith.constant 0 : index
    %c0_140 = arith.constant 0 : index
    %1001 = vector.load %arg7[%c0_139, %c0_140] : memref<32x128xbf16, #tpu.memory_space<vmem>>, vector<32x128xbf16>
    %1002 = arith.truncf %1000 : vector<16x32xf32> to vector<16x32xbf16>
    %cst_141 = arith.constant dense<0.000000e+00> : vector<16x128xf32>
    %1003 = tpu.matmul %1002, %1001, %cst_141 {dimension_numbers = #tpu.dot_dimension_numbers<[1], [0], [0], [1], [0, 0, 1, 1], [], []>} : vector<16x32xbf16>, vector<32x128xbf16>, vector<16x128xf32> -> vector<16x128xf32>
    %cst_142 = arith.constant 0.000000e+00 : f32
    %1004 = vector.broadcast %cst_142 : f32 to vector<16x128xf32>
    %1005 = arith.maximumf %1003, %1004 : vector<16x128xf32>
    %1006 = arith.mulf %1005, %1005 : vector<16x128xf32>
    %c0_143 = arith.constant 0 : index
    %c0_144 = arith.constant 0 : index
    %1007 = vector.load %arg8[%c0_143, %c0_144] : memref<128x32xbf16, #tpu.memory_space<vmem>>, vector<128x32xbf16>
    %1008 = arith.truncf %1006 : vector<16x128xf32> to vector<16x128xbf16>
    %cst_145 = arith.constant dense<0.000000e+00> : vector<16x32xf32>
    %1009 = tpu.matmul %1008, %1007, %cst_145 {dimension_numbers = #tpu.dot_dimension_numbers<[1], [0], [0], [1], [0, 0, 1, 1], [], []>} : vector<16x128xbf16>, vector<128x32xbf16>, vector<16x32xf32> -> vector<16x32xf32>
    %1010 = arith.addf %988, %1009 : vector<16x32xf32>
    %c0_146 = arith.constant 0 : index
    %c0_147 = arith.constant 0 : index
    %1011 = vector.load %arg9[%c0_146, %c0_147] : memref<16x32xf32, #tpu.memory_space<vmem>>, vector<16x32xf32>
    tpu.vector_store %arg9[%c0_146, %c0_147], %1010 {strides = array<i32>} : memref<16x32xf32, #tpu.memory_space<vmem>>, vector<16x32xf32>,
    return
  }
  func.func @transform_0(%arg0: i32) -> (i32, i32) {
    %c0_i32 = arith.constant 0 : i32
    %c0_i32_0 = arith.constant 0 : i32
    return %arg0, %c0_i32 : i32, i32
  }
  func.func @transform_1(%arg0: i32) -> (i32, i32) {
    %c0_i32 = arith.constant 0 : i32
    %c0_i32_0 = arith.constant 0 : i32
    %c0_i32_1 = arith.constant 0 : i32
    return %c0_i32, %c0_i32_0 : i32, i32
  }
  func.func @transform_2(%arg0: i32) -> (i32, i32) {
    %c0_i32 = arith.constant 0 : i32
    %c0_i32_0 = arith.constant 0 : i32
    %c0_i32_1 = arith.constant 0 : i32
    return %c0_i32, %c0_i32_0 : i32, i32
  }
  func.func @transform_3(%arg0: i32) -> (i32, i32) {
    %c0_i32 = arith.constant 0 : i32
    %c0_i32_0 = arith.constant 0 : i32
    %c0_i32_1 = arith.constant 0 : i32
    return %c0_i32, %c0_i32_0 : i32, i32
  }
  func.func @transform_4(%arg0: i32) -> (i32, i32) {
    %c0_i32 = arith.constant 0 : i32
    %c0_i32_0 = arith.constant 0 : i32
    %c0_i32_1 = arith.constant 0 : i32
    return %c0_i32, %c0_i32_0 : i32, i32
  }
  func.func @transform_5(%arg0: i32) -> (i32, i32) {
    %c0_i32 = arith.constant 0 : i32
    %c0_i32_0 = arith.constant 0 : i32
    %c0_i32_1 = arith.constant 0 : i32
    return %c0_i32, %c0_i32_0 : i32, i32
  }
  func.func @transform_6(%arg0: i32) -> (i32, i32) {
    %c0_i32 = arith.constant 0 : i32
    %c0_i32_0 = arith.constant 0 : i32
    %c0_i32_1 = arith.constant 0 : i32
    return %c0_i32, %c0_i32_0 : i32, i32
  }
  func.func @transform_7(%arg0: i32) -> (i32, i32) {
    %c0_i32 = arith.constant 0 : i32
    %c0_i32_0 = arith.constant 0 : i32
    %c0_i32_1 = arith.constant 0 : i32
    return %c0_i32, %c0_i32_0 : i32, i32
  }
  func.func @transform_8(%arg0: i32) -> (i32, i32) {
    %c0_i32 = arith.constant 0 : i32
    %c0_i32_0 = arith.constant 0 : i32
    return %arg0, %c0_i32 : i32, i32
  }
}

</mosaic_0001>

<llo_original>
// kernel: block_forward.1
$region0: #{block_forward.1}
  #allocation0 [shape = 'u32[]', space=smem, size = 0x4, offset = 0x4, fixed_abs, tag = 'smem constant byte address 0x4 - core index']
  #allocation1 [shape = 'u32[144,128]{1,0:T(1,128)}', space=vmem, size = 0x12000, scoped, tag = 'internal scratch']
  %s0 = inlined_call_operand.vmem [shape: f32[16,32], index: 0, kind: input, shape index: {}]
  %s1 = inlined_call_operand.vmem [shape: bf16[32,132], index: 1, kind: input, shape index: {}]
  %s2 = inlined_call_operand.vmem [shape: f32[4,96], index: 2, kind: input, shape index: {}]
  %s3 = inlined_call_operand.vmem [shape: f32[1,2], index: 3, kind: input, shape index: {}]
  %s4 = inlined_call_operand.vmem [shape: f32[1,2], index: 4, kind: input, shape index: {}]
  %s5 = inlined_call_operand.vmem [shape: bf16[32,32], index: 5, kind: input, shape index: {}]
  %s6 = inlined_call_operand.vmem [shape: bf16[32,128], index: 6, kind: input, shape index: {}]
  %s7 = inlined_call_operand.vmem [shape: bf16[128,32], index: 7, kind: input, shape index: {}]
  %s8 = inlined_call_operand.hbm [shape: f32[16,32], index: 8, kind: output, shape index: {}]
  %s9 = sld [smem:[#allocation0]]
  $region42: #{block_forward.1} parent=0
    _
  %s11 = ssub.s32 1, %s9
  %s12 = scalar_select 0, %s11, %s9
  $region1: #{block_forward.1} parent=0
    #allocation2 [shape = 'u8[8192]{0}', space=vmem, size = 0x2000, scoped, tag = 'output window, operand 0, single buffered']
    #allocation3 [shape = 's32[1]{0}', space=sflag, size = 0x4, scoped, tag = 'scoped memory for block_forward.1']
    %13 = vsyncpa [#allocation3], 0
    // Predicated region
    $region2: #{block_forward.1} parent=1 // pred_check
      _
    $region3: #{block_forward.1} parent=1 // pred_check_branch
      %15 = sbr.rel (0) target = $region5
    $region4: #{block_forward.1} parent=1 // pred_region
      _
    $region5: #{block_forward.1} parent=1 // pred_fallthru
      _
    // Predicated region
    $region6: #{block_forward.1} parent=1 // pred_check
      _
    $region7: #{block_forward.1} parent=1 // pred_check_branch
      %17 = sbr.rel (0) target = $region9
    $region8: #{block_forward.1} parent=1 // pred_region
      _
    $region9: #{block_forward.1} parent=1 // pred_fallthru
      _
    // Predicated region
    $region10: #{block_forward.1} parent=1 // pred_check
      _
    $region11: #{block_forward.1} parent=1 // pred_check_branch
      %19 = sbr.rel (0) target = $region13
    $region12: #{block_forward.1} parent=1 // pred_region
      _
    $region13: #{block_forward.1} parent=1 // pred_fallthru
      _
    // Predicated region
    $region14: #{block_forward.1} parent=1 // pred_check
      _
    $region15: #{block_forward.1} parent=1 // pred_check_branch
      %21 = sbr.rel (0) target = $region17
    $region16: #{block_forward.1} parent=1 // pred_region
      _
    $region17: #{block_forward.1} parent=1 // pred_fallthru
      _
    // Predicated region
    $region18: #{block_forward.1} parent=1 // pred_check
      _
    $region19: #{block_forward.1} parent=1 // pred_check_branch
      %23 = sbr.rel (0) target = $region21
    $region20: #{block_forward.1} parent=1 // pred_region
      _
    $region21: #{block_forward.1} parent=1 // pred_fallthru
      _
    // Predicated region
    $region22: #{block_forward.1} parent=1 // pred_check
      _
    $region23: #{block_forward.1} parent=1 // pred_check_branch
      %25 = sbr.rel (0) target = $region25
    $region24: #{block_forward.1} parent=1 // pred_region
      _
    $region25: #{block_forward.1} parent=1 // pred_fallthru
      _
    // Predicated region
    $region26: #{block_forward.1} parent=1 // pred_check
      _
    $region27: #{block_forward.1} parent=1 // pred_check_branch
      %27 = sbr.rel (0) target = $region29
    $region28: #{block_forward.1} parent=1 // pred_region
      _
    $region29: #{block_forward.1} parent=1 // pred_fallthru
      _
    // Predicated region
    $region30: #{block_forward.1} parent=1 // pred_check
      _
    $region31: #{block_forward.1} parent=1 // pred_check_branch
      %29 = sbr.rel (0) target = $region33
    $region32: #{block_forward.1} parent=1 // pred_region
      _
    $region33: #{block_forward.1} parent=1 // pred_fallthru
      _
    %v31 = vld [vmem:[%s0] sm:$0xff]
    %v32 = vld [vmem:[%s0 + $0x8] sm:$0xff]
    %v33 = vmul.f32 %v31, 0.70710677
    %v34 = vmul.f32 %v32, 0.70710677
    %v35 = vmul.f32 %v31, %v31
    %v36 = vmul.f32 %v32, %v32
    %vm37 = vcmask 261120
    %v38 = vsel %vm37, %v35, 0.0
    %39 = vadd.xlane.f32.xlu0 %v38
    %v40 = vpop.xlane.xlu0 %39
    %v41 = vsel %vm37, %v36, 0.0
    %42 = vadd.xlane.f32.xlu0 %v41
    %v43 = vpop.xlane.xlu0 %42
    %v44 = vrcp.pop 32.0
    %v45 = vmul.f32 %v40, %v44
    %v46 = vmul.f32 %v43, %v44
    %v47 = vadd.f32 %v45, 1.1920929e-07
    %v48 = vadd.f32 %v46, 1.1920929e-07
    %v49 = vrsqrt.pop %v47
    %v50 = vrsqrt.pop %v48
    %v51 = vmul.f32 %v33, %v49
    %v52 = vmul.f32 %v34, %v50
    %v53 = vld [vmem:[%s1] sm:$0xff]
    %v54 = vld [vmem:[%s1 + $0x8] sm:$0xff]
    %v55 = vld [vmem:[%s1 + $0x10] sm:$0xff]
    %v56 = vld [vmem:[%s1 + $0x18] sm:$0xff]
    %v57 = vpack.c.bf16 %v52, %v51
    %v62 = vunpack.c.l.b16 %v53
    %v63 = vunpack.c.h.b16 %v53
    %v64 = vunpack.c.l.b16 %v54
    %v65 = vunpack.c.h.b16 %v54
    %v66 = vunpack.c.l.b16 %v55
    %v67 = vunpack.c.h.b16 %v55
    %v68 = vunpack.c.l.b16 %v56
    %v69 = vunpack.c.h.b16 %v56
    %v70 = vpack.c.b16 %v64, %v62
    %v71 = vpack.c.b16 %v65, %v63
    %v72 = vpack.c.b16 %v68, %v66
    %v73 = vpack.c.b16 %v69, %v67
    %v79 = vsel %vm37, %v57, 0
    %81 = vmatprep.subr.bf16.mxu0 0
    %82 = vmatpush1.bf16.msra.mxu0 0
    %83 = vmatprep.subr.bf16.mxu0 0
    %84 = vmatpush1.bf16.msra.mxu0 0
    %85 = vmatprep.subr.bf16.mxu0 0
    %86 = vmatpush1.bf16.msra.mxu0 0
    %87 = vmatprep.subr.bf16.mxu0 0
    %88 = vmatpush1.bf16.msra.mxu0 0
    %89 = vmatprep.subr.bf16.mxu0 0
    %90 = vmatpush1.bf16.msra.mxu0 0
    %91 = vmatprep.subr.bf16.mxu0 0
    %92 = vmatpush1.bf16.msra.mxu0 0
    %93 = vmatprep.subr.bf16.mxu0 %v73
    %94 = vmatpush1.bf16.msra.mxu0 %v72
    %95 = vmatprep.subr.bf16.mxu0 %v71
    %96 = vmatpush1.bf16.msra.mxu0 %v70
    %97 = vmatprep.subr.bf16.mxu0 0
    %98 = vmatpush2.bf16.msra.mxu0 0
    %99 = vmatprep.subr.bf16.mxu0 0
    %100 = vmatpush2.bf16.msra.mxu0 0
    %101 = vmatprep.subr.bf16.mxu0 0
    %102 = vmatpush2.bf16.msra.mxu0 0
    %103 = vmatprep.subr.bf16.mxu0 0
    %104 = vmatpush2.bf16.msra.mxu0 0
    %105 = vmatprep.subr.bf16.mxu0 0
    %106 = vmatpush2.bf16.msra.mxu0 0
    %107 = vmatprep.subr.bf16.mxu0 0
    %108 = vmatpush2.bf16.msra.mxu0 0
    %109 = vmatprep.subr.bf16.mxu0 0
    %110 = vmatpush2.bf16.msra.mxu0 0
    %111 = vmatprep.subr.bf16.mxu0 0
    %112 = vmatpush2.bf16.msra.mxu0 0
    %113 = vmatprep.mubr.bf16.mxu0 0
    %114 = vmatmul.mubr.bf16.gmra.mxu0 %v79
    %v115 = vpop.f32.mrf.mxu0
    %v116 = vadd.f32 0.0, %v115
    %v117 = vpop.f32.mrf.mxu0
    %v118 = vadd.f32 0.0, %v117
    %v119 = vpop.f32.mrf.mxu0
    %v120 = vadd.f32 0.0, %v119
    %v121 = vpop.f32.mrf.mxu0
    %v122 = vadd.f32 0.0, %v121
    %123 = vdwg.mxu0
    %v124 = vsub.f32 0.0, %v118
    %v125 = vsub.f32 0.0, %v122
    %v126 = vmul.f32 %v124, 1.442695
    %v127 = vpow.pop %v126
    %v128 = vmul.f32 %v125, 1.442695
    %v129 = vpow.pop %v128
    %v130 = vadd.f32 %v127, 1.0
    %v131 = vadd.f32 %v129, 1.0
    %v132 = vrcp.pop %v130
    %v133 = vmul.f32 1.0, %v132
    %v134 = vrcp.pop %v131
    %v135 = vmul.f32 1.0, %v134
    %v136 = vld [vmem:[%s4] sm:$0x1]
    %v138 = vlaneseq
    %v139 = vshrl.u32 %v138, 7
    %v140 = vsub.s32 0, %v139
    %v141 = vrot.slane %v136, %v140
    %142 = vrot.lane.b32.xlu0 %v141, 2
    %v143 = vpop.permute.xlu0 %142
    %v145 = vadd.f32 %v118, %v143
    %v146 = vadd.f32 %v122, %v143
    %v147 = vld [vmem:[%s3] sm:$0x1]
    %v148 = vmul.f32 %v147, 1.442695
    %v149 = vpow.pop %v148
    %v150 = vsub.f32 0.0, %v149
    %v151 = vmax.f32 %v145, 0.0
    %v152 = vmax.f32 %v146, 0.0
    %v153 = vand.u32 2147483647, %v145
    %v154 = vand.u32 2147483647, %v146
    %v155 = vsub.f32 0.0, %v153
    %v156 = vsub.f32 0.0, %v154
    %v157 = vmul.f32 %v155, 1.442695
    %v158 = vpow.pop %v157
    %v159 = vmul.f32 %v156, 1.442695
    %v160 = vpow.pop %v159
    %v161 = vadd.f32 %v158, 1.0
    %v162 = vadd.f32 %v160, 1.0
    %v163 = vlog2.pop %v161
    %v164 = vmul.f32 %v163, 0.6931472
    %v165 = vlog2.pop %v162
    %v166 = vmul.f32 %v165, 0.6931472
    %v167 = vadd.f32 %v151, %v164
    %v168 = vadd.f32 %v152, %v166
    %v170 = vlaneseq
    %v171 = vshrl.u32 %v170, 7
    %v172 = vsub.s32 0, %v171
    %v173 = vrot.slane %v150, %v172
    %177 = vrot.lane.b32.xlu0 %v167, 126
    %v178 = vpop.permute.xlu0 %177
    %179 = vrot.lane.b32.xlu0 %v168, 126
    %v180 = vpop.permute.xlu0 %179
    %v183 = vmul.f32 %v173, %v178
    %v184 = vmul.f32 %v173, %v180
    %v185 = vmul.f32 %v183, 1.442695
    %v186 = vpow.pop %v185
    %v187 = vmul.f32 %v184, 1.442695
    %v188 = vpow.pop %v187
    %v189 = vld [vmem:[%s2] sm:$0xf]
    %v190 = vlaneseq
    %v191 = vshrl.u32 %v190, 7
    %vm192 = vcmp.ge.s32.totalorder %v191, 1
    %v193 = vsel %vm192, 1, 0
    %v194 = vcvt.s32.f32 %v193
    %vm195 = vcmp.ge.s32.totalorder %v191, 2
    %v196 = vsel %vm195, 1, 0
    %v197 = vcvt.s32.f32 %v196
    %vm198 = vcmp.ge.s32.totalorder %v191, 3
    %v199 = vsel %vm198, 1, 0
    %v200 = vcvt.s32.f32 %v199
    %v201 = vlaneseq
    %v202 = vshrl.u32 %v201, 7
    %v203 = vsub.s32 3, %v202
    %v204 = vrot.slane %v189, %v203
    %v205 = vmul.f32 %v116, %v204
    %v206 = vrot.slane %v116, 5
    %v207 = vmul.f32 %v206, %v200
    %v208 = vlaneseq
    %v209 = vshrl.u32 %v208, 7
    %v210 = vsub.s32 0, %v209
    %v211 = vrot.slane %v189, %v210
    %v212 = vmul.f32 %v207, %v211
    %v213 = vadd.f32 %v205, %v212
    %v214 = vrot.slane %v116, 6
    %v215 = vmul.f32 %v214, %v197
    %v216 = vlaneseq
    %v217 = vshrl.u32 %v216, 7
    %v218 = vsub.s32 1, %v217
    %v219 = vrot.slane %v189, %v218
    %v220 = vmul.f32 %v215, %v219
    %v221 = vadd.f32 %v213, %v220
    %v222 = vrot.slane %v116, 7
    %v223 = vmul.f32 %v222, %v194
    %v224 = vlaneseq
    %v225 = vshrl.u32 %v224, 7
    %v226 = vsub.s32 2, %v225
    %v227 = vrot.slane %v189, %v226
    %v228 = vmul.f32 %v223, %v227
    %v229 = vadd.f32 %v221, %v228
    %v230 = vsub.f32 0.0, %v229
    %v231 = vmul.f32 %v230, 1.442695
    %v232 = vpow.pop %v231
    %v233 = vadd.f32 %v232, 1.0
    %v234 = vrcp.pop %v233
    %v235 = vmul.f32 1.0, %v234
    %v236 = vmul.f32 %v229, %v235
    %v237 = vmul.f32 %v236, %v236
    %vm238 = vcmask 130048
    %v239 = vsel %vm238, %v237, 0.0
    %240 = vadd.xlane.f32.xlu0 %v239
    %v241 = vpop.xlane.xlu0 %240
    %v242 = vadd.f32 %v241, 1e-06
    %v243 = vrsqrt.pop %v242
    %v244 = vmul.f32 %v236, %v243
    %v245 = vmul.f32 %v244, 0.25
    %247 = vrot.lane.b32.xlu0 %v237, 96
    %v248 = vpop.permute.xlu0 %247
    %v250 = vsel %vm238, %v248, 0.0
    %251 = vadd.xlane.f32.xlu0 %v250
    %v252 = vpop.xlane.xlu0 %251
    %v253 = vadd.f32 %v252, 1e-06
    %v254 = vrsqrt.pop %v253
    %v255 = vmul.f32 %v236, %v254
    %256 = vxpose.xlu0.b32.start [1/16] %v245, 128
    %257 = vxpose.xlu0.b32.cont [2/16] 0.0, 128
    %258 = vxpose.xlu0.b32.cont [3/16] 0.0, 128
    %259 = vxpose.xlu0.b32.cont [4/16] 0.0, 128
    %260 = vxpose.xlu0.b32.cont [5/16] 0.0, 128
    %261 = vxpose.xlu0.b32.cont [6/16] 0.0, 128
    %262 = vxpose.xlu0.b32.cont [7/16] 0.0, 128
    %263 = vxpose.xlu0.b32.cont [8/16] 0.0, 128
    %264 = vxpose.xlu0.b32.cont [9/16] 0.0, 128
    %265 = vxpose.xlu0.b32.cont [10/16] 0.0, 128
    %266 = vxpose.xlu0.b32.cont [11/16] 0.0, 128
    %267 = vxpose.xlu0.b32.cont [12/16] 0.0, 128
    %268 = vxpose.xlu0.b32.cont [13/16] 0.0, 128
    %269 = vxpose.xlu0.b32.cont [14/16] 0.0, 128
    %270 = vxpose.xlu0.b32.cont [15/16] 0.0, 128
    %271 = vxpose.xlu0.b32.end [16/16] 0.0, 128
    %v272 = vpop.trf.xlu0
    %v273 = vpop.trf.xlu0
    %v274 = vpop.trf.xlu0
    %v275 = vpop.trf.xlu0
    %v276 = vpop.trf.xlu0
    %v277 = vpop.trf.xlu0
    %v278 = vpop.trf.xlu0
    %v279 = vpop.trf.xlu0
    %v280 = vpop.trf.xlu0
    %v281 = vpop.trf.xlu0
    %v282 = vpop.trf.xlu0
    %v283 = vpop.trf.xlu0
    %v284 = vpop.trf.xlu0
    %v285 = vpop.trf.xlu0
    %v286 = vpop.trf.xlu0
    %v287 = vpop.trf.xlu0
    %289 = vrot.lane.b32.xlu0 %v255, 96
    %v290 = vpop.permute.xlu0 %289
    %292 = vxpose.xlu0.b32.start [1/16] %v290, 128
    %293 = vxpose.xlu0.b32.cont [2/16] 0.0, 128
    %294 = vxpose.xlu0.b32.cont [3/16] 0.0, 128
    %295 = vxpose.xlu0.b32.cont [4/16] 0.0, 128
    %296 = vxpose.xlu0.b32.cont [5/16] 0.0, 128
    %297 = vxpose.xlu0.b32.cont [6/16] 0.0, 128
    %298 = vxpose.xlu0.b32.cont [7/16] 0.0, 128
    %299 = vxpose.xlu0.b32.cont [8/16] 0.0, 128
    %300 = vxpose.xlu0.b32.cont [9/16] 0.0, 128
    %301 = vxpose.xlu0.b32.cont [10/16] 0.0, 128
    %302 = vxpose.xlu0.b32.cont [11/16] 0.0, 128
    %303 = vxpose.xlu0.b32.cont [12/16] 0.0, 128
    %304 = vxpose.xlu0.b32.cont [13/16] 0.0, 128
    %305 = vxpose.xlu0.b32.cont [14/16] 0.0, 128
    %306 = vxpose.xlu0.b32.cont [15/16] 0.0, 128
    %307 = vxpose.xlu0.b32.end [16/16] 0.0, 128
    %v308 = vpop.trf.xlu0
    %v309 = vpop.trf.xlu0
    %v310 = vpop.trf.xlu0
    %v311 = vpop.trf.xlu0
    %v312 = vpop.trf.xlu0
    %v313 = vpop.trf.xlu0
    %v314 = vpop.trf.xlu0
    %v315 = vpop.trf.xlu0
    %v316 = vpop.trf.xlu0
    %v317 = vpop.trf.xlu0
    %v318 = vpop.trf.xlu0
    %v319 = vpop.trf.xlu0
    %v320 = vpop.trf.xlu0
    %v321 = vpop.trf.xlu0
    %v322 = vpop.trf.xlu0
    %v323 = vpop.trf.xlu0
    %s325 = vtos %v186
    %v326 = vstv %s325
    %v328 = vmul.f32 %v326, 0.0
    %330 = vset.pattern.permute.xlu0 0
    %331 = vperm.xlu0 %330, %v308
    %v332 = vpop.permute.xlu0 %331
    %335 = vset.pattern.permute.xlu0 0
    %336 = vperm.xlu0 %335, %v309
    %v337 = vpop.permute.xlu0 %336
    %v339 = vmul.f32 %v332, %v328
    %v340 = vmul.f32 %v337, %v328
    %v341 = vadd.f32 %v339, %v340
    %v342 = vrot.slane %v341, 4
    %v343 = vadd.f32 %v341, %v342
    %v344 = vrot.slane %v343, 2
    %v345 = vadd.f32 %v343, %v344
    %v346 = vrot.slane %v345, 1
    %v347 = vadd.f32 %v345, %v346
    %v348 = vsub.f32 %v236, %v347
    %350 = vset.pattern.permute.xlu0 0
    %351 = vperm.xlu0 %350, %v133
    %v352 = vpop.permute.xlu0 %351
    %v354 = vmul.f32 %v348, %v352
    %v355 = vlaneseq
    %v356 = vshrl.u32 %v355, 7
    %v357 = vsub.s32 0, %v356
    %v358 = vrot.slane %v354, %v357
    %v359 = vmul.f32 %v332, %v358
    %v360 = vmul.f32 %v337, %v358
    %v361 = vadd.f32 %v328, %v359
    %v362 = vadd.f32 %v328, %v360
    %364 = vset.pattern.permute.xlu0 0
    %365 = vperm.xlu0 %364, %v272
    %v366 = vpop.permute.xlu0 %365
    %369 = vset.pattern.permute.xlu0 0
    %370 = vperm.xlu0 %369, %v273
    %v371 = vpop.permute.xlu0 %370
    %v373 = vmul.f32 %v366, %v361
    %v374 = vmul.f32 %v371, %v362
    %vm375 = vcmask 654848
    %v376 = vsel %vm375, %v373, 0.0
    %v377 = vsel %vm375, %v374, 0.0
    %v378 = vadd.f32 %v376, %v377
    %v379 = vrot.slane %v378, 4
    %v380 = vadd.f32 %v378, %v379
    %v381 = vrot.slane %v380, 2
    %v382 = vadd.f32 %v380, %v381
    %v383 = vrot.slane %v382, 1
    %v384 = vadd.f32 %v382, %v383
    %v385 = vrot.slane %v186, 1
    %s386 = vtos %v385
    %v387 = vstv %s386
    %v389 = vmul.f32 %v361, %v387
    %v390 = vmul.f32 %v362, %v387
    %391 = vset.pattern.permute.xlu0 1
    %392 = vperm.xlu0 %391, %v308
    %v393 = vpop.permute.xlu0 %392
    %395 = vset.pattern.permute.xlu0 1
    %396 = vperm.xlu0 %395, %v309
    %v397 = vpop.permute.xlu0 %396
    %v399 = vmul.f32 %v393, %v389
    %v400 = vmul.f32 %v397, %v390
    %v401 = vsel %vm375, %v399, 0.0
    %v402 = vsel %vm375, %v400, 0.0
    %v403 = vadd.f32 %v401, %v402
    %v404 = vrot.slane %v403, 4
    %v405 = vadd.f32 %v403, %v404
    %v406 = vrot.slane %v405, 2
    %v407 = vadd.f32 %v405, %v406
    %v408 = vrot.slane %v407, 1
    %v409 = vadd.f32 %v407, %v408
    %v410 = vsub.f32 %v236, %v409
    %v411 = vmul.f32 %v410, %v352
    %v412 = vlaneseq
    %v413 = vshrl.u32 %v412, 7
    %v414 = vsub.s32 1, %v413
    %v415 = vrot.slane %v411, %v414
    %v416 = vmul.f32 %v393, %v415
    %v417 = vmul.f32 %v397, %v415
    %v418 = vadd.f32 %v389, %v416
    %v419 = vadd.f32 %v390, %v417
    %420 = vset.pattern.permute.xlu0 1
    %421 = vperm.xlu0 %420, %v272
    %v422 = vpop.permute.xlu0 %421
    %424 = vset.pattern.permute.xlu0 1
    %425 = vperm.xlu0 %424, %v273
    %v426 = vpop.permute.xlu0 %425
    %v428 = vmul.f32 %v422, %v418
    %v429 = vmul.f32 %v426, %v419
    %v430 = vsel %vm375, %v428, 0.0
    %v431 = vsel %vm375, %v429, 0.0
    %v432 = vadd.f32 %v430, %v431
    %v433 = vrot.slane %v432, 4
    %v434 = vadd.f32 %v432, %v433
    %v435 = vrot.slane %v434, 2
    %v436 = vadd.f32 %v434, %v435
    %v437 = vrot.slane %v436, 1
    %v438 = vadd.f32 %v436, %v437
    %v439 = vrot.slane %v186, 2
    %s440 = vtos %v439
    %v441 = vstv %s440
    %v443 = vmul.f32 %v418, %v441
    %v444 = vmul.f32 %v419, %v441
    %445 = vset.pattern.permute.xlu0 2
    %446 = vperm.xlu0 %445, %v308
    %v447 = vpop.permute.xlu0 %446
    %449 = vset.pattern.permute.xlu0 2
    %450 = vperm.xlu0 %449, %v309
    %v451 = vpop.permute.xlu0 %450
    %v453 = vmul.f32 %v447, %v443
    %v454 = vmul.f32 %v451, %v444
    %v455 = vsel %vm375, %v453, 0.0
    %v456 = vsel %vm375, %v454, 0.0
    %v457 = vadd.f32 %v455, %v456
    %v458 = vrot.slane %v457, 4
    %v459 = vadd.f32 %v457, %v458
    %v460 = vrot.slane %v459, 2
    %v461 = vadd.f32 %v459, %v460
    %v462 = vrot.slane %v461, 1
    %v463 = vadd.f32 %v461, %v462
    %v464 = vsub.f32 %v236, %v463
    %v465 = vmul.f32 %v464, %v352
    %v466 = vlaneseq
    %v467 = vshrl.u32 %v466, 7
    %v468 = vsub.s32 2, %v467
    %v469 = vrot.slane %v465, %v468
    %v470 = vmul.f32 %v447, %v469
    %v471 = vmul.f32 %v451, %v469
    %v472 = vadd.f32 %v443, %v470
    %v473 = vadd.f32 %v444, %v471
    %474 = vset.pattern.permute.xlu0 2
    %475 = vperm.xlu0 %474, %v272
    %v476 = vpop.permute.xlu0 %475
    %478 = vset.pattern.permute.xlu0 2
    %479 = vperm.xlu0 %478, %v273
    %v480 = vpop.permute.xlu0 %479
    %v482 = vmul.f32 %v476, %v472
    %v483 = vmul.f32 %v480, %v473
    %v484 = vsel %vm375, %v482, 0.0
    %v485 = vsel %vm375, %v483, 0.0
    %v486 = vadd.f32 %v484, %v485
    %v487 = vrot.slane %v486, 4
    %v488 = vadd.f32 %v486, %v487
    %v489 = vrot.slane %v488, 2
    %v490 = vadd.f32 %v488, %v489
    %v491 = vrot.slane %v490, 1
    %v492 = vadd.f32 %v490, %v491
    %v493 = vrot.slane %v186, 3
    %s494 = vtos %v493
    %v495 = vstv %s494
    %v497 = vmul.f32 %v472, %v495
    %v498 = vmul.f32 %v473, %v495
    %499 = vset.pattern.permute.xlu0 3
    %500 = vperm.xlu0 %499, %v308
    %v501 = vpop.permute.xlu0 %500
    %503 = vset.pattern.permute.xlu0 3
    %504 = vperm.xlu0 %503, %v309
    %v505 = vpop.permute.xlu0 %504
    %v507 = vmul.f32 %v501, %v497
    %v508 = vmul.f32 %v505, %v498
    %v509 = vsel %vm375, %v507, 0.0
    %v510 = vsel %vm375, %v508, 0.0
    %v511 = vadd.f32 %v509, %v510
    %v512 = vrot.slane %v511, 4
    %v513 = vadd.f32 %v511, %v512
    %v514 = vrot.slane %v513, 2
    %v515 = vadd.f32 %v513, %v514
    %v516 = vrot.slane %v515, 1
    %v517 = vadd.f32 %v515, %v516
    %v518 = vsub.f32 %v236, %v517
    %v519 = vmul.f32 %v518, %v352
    %v520 = vlaneseq
    %v521 = vshrl.u32 %v520, 7
    %v522 = vsub.s32 3, %v521
    %v523 = vrot.slane %v519, %v522
    %v524 = vmul.f32 %v501, %v523
    %v525 = vmul.f32 %v505, %v523
    %v526 = vadd.f32 %v497, %v524
    %v527 = vadd.f32 %v498, %v525
    %528 = vset.pattern.permute.xlu0 3
    %529 = vperm.xlu0 %528, %v272
    %v530 = vpop.permute.xlu0 %529
    %532 = vset.pattern.permute.xlu0 3
    %533 = vperm.xlu0 %532, %v273
    %v534 = vpop.permute.xlu0 %533
    %v536 = vmul.f32 %v530, %v526
    %v537 = vmul.f32 %v534, %v527
    %v538 = vsel %vm375, %v536, 0.0
    %v539 = vsel %vm375, %v537, 0.0
    %v540 = vadd.f32 %v538, %v539
    %v541 = vrot.slane %v540, 4
    %v542 = vadd.f32 %v540, %v541
    %v543 = vrot.slane %v542, 2
    %v544 = vadd.f32 %v542, %v543
    %v545 = vrot.slane %v544, 1
    %v546 = vadd.f32 %v544, %v545
    %v547 = vrot.slane %v186, 4
    %s548 = vtos %v547
    %v549 = vstv %s548
    %v551 = vmul.f32 %v526, %v549
    %v552 = vmul.f32 %v527, %v549
    %553 = vset.pattern.permute.xlu0 4
    %554 = vperm.xlu0 %553, %v308
    %v555 = vpop.permute.xlu0 %554
    %557 = vset.pattern.permute.xlu0 4
    %558 = vperm.xlu0 %557, %v309
    %v559 = vpop.permute.xlu0 %558
    %v561 = vmul.f32 %v555, %v551
    %v562 = vmul.f32 %v559, %v552
    %v563 = vsel %vm375, %v561, 0.0
    %v564 = vsel %vm375, %v562, 0.0
    %v565 = vadd.f32 %v563, %v564
    %v566 = vrot.slane %v565, 4
    %v567 = vadd.f32 %v565, %v566
    %v568 = vrot.slane %v567, 2
    %v569 = vadd.f32 %v567, %v568
    %v570 = vrot.slane %v569, 1
    %v571 = vadd.f32 %v569, %v570
    %v572 = vsub.f32 %v236, %v571
    %v573 = vmul.f32 %v572, %v352
    %v574 = vlaneseq
    %v575 = vshrl.u32 %v574, 7
    %v576 = vsub.s32 4, %v575
    %v577 = vrot.slane %v573, %v576
    %v578 = vmul.f32 %v555, %v577
    %v579 = vmul.f32 %v559, %v577
    %v580 = vadd.f32 %v551, %v578
    %v581 = vadd.f32 %v552, %v579
    %582 = vset.pattern.permute.xlu0 4
    %583 = vperm.xlu0 %582, %v272
    %v584 = vpop.permute.xlu0 %583
    %586 = vset.pattern.permute.xlu0 4
    %587 = vperm.xlu0 %586, %v273
    %v588 = vpop.permute.xlu0 %587
    %v590 = vmul.f32 %v584, %v580
    %v591 = vmul.f32 %v588, %v581
    %v592 = vsel %vm375, %v590, 0.0
    %v593 = vsel %vm375, %v591, 0.0
    %v594 = vadd.f32 %v592, %v593
    %v595 = vrot.slane %v594, 4
    %v596 = vadd.f32 %v594, %v595
    %v597 = vrot.slane %v596, 2
    %v598 = vadd.f32 %v596, %v597
    %v599 = vrot.slane %v598, 1
    %v600 = vadd.f32 %v598, %v599
    %v601 = vrot.slane %v186, 5
    %s602 = vtos %v601
    %v603 = vstv %s602
    %v605 = vmul.f32 %v580, %v603
    %v606 = vmul.f32 %v581, %v603
    %607 = vset.pattern.permute.xlu0 5
    %608 = vperm.xlu0 %607, %v308
    %v609 = vpop.permute.xlu0 %608
    %611 = vset.pattern.permute.xlu0 5
    %612 = vperm.xlu0 %611, %v309
    %v613 = vpop.permute.xlu0 %612
    %v615 = vmul.f32 %v609, %v605
    %v616 = vmul.f32 %v613, %v606
    %v617 = vsel %vm375, %v615, 0.0
    %v618 = vsel %vm375, %v616, 0.0
    %v619 = vadd.f32 %v617, %v618
    %v620 = vrot.slane %v619, 4
    %v621 = vadd.f32 %v619, %v620
    %v622 = vrot.slane %v621, 2
    %v623 = vadd.f32 %v621, %v622
    %v624 = vrot.slane %v623, 1
    %v625 = vadd.f32 %v623, %v624
    %v626 = vsub.f32 %v236, %v625
    %v627 = vmul.f32 %v626, %v352
    %v628 = vlaneseq
    %v629 = vshrl.u32 %v628, 7
    %v630 = vsub.s32 5, %v629
    %v631 = vrot.slane %v627, %v630
    %v632 = vmul.f32 %v609, %v631
    %v633 = vmul.f32 %v613, %v631
    %v634 = vadd.f32 %v605, %v632
    %v635 = vadd.f32 %v606, %v633
    %636 = vset.pattern.permute.xlu0 5
    %637 = vperm.xlu0 %636, %v272
    %v638 = vpop.permute.xlu0 %637
    %640 = vset.pattern.permute.xlu0 5
    %641 = vperm.xlu0 %640, %v273
    %v642 = vpop.permute.xlu0 %641
    %v644 = vmul.f32 %v638, %v634
    %v645 = vmul.f32 %v642, %v635
    %v646 = vsel %vm375, %v644, 0.0
    %v647 = vsel %vm375, %v645, 0.0
    %v648 = vadd.f32 %v646, %v647
    %v649 = vrot.slane %v648, 4
    %v650 = vadd.f32 %v648, %v649
    %v651 = vrot.slane %v650, 2
    %v652 = vadd.f32 %v650, %v651
    %v653 = vrot.slane %v652, 1
    %v654 = vadd.f32 %v652, %v653
    %v655 = vrot.slane %v186, 6
    %s656 = vtos %v655
    %v657 = vstv %s656
    %v659 = vmul.f32 %v634, %v657
    %v660 = vmul.f32 %v635, %v657
    %661 = vset.pattern.permute.xlu0 6
    %662 = vperm.xlu0 %661, %v308
    %v663 = vpop.permute.xlu0 %662
    %665 = vset.pattern.permute.xlu0 6
    %666 = vperm.xlu0 %665, %v309
    %v667 = vpop.permute.xlu0 %666
    %v669 = vmul.f32 %v663, %v659
    %v670 = vmul.f32 %v667, %v660
    %v671 = vsel %vm375, %v669, 0.0
    %v672 = vsel %vm375, %v670, 0.0
    %v673 = vadd.f32 %v671, %v672
    %v674 = vrot.slane %v673, 4
    %v675 = vadd.f32 %v673, %v674
    %v676 = vrot.slane %v675, 2
    %v677 = vadd.f32 %v675, %v676
    %v678 = vrot.slane %v677, 1
    %v679 = vadd.f32 %v677, %v678
    %v680 = vsub.f32 %v236, %v679
    %v681 = vmul.f32 %v680, %v352
    %v682 = vlaneseq
    %v683 = vshrl.u32 %v682, 7
    %v684 = vsub.s32 6, %v683
    %v685 = vrot.slane %v681, %v684
    %v686 = vmul.f32 %v663, %v685
    %v687 = vmul.f32 %v667, %v685
    %v688 = vadd.f32 %v659, %v686
    %v689 = vadd.f32 %v660, %v687
    %690 = vset.pattern.permute.xlu0 6
    %691 = vperm.xlu0 %690, %v272
    %v692 = vpop.permute.xlu0 %691
    %694 = vset.pattern.permute.xlu0 6
    %695 = vperm.xlu0 %694, %v273
    %v696 = vpop.permute.xlu0 %695
    %v698 = vmul.f32 %v692, %v688
    %v699 = vmul.f32 %v696, %v689
    %v700 = vsel %vm375, %v698, 0.0
    %v701 = vsel %vm375, %v699, 0.0
    %v702 = vadd.f32 %v700, %v701
    %v703 = vrot.slane %v702, 4
    %v704 = vadd.f32 %v702, %v703
    %v705 = vrot.slane %v704, 2
    %v706 = vadd.f32 %v704, %v705
    %v707 = vrot.slane %v706, 1
    %v708 = vadd.f32 %v706, %v707
    %v709 = vrot.slane %v186, 7
    %s710 = vtos %v709
    %v711 = vstv %s710
    %v713 = vmul.f32 %v688, %v711
    %v714 = vmul.f32 %v689, %v711
    %715 = vset.pattern.permute.xlu0 7
    %716 = vperm.xlu0 %715, %v308
    %v717 = vpop.permute.xlu0 %716
    %719 = vset.pattern.permute.xlu0 7
    %720 = vperm.xlu0 %719, %v309
    %v721 = vpop.permute.xlu0 %720
    %v723 = vmul.f32 %v717, %v713
    %v724 = vmul.f32 %v721, %v714
    %v725 = vsel %vm375, %v723, 0.0
    %v726 = vsel %vm375, %v724, 0.0
    %v727 = vadd.f32 %v725, %v726
    %v728 = vrot.slane %v727, 4
    %v729 = vadd.f32 %v727, %v728
    %v730 = vrot.slane %v729, 2
    %v731 = vadd.f32 %v729, %v730
    %v732 = vrot.slane %v731, 1
    %v733 = vadd.f32 %v731, %v732
    %v734 = vsub.f32 %v236, %v733
    %v735 = vmul.f32 %v734, %v352
    %v736 = vlaneseq
    %v737 = vshrl.u32 %v736, 7
    %v738 = vsub.s32 7, %v737
    %v739 = vrot.slane %v735, %v738
    %v740 = vmul.f32 %v717, %v739
    %v741 = vmul.f32 %v721, %v739
    %v742 = vadd.f32 %v713, %v740
    %v743 = vadd.f32 %v714, %v741
    %744 = vset.pattern.permute.xlu0 7
    %745 = vperm.xlu0 %744, %v272
    %v746 = vpop.permute.xlu0 %745
    %748 = vset.pattern.permute.xlu0 7
    %749 = vperm.xlu0 %748, %v273
    %v750 = vpop.permute.xlu0 %749
    %v752 = vmul.f32 %v746, %v742
    %v753 = vmul.f32 %v750, %v743
    %v754 = vsel %vm375, %v752, 0.0
    %v755 = vsel %vm375, %v753, 0.0
    %v756 = vadd.f32 %v754, %v755
    %v757 = vrot.slane %v756, 4
    %v758 = vadd.f32 %v756, %v757
    %v759 = vrot.slane %v758, 2
    %v760 = vadd.f32 %v758, %v759
    %v761 = vrot.slane %v760, 1
    %v762 = vadd.f32 %v760, %v761
    %vm763 = vcmask 1040384
    %v764 = vsel %vm763, %v384, %v438
    %vm765 = vcmask 1041408
    %v766 = vsel %vm765, %v764, %v492
    %vm767 = vcmask 1042432
    %v768 = vsel %vm767, %v766, %v546
    %vm769 = vcmask 1043456
    %v770 = vsel %vm769, %v768, %v600
    %vm771 = vcmask 1044480
    %v772 = vsel %vm771, %v770, %v654
    %vm773 = vcmask 1045504
    %v774 = vsel %vm773, %v772, %v708
    %vm775 = vcmask 1046528
    %v776 = vsel %vm775, %v774, %v762
    %777 = vrot.lane.b32.xlu0 %v237, 112
    %v778 = vpop.permute.xlu0 %777
    %v780 = vsel %vm238, %v778, 0.0
    %781 = vadd.xlane.f32.xlu0 %v780
    %v782 = vpop.xlane.xlu0 %781
    %v783 = vadd.f32 %v782, 1e-06
    %v784 = vrsqrt.pop %v783
    %v785 = vmul.f32 %v236, %v784
    %v786 = vmul.f32 %v785, 0.25
    %787 = vrot.lane.b32.xlu0 %v237, 80
    %v788 = vpop.permute.xlu0 %787
    %v790 = vsel %vm238, %v788, 0.0
    %791 = vadd.xlane.f32.xlu0 %v790
    %v792 = vpop.xlane.xlu0 %791
    %v793 = vadd.f32 %v792, 1e-06
    %v794 = vrsqrt.pop %v793
    %v795 = vmul.f32 %v236, %v794
    %797 = vrot.lane.b32.xlu0 %v786, 112
    %v798 = vpop.permute.xlu0 %797
    %800 = vxpose.xlu0.b32.start [1/16] %v798, 128
    %801 = vxpose.xlu0.b32.cont [2/16] 0.0, 128
    %802 = vxpose.xlu0.b32.cont [3/16] 0.0, 128
    %803 = vxpose.xlu0.b32.cont [4/16] 0.0, 128
    %804 = vxpose.xlu0.b32.cont [5/16] 0.0, 128
    %805 = vxpose.xlu0.b32.cont [6/16] 0.0, 128
    %806 = vxpose.xlu0.b32.cont [7/16] 0.0, 128
    %807 = vxpose.xlu0.b32.cont [8/16] 0.0, 128
    %808 = vxpose.xlu0.b32.cont [9/16] 0.0, 128
    %809 = vxpose.xlu0.b32.cont [10/16] 0.0, 128
    %810 = vxpose.xlu0.b32.cont [11/16] 0.0, 128
    %811 = vxpose.xlu0.b32.cont [12/16] 0.0, 128
    %812 = vxpose.xlu0.b32.cont [13/16] 0.0, 128
    %813 = vxpose.xlu0.b32.cont [14/16] 0.0, 128
    %814 = vxpose.xlu0.b32.cont [15/16] 0.0, 128
    %815 = vxpose.xlu0.b32.end [16/16] 0.0, 128
    %v816 = vpop.trf.xlu0
    %v817 = vpop.trf.xlu0
    %v818 = vpop.trf.xlu0
    %v819 = vpop.trf.xlu0
    %v820 = vpop.trf.xlu0
    %v821 = vpop.trf.xlu0
    %v822 = vpop.trf.xlu0
    %v823 = vpop.trf.xlu0
    %v824 = vpop.trf.xlu0
    %v825 = vpop.trf.xlu0
    %v826 = vpop.trf.xlu0
    %v827 = vpop.trf.xlu0
    %v828 = vpop.trf.xlu0
    %v829 = vpop.trf.xlu0
    %v830 = vpop.trf.xlu0
    %v831 = vpop.trf.xlu0
    %833 = vrot.lane.b32.xlu0 %v795, 80
    %v834 = vpop.permute.xlu0 %833
    %836 = vxpose.xlu0.b32.start [1/16] %v834, 128
    %837 = vxpose.xlu0.b32.cont [2/16] 0.0, 128
    %838 = vxpose.xlu0.b32.cont [3/16] 0.0, 128
    %839 = vxpose.xlu0.b32.cont [4/16] 0.0, 128
    %840 = vxpose.xlu0.b32.cont [5/16] 0.0, 128
    %841 = vxpose.xlu0.b32.cont [6/16] 0.0, 128
    %842 = vxpose.xlu0.b32.cont [7/16] 0.0, 128
    %843 = vxpose.xlu0.b32.cont [8/16] 0.0, 128
    %844 = vxpose.xlu0.b32.cont [9/16] 0.0, 128
    %845 = vxpose.xlu0.b32.cont [10/16] 0.0, 128
    %846 = vxpose.xlu0.b32.cont [11/16] 0.0, 128
    %847 = vxpose.xlu0.b32.cont [12/16] 0.0, 128
    %848 = vxpose.xlu0.b32.cont [13/16] 0.0, 128
    %849 = vxpose.xlu0.b32.cont [14/16] 0.0, 128
    %850 = vxpose.xlu0.b32.cont [15/16] 0.0, 128
    %851 = vxpose.xlu0.b32.end [16/16] 0.0, 128
    %v852 = vpop.trf.xlu0
    %v853 = vpop.trf.xlu0
    %v854 = vpop.trf.xlu0
    %v855 = vpop.trf.xlu0
    %v856 = vpop.trf.xlu0
    %v857 = vpop.trf.xlu0
    %v858 = vpop.trf.xlu0
    %v859 = vpop.trf.xlu0
    %v860 = vpop.trf.xlu0
    %v861 = vpop.trf.xlu0
    %v862 = vpop.trf.xlu0
    %v863 = vpop.trf.xlu0
    %v864 = vpop.trf.xlu0
    %v865 = vpop.trf.xlu0
    %v866 = vpop.trf.xlu0
    %v867 = vpop.trf.xlu0
    %868 = vrot.lane.b32.xlu0 %v186, 127
    %v869 = vpop.permute.xlu0 %868
    %s870 = vtos %v869
    %v871 = vstv %s870
    %v873 = vmul.f32 %v871, 0.0
    %875 = vset.pattern.permute.xlu0 0
    %876 = vperm.xlu0 %875, %v852
    %v877 = vpop.permute.xlu0 %876
    %880 = vset.pattern.permute.xlu0 0
    %881 = vperm.xlu0 %880, %v853
    %v882 = vpop.permute.xlu0 %881
    %v884 = vmul.f32 %v877, %v873
    %v885 = vmul.f32 %v882, %v873
    %v886 = vadd.f32 %v884, %v885
    %v887 = vrot.slane %v886, 4
    %v888 = vadd.f32 %v886, %v887
    %v889 = vrot.slane %v888, 2
    %v890 = vadd.f32 %v888, %v889
    %v891 = vrot.slane %v890, 1
    %v892 = vadd.f32 %v890, %v891
    %v893 = vsub.f32 %v236, %v892
    %894 = vset.pattern.permute.xlu0 1
    %895 = vperm.xlu0 %894, %v133
    %v896 = vpop.permute.xlu0 %895
    %v898 = vmul.f32 %v893, %v896
    %v899 = vlaneseq
    %v900 = vshrl.u32 %v899, 7
    %v901 = vsub.s32 0, %v900
    %v902 = vrot.slane %v898, %v901
    %v903 = vmul.f32 %v877, %v902
    %v904 = vmul.f32 %v882, %v902
    %v905 = vadd.f32 %v873, %v903
    %v906 = vadd.f32 %v873, %v904
    %908 = vset.pattern.permute.xlu0 0
    %909 = vperm.xlu0 %908, %v816
    %v910 = vpop.permute.xlu0 %909
    %913 = vset.pattern.permute.xlu0 0
    %914 = vperm.xlu0 %913, %v817
    %v915 = vpop.permute.xlu0 %914
    %v917 = vmul.f32 %v910, %v905
    %v918 = vmul.f32 %v915, %v906
    %vm919 = vcmask 786048
    %v920 = vsel %vm919, %v917, 0.0
    %v921 = vsel %vm919, %v918, 0.0
    %v922 = vadd.f32 %v920, %v921
    %v923 = vrot.slane %v922, 4
    %v924 = vadd.f32 %v922, %v923
    %v925 = vrot.slane %v924, 2
    %v926 = vadd.f32 %v924, %v925
    %v927 = vrot.slane %v926, 1
    %v928 = vadd.f32 %v926, %v927
    %929 = vrot.lane.b32.xlu0 %v385, 127
    %v930 = vpop.permute.xlu0 %929
    %s931 = vtos %v930
    %v932 = vstv %s931
    %v934 = vmul.f32 %v905, %v932
    %v935 = vmul.f32 %v906, %v932
    %936 = vset.pattern.permute.xlu0 1
    %937 = vperm.xlu0 %936, %v852
    %v938 = vpop.permute.xlu0 %937
    %940 = vset.pattern.permute.xlu0 1
    %941 = vperm.xlu0 %940, %v853
    %v942 = vpop.permute.xlu0 %941
    %v944 = vmul.f32 %v938, %v934
    %v945 = vmul.f32 %v942, %v935
    %v946 = vsel %vm919, %v944, 0.0
    %v947 = vsel %vm919, %v945, 0.0
    %v948 = vadd.f32 %v946, %v947
    %v949 = vrot.slane %v948, 4
    %v950 = vadd.f32 %v948, %v949
    %v951 = vrot.slane %v950, 2
    %v952 = vadd.f32 %v950, %v951
    %v953 = vrot.slane %v952, 1
    %v954 = vadd.f32 %v952, %v953
    %v955 = vsub.f32 %v236, %v954
    %v956 = vmul.f32 %v955, %v896
    %v957 = vlaneseq
    %v958 = vshrl.u32 %v957, 7
    %v959 = vsub.s32 1, %v958
    %v960 = vrot.slane %v956, %v959
    %v961 = vmul.f32 %v938, %v960
    %v962 = vmul.f32 %v942, %v960
    %v963 = vadd.f32 %v934, %v961
    %v964 = vadd.f32 %v935, %v962
    %965 = vset.pattern.permute.xlu0 1
    %966 = vperm.xlu0 %965, %v816
    %v967 = vpop.permute.xlu0 %966
    %969 = vset.pattern.permute.xlu0 1
    %970 = vperm.xlu0 %969, %v817
    %v971 = vpop.permute.xlu0 %970
    %v973 = vmul.f32 %v967, %v963
    %v974 = vmul.f32 %v971, %v964
    %v975 = vsel %vm919, %v973, 0.0
    %v976 = vsel %vm919, %v974, 0.0
    %v977 = vadd.f32 %v975, %v976
    %v978 = vrot.slane %v977, 4
    %v979 = vadd.f32 %v977, %v978
    %v980 = vrot.slane %v979, 2
    %v981 = vadd.f32 %v979, %v980
    %v982 = vrot.slane %v981, 1
    %v983 = vadd.f32 %v981, %v982
    %984 = vrot.lane.b32.xlu0 %v439, 127
    %v985 = vpop.permute.xlu0 %984
    %s986 = vtos %v985
    %v987 = vstv %s986
    %v989 = vmul.f32 %v963, %v987
    %v990 = vmul.f32 %v964, %v987
    %991 = vset.pattern.permute.xlu0 2
    %992 = vperm.xlu0 %991, %v852
    %v993 = vpop.permute.xlu0 %992
    %995 = vset.pattern.permute.xlu0 2
    %996 = vperm.xlu0 %995, %v853
    %v997 = vpop.permute.xlu0 %996
    %v999 = vmul.f32 %v993, %v989
    %v1000 = vmul.f32 %v997, %v990
    %v1001 = vsel %vm919, %v999, 0.0
    %v1002 = vsel %vm919, %v1000, 0.0
    %v1003 = vadd.f32 %v1001, %v1002
    %v1004 = vrot.slane %v1003, 4
    %v1005 = vadd.f32 %v1003, %v1004
    %v1006 = vrot.slane %v1005, 2
    %v1007 = vadd.f32 %v1005, %v1006
    %v1008 = vrot.slane %v1007, 1
    %v1009 = vadd.f32 %v1007, %v1008
    %v1010 = vsub.f32 %v236, %v1009
    %v1011 = vmul.f32 %v1010, %v896
    %v1012 = vlaneseq
    %v1013 = vshrl.u32 %v1012, 7
    %v1014 = vsub.s32 2, %v1013
    %v1015 = vrot.slane %v1011, %v1014
    %v1016 = vmul.f32 %v993, %v1015
    %v1017 = vmul.f32 %v997, %v1015
    %v1018 = vadd.f32 %v989, %v1016
    %v1019 = vadd.f32 %v990, %v1017
    %1020 = vset.pattern.permute.xlu0 2
    %1021 = vperm.xlu0 %1020, %v816
    %v1022 = vpop.permute.xlu0 %1021
    %1024 = vset.pattern.permute.xlu0 2
    %1025 = vperm.xlu0 %1024, %v817
    %v1026 = vpop.permute.xlu0 %1025
    %v1028 = vmul.f32 %v1022, %v1018
    %v1029 = vmul.f32 %v1026, %v1019
    %v1030 = vsel %vm919, %v1028, 0.0
    %v1031 = vsel %vm919, %v1029, 0.0
    %v1032 = vadd.f32 %v1030, %v1031
    %v1033 = vrot.slane %v1032, 4
    %v1034 = vadd.f32 %v1032, %v1033
    %v1035 = vrot.slane %v1034, 2
    %v1036 = vadd.f32 %v1034, %v1035
    %v1037 = vrot.slane %v1036, 1
    %v1038 = vadd.f32 %v1036, %v1037
    %1039 = vrot.lane.b32.xlu0 %v493, 127
    %v1040 = vpop.permute.xlu0 %1039
    %s1041 = vtos %v1040
    %v1042 = vstv %s1041
    %v1044 = vmul.f32 %v1018, %v1042
    %v1045 = vmul.f32 %v1019, %v1042
    %1046 = vset.pattern.permute.xlu0 3
    %1047 = vperm.xlu0 %1046, %v852
    %v1048 = vpop.permute.xlu0 %1047
    %1050 = vset.pattern.permute.xlu0 3
    %1051 = vperm.xlu0 %1050, %v853
    %v1052 = vpop.permute.xlu0 %1051
    %v1054 = vmul.f32 %v1048, %v1044
    %v1055 = vmul.f32 %v1052, %v1045
    %v1056 = vsel %vm919, %v1054, 0.0
    %v1057 = vsel %vm919, %v1055, 0.0
    %v1058 = vadd.f32 %v1056, %v1057
    %v1059 = vrot.slane %v1058, 4
    %v1060 = vadd.f32 %v1058, %v1059
    %v1061 = vrot.slane %v1060, 2
    %v1062 = vadd.f32 %v1060, %v1061
    %v1063 = vrot.slane %v1062, 1
    %v1064 = vadd.f32 %v1062, %v1063
    %v1065 = vsub.f32 %v236, %v1064
    %v1066 = vmul.f32 %v1065, %v896
    %v1067 = vlaneseq
    %v1068 = vshrl.u32 %v1067, 7
    %v1069 = vsub.s32 3, %v1068
    %v1070 = vrot.slane %v1066, %v1069
    %v1071 = vmul.f32 %v1048, %v1070
    %v1072 = vmul.f32 %v1052, %v1070
    %v1073 = vadd.f32 %v1044, %v1071
    %v1074 = vadd.f32 %v1045, %v1072
    %1075 = vset.pattern.permute.xlu0 3
    %1076 = vperm.xlu0 %1075, %v816
    %v1077 = vpop.permute.xlu0 %1076
    %1079 = vset.pattern.permute.xlu0 3
    %1080 = vperm.xlu0 %1079, %v817
    %v1081 = vpop.permute.xlu0 %1080
    %v1083 = vmul.f32 %v1077, %v1073
    %v1084 = vmul.f32 %v1081, %v1074
    %v1085 = vsel %vm919, %v1083, 0.0
    %v1086 = vsel %vm919, %v1084, 0.0
    %v1087 = vadd.f32 %v1085, %v1086
    %v1088 = vrot.slane %v1087, 4
    %v1089 = vadd.f32 %v1087, %v1088
    %v1090 = vrot.slane %v1089, 2
    %v1091 = vadd.f32 %v1089, %v1090
    %v1092 = vrot.slane %v1091, 1
    %v1093 = vadd.f32 %v1091, %v1092
    %1094 = vrot.lane.b32.xlu0 %v547, 127
    %v1095 = vpop.permute.xlu0 %1094
    %s1096 = vtos %v1095
    %v1097 = vstv %s1096
    %v1099 = vmul.f32 %v1073, %v1097
    %v1100 = vmul.f32 %v1074, %v1097
    %1101 = vset.pattern.permute.xlu0 4
    %1102 = vperm.xlu0 %1101, %v852
    %v1103 = vpop.permute.xlu0 %1102
    %1105 = vset.pattern.permute.xlu0 4
    %1106 = vperm.xlu0 %1105, %v853
    %v1107 = vpop.permute.xlu0 %1106
    %v1109 = vmul.f32 %v1103, %v1099
    %v1110 = vmul.f32 %v1107, %v1100
    %v1111 = vsel %vm919, %v1109, 0.0
    %v1112 = vsel %vm919, %v1110, 0.0
    %v1113 = vadd.f32 %v1111, %v1112
    %v1114 = vrot.slane %v1113, 4
    %v1115 = vadd.f32 %v1113, %v1114
    %v1116 = vrot.slane %v1115, 2
    %v1117 = vadd.f32 %v1115, %v1116
    %v1118 = vrot.slane %v1117, 1
    %v1119 = vadd.f32 %v1117, %v1118
    %v1120 = vsub.f32 %v236, %v1119
    %v1121 = vmul.f32 %v1120, %v896
    %v1122 = vlaneseq
    %v1123 = vshrl.u32 %v1122, 7
    %v1124 = vsub.s32 4, %v1123
    %v1125 = vrot.slane %v1121, %v1124
    %v1126 = vmul.f32 %v1103, %v1125
    %v1127 = vmul.f32 %v1107, %v1125
    %v1128 = vadd.f32 %v1099, %v1126
    %v1129 = vadd.f32 %v1100, %v1127
    %1130 = vset.pattern.permute.xlu0 4
    %1131 = vperm.xlu0 %1130, %v816
    %v1132 = vpop.permute.xlu0 %1131
    %1134 = vset.pattern.permute.xlu0 4
    %1135 = vperm.xlu0 %1134, %v817
    %v1136 = vpop.permute.xlu0 %1135
    %v1138 = vmul.f32 %v1132, %v1128
    %v1139 = vmul.f32 %v1136, %v1129
    %v1140 = vsel %vm919, %v1138, 0.0
    %v1141 = vsel %vm919, %v1139, 0.0
    %v1142 = vadd.f32 %v1140, %v1141
    %v1143 = vrot.slane %v1142, 4
    %v1144 = vadd.f32 %v1142, %v1143
    %v1145 = vrot.slane %v1144, 2
    %v1146 = vadd.f32 %v1144, %v1145
    %v1147 = vrot.slane %v1146, 1
    %v1148 = vadd.f32 %v1146, %v1147
    %1149 = vrot.lane.b32.xlu0 %v601, 127
    %v1150 = vpop.permute.xlu0 %1149
    %s1151 = vtos %v1150
    %v1152 = vstv %s1151
    %v1154 = vmul.f32 %v1128, %v1152
    %v1155 = vmul.f32 %v1129, %v1152
    %1156 = vset.pattern.permute.xlu0 5
    %1157 = vperm.xlu0 %1156, %v852
    %v1158 = vpop.permute.xlu0 %1157
    %1160 = vset.pattern.permute.xlu0 5
    %1161 = vperm.xlu0 %1160, %v853
    %v1162 = vpop.permute.xlu0 %1161
    %v1164 = vmul.f32 %v1158, %v1154
    %v1165 = vmul.f32 %v1162, %v1155
    %v1166 = vsel %vm919, %v1164, 0.0
    %v1167 = vsel %vm919, %v1165, 0.0
    %v1168 = vadd.f32 %v1166, %v1167
    %v1169 = vrot.slane %v1168, 4
    %v1170 = vadd.f32 %v1168, %v1169
    %v1171 = vrot.slane %v1170, 2
    %v1172 = vadd.f32 %v1170, %v1171
    %v1173 = vrot.slane %v1172, 1
    %v1174 = vadd.f32 %v1172, %v1173
    %v1175 = vsub.f32 %v236, %v1174
    %v1176 = vmul.f32 %v1175, %v896
    %v1177 = vlaneseq
    %v1178 = vshrl.u32 %v1177, 7
    %v1179 = vsub.s32 5, %v1178
    %v1180 = vrot.slane %v1176, %v1179
    %v1181 = vmul.f32 %v1158, %v1180
    %v1182 = vmul.f32 %v1162, %v1180
    %v1183 = vadd.f32 %v1154, %v1181
    %v1184 = vadd.f32 %v1155, %v1182
    %1185 = vset.pattern.permute.xlu0 5
    %1186 = vperm.xlu0 %1185, %v816
    %v1187 = vpop.permute.xlu0 %1186
    %1189 = vset.pattern.permute.xlu0 5
    %1190 = vperm.xlu0 %1189, %v817
    %v1191 = vpop.permute.xlu0 %1190
    %v1193 = vmul.f32 %v1187, %v1183
    %v1194 = vmul.f32 %v1191, %v1184
    %v1195 = vsel %vm919, %v1193, 0.0
    %v1196 = vsel %vm919, %v1194, 0.0
    %v1197 = vadd.f32 %v1195, %v1196
    %v1198 = vrot.slane %v1197, 4
    %v1199 = vadd.f32 %v1197, %v1198
    %v1200 = vrot.slane %v1199, 2
    %v1201 = vadd.f32 %v1199, %v1200
    %v1202 = vrot.slane %v1201, 1
    %v1203 = vadd.f32 %v1201, %v1202
    %1204 = vrot.lane.b32.xlu0 %v655, 127
    %v1205 = vpop.permute.xlu0 %1204
    %s1206 = vtos %v1205
    %v1207 = vstv %s1206
    %v1209 = vmul.f32 %v1183, %v1207
    %v1210 = vmul.f32 %v1184, %v1207
    %1211 = vset.pattern.permute.xlu0 6
    %1212 = vperm.xlu0 %1211, %v852
    %v1213 = vpop.permute.xlu0 %1212
    %1215 = vset.pattern.permute.xlu0 6
    %1216 = vperm.xlu0 %1215, %v853
    %v1217 = vpop.permute.xlu0 %1216
    %v1219 = vmul.f32 %v1213, %v1209
    %v1220 = vmul.f32 %v1217, %v1210
    %v1221 = vsel %vm919, %v1219, 0.0
    %v1222 = vsel %vm919, %v1220, 0.0
    %v1223 = vadd.f32 %v1221, %v1222
    %v1224 = vrot.slane %v1223, 4
    %v1225 = vadd.f32 %v1223, %v1224
    %v1226 = vrot.slane %v1225, 2
    %v1227 = vadd.f32 %v1225, %v1226
    %v1228 = vrot.slane %v1227, 1
    %v1229 = vadd.f32 %v1227, %v1228
    %v1230 = vsub.f32 %v236, %v1229
    %v1231 = vmul.f32 %v1230, %v896
    %v1232 = vlaneseq
    %v1233 = vshrl.u32 %v1232, 7
    %v1234 = vsub.s32 6, %v1233
    %v1235 = vrot.slane %v1231, %v1234
    %v1236 = vmul.f32 %v1213, %v1235
    %v1237 = vmul.f32 %v1217, %v1235
    %v1238 = vadd.f32 %v1209, %v1236
    %v1239 = vadd.f32 %v1210, %v1237
    %1240 = vset.pattern.permute.xlu0 6
    %1241 = vperm.xlu0 %1240, %v816
    %v1242 = vpop.permute.xlu0 %1241
    %1244 = vset.pattern.permute.xlu0 6
    %1245 = vperm.xlu0 %1244, %v817
    %v1246 = vpop.permute.xlu0 %1245
    %v1248 = vmul.f32 %v1242, %v1238
    %v1249 = vmul.f32 %v1246, %v1239
    %v1250 = vsel %vm919, %v1248, 0.0
    %v1251 = vsel %vm919, %v1249, 0.0
    %v1252 = vadd.f32 %v1250, %v1251
    %v1253 = vrot.slane %v1252, 4
    %v1254 = vadd.f32 %v1252, %v1253
    %v1255 = vrot.slane %v1254, 2
    %v1256 = vadd.f32 %v1254, %v1255
    %v1257 = vrot.slane %v1256, 1
    %v1258 = vadd.f32 %v1256, %v1257
    %1259 = vrot.lane.b32.xlu0 %v709, 127
    %v1260 = vpop.permute.xlu0 %1259
    %s1261 = vtos %v1260
    %v1262 = vstv %s1261
    %v1264 = vmul.f32 %v1238, %v1262
    %v1265 = vmul.f32 %v1239, %v1262
    %1266 = vset.pattern.permute.xlu0 7
    %1267 = vperm.xlu0 %1266, %v852
    %v1268 = vpop.permute.xlu0 %1267
    %1270 = vset.pattern.permute.xlu0 7
    %1271 = vperm.xlu0 %1270, %v853
    %v1272 = vpop.permute.xlu0 %1271
    %v1274 = vmul.f32 %v1268, %v1264
    %v1275 = vmul.f32 %v1272, %v1265
    %v1276 = vsel %vm919, %v1274, 0.0
    %v1277 = vsel %vm919, %v1275, 0.0
    %v1278 = vadd.f32 %v1276, %v1277
    %v1279 = vrot.slane %v1278, 4
    %v1280 = vadd.f32 %v1278, %v1279
    %v1281 = vrot.slane %v1280, 2
    %v1282 = vadd.f32 %v1280, %v1281
    %v1283 = vrot.slane %v1282, 1
    %v1284 = vadd.f32 %v1282, %v1283
    %v1285 = vsub.f32 %v236, %v1284
    %v1286 = vmul.f32 %v1285, %v896
    %v1287 = vlaneseq
    %v1288 = vshrl.u32 %v1287, 7
    %v1289 = vsub.s32 7, %v1288
    %v1290 = vrot.slane %v1286, %v1289
    %v1291 = vmul.f32 %v1268, %v1290
    %v1292 = vmul.f32 %v1272, %v1290
    %v1293 = vadd.f32 %v1264, %v1291
    %v1294 = vadd.f32 %v1265, %v1292
    %1295 = vset.pattern.permute.xlu0 7
    %1296 = vperm.xlu0 %1295, %v816
    %v1297 = vpop.permute.xlu0 %1296
    %1299 = vset.pattern.permute.xlu0 7
    %1300 = vperm.xlu0 %1299, %v817
    %v1301 = vpop.permute.xlu0 %1300
    %v1303 = vmul.f32 %v1297, %v1293
    %v1304 = vmul.f32 %v1301, %v1294
    %v1305 = vsel %vm919, %v1303, 0.0
    %v1306 = vsel %vm919, %v1304, 0.0
    %v1307 = vadd.f32 %v1305, %v1306
    %v1308 = vrot.slane %v1307, 4
    %v1309 = vadd.f32 %v1307, %v1308
    %v1310 = vrot.slane %v1309, 2
    %v1311 = vadd.f32 %v1309, %v1310
    %v1312 = vrot.slane %v1311, 1
    %v1313 = vadd.f32 %v1311, %v1312
    %v1314 = vsel %vm763, %v928, %v983
    %v1315 = vsel %vm765, %v1314, %v1038
    %v1316 = vsel %vm767, %v1315, %v1093
    %v1317 = vsel %vm769, %v1316, %v1148
    %v1318 = vsel %vm771, %v1317, %v1203
    %v1319 = vsel %vm773, %v1318, %v1258
    %v1320 = vsel %vm775, %v1319, %v1313
    %1322 = vrot.lane.b32.xlu0 %v776, 64
    %v1323 = vpop.permute.xlu0 %1322
    %1326 = vrot.lane.b32.xlu0 %v1320, 64
    %v1327 = vpop.permute.xlu0 %1326
    %v1329 = vsel %vm238, %v1323, %v1327
    %v1330 = vmul.f32 %v120, %v204
    %v1331 = vrot.slane %v120, 5
    %v1332 = vmul.f32 %v1331, %v200
    %v1333 = vmul.f32 %v1332, %v211
    %v1334 = vadd.f32 %v1330, %v1333
    %v1335 = vrot.slane %v120, 6
    %v1336 = vmul.f32 %v1335, %v197
    %v1337 = vmul.f32 %v1336, %v219
    %v1338 = vadd.f32 %v1334, %v1337
    %v1339 = vrot.slane %v120, 7
    %v1340 = vmul.f32 %v1339, %v194
    %v1341 = vmul.f32 %v1340, %v227
    %v1342 = vadd.f32 %v1338, %v1341
    %v1343 = vsub.f32 0.0, %v1342
    %v1344 = vmul.f32 %v1343, 1.442695
    %v1345 = vpow.pop %v1344
    %v1346 = vadd.f32 %v1345, 1.0
    %v1347 = vrcp.pop %v1346
    %v1348 = vmul.f32 1.0, %v1347
    %v1349 = vmul.f32 %v1342, %v1348
    %v1350 = vmul.f32 %v1349, %v1349
    %v1351 = vsel %vm238, %v1350, 0.0
    %1352 = vadd.xlane.f32.xlu0 %v1351
    %v1353 = vpop.xlane.xlu0 %1352
    %v1354 = vadd.f32 %v1353, 1e-06
    %v1355 = vrsqrt.pop %v1354
    %v1356 = vmul.f32 %v1349, %v1355
    %v1357 = vmul.f32 %v1356, 0.25
    %1359 = vrot.lane.b32.xlu0 %v1350, 96
    %v1360 = vpop.permute.xlu0 %1359
    %v1362 = vsel %vm238, %v1360, 0.0
    %1363 = vadd.xlane.f32.xlu0 %v1362
    %v1364 = vpop.xlane.xlu0 %1363
    %v1365 = vadd.f32 %v1364, 1e-06
    %v1366 = vrsqrt.pop %v1365
    %v1367 = vmul.f32 %v1349, %v1366
    %1368 = vxpose.xlu0.b32.start [1/16] %v1357, 128
    %1369 = vxpose.xlu0.b32.cont [2/16] 0.0, 128
    %1370 = vxpose.xlu0.b32.cont [3/16] 0.0, 128
    %1371 = vxpose.xlu0.b32.cont [4/16] 0.0, 128
    %1372 = vxpose.xlu0.b32.cont [5/16] 0.0, 128
    %1373 = vxpose.xlu0.b32.cont [6/16] 0.0, 128
    %1374 = vxpose.xlu0.b32.cont [7/16] 0.0, 128
    %1375 = vxpose.xlu0.b32.cont [8/16] 0.0, 128
    %1376 = vxpose.xlu0.b32.cont [9/16] 0.0, 128
    %1377 = vxpose.xlu0.b32.cont [10/16] 0.0, 128
    %1378 = vxpose.xlu0.b32.cont [11/16] 0.0, 128
    %1379 = vxpose.xlu0.b32.cont [12/16] 0.0, 128
    %1380 = vxpose.xlu0.b32.cont [13/16] 0.0, 128
    %1381 = vxpose.xlu0.b32.cont [14/16] 0.0, 128
    %1382 = vxpose.xlu0.b32.cont [15/16] 0.0, 128
    %1383 = vxpose.xlu0.b32.end [16/16] 0.0, 128
    %v1384 = vpop.trf.xlu0
    %v1385 = vpop.trf.xlu0
    %v1386 = vpop.trf.xlu0
    %v1387 = vpop.trf.xlu0
    %v1388 = vpop.trf.xlu0
    %v1389 = vpop.trf.xlu0
    %v1390 = vpop.trf.xlu0
    %v1391 = vpop.trf.xlu0
    %v1392 = vpop.trf.xlu0
    %v1393 = vpop.trf.xlu0
    %v1394 = vpop.trf.xlu0
    %v1395 = vpop.trf.xlu0
    %v1396 = vpop.trf.xlu0
    %v1397 = vpop.trf.xlu0
    %v1398 = vpop.trf.xlu0
    %v1399 = vpop.trf.xlu0
    %1401 = vrot.lane.b32.xlu0 %v1367, 96
    %v1402 = vpop.permute.xlu0 %1401
    %1404 = vxpose.xlu0.b32.start [1/16] %v1402, 128
    %1405 = vxpose.xlu0.b32.cont [2/16] 0.0, 128
    %1406 = vxpose.xlu0.b32.cont [3/16] 0.0, 128
    %1407 = vxpose.xlu0.b32.cont [4/16] 0.0, 128
    %1408 = vxpose.xlu0.b32.cont [5/16] 0.0, 128
    %1409 = vxpose.xlu0.b32.cont [6/16] 0.0, 128
    %1410 = vxpose.xlu0.b32.cont [7/16] 0.0, 128
    %1411 = vxpose.xlu0.b32.cont [8/16] 0.0, 128
    %1412 = vxpose.xlu0.b32.cont [9/16] 0.0, 128
    %1413 = vxpose.xlu0.b32.cont [10/16] 0.0, 128
    %1414 = vxpose.xlu0.b32.cont [11/16] 0.0, 128
    %1415 = vxpose.xlu0.b32.cont [12/16] 0.0, 128
    %1416 = vxpose.xlu0.b32.cont [13/16] 0.0, 128
    %1417 = vxpose.xlu0.b32.cont [14/16] 0.0, 128
    %1418 = vxpose.xlu0.b32.cont [15/16] 0.0, 128
    %1419 = vxpose.xlu0.b32.end [16/16] 0.0, 128
    %v1420 = vpop.trf.xlu0
    %v1421 = vpop.trf.xlu0
    %v1422 = vpop.trf.xlu0
    %v1423 = vpop.trf.xlu0
    %v1424 = vpop.trf.xlu0
    %v1425 = vpop.trf.xlu0
    %v1426 = vpop.trf.xlu0
    %v1427 = vpop.trf.xlu0
    %v1428 = vpop.trf.xlu0
    %v1429 = vpop.trf.xlu0
    %v1430 = vpop.trf.xlu0
    %v1431 = vpop.trf.xlu0
    %v1432 = vpop.trf.xlu0
    %v1433 = vpop.trf.xlu0
    %v1434 = vpop.trf.xlu0
    %v1435 = vpop.trf.xlu0
    %s1437 = vtos %v188
    %v1438 = vstv %s1437
    %v1440 = vmul.f32 %v1438, 0.0
    %1442 = vset.pattern.permute.xlu0 0
    %1443 = vperm.xlu0 %1442, %v1420
    %v1444 = vpop.permute.xlu0 %1443
    %1447 = vset.pattern.permute.xlu0 0
    %1448 = vperm.xlu0 %1447, %v1421
    %v1449 = vpop.permute.xlu0 %1448
    %v1451 = vmul.f32 %v1444, %v1440
    %v1452 = vmul.f32 %v1449, %v1440
    %v1453 = vadd.f32 %v1451, %v1452
    %v1454 = vrot.slane %v1453, 4
    %v1455 = vadd.f32 %v1453, %v1454
    %v1456 = vrot.slane %v1455, 2
    %v1457 = vadd.f32 %v1455, %v1456
    %v1458 = vrot.slane %v1457, 1
    %v1459 = vadd.f32 %v1457, %v1458
    %v1460 = vsub.f32 %v1349, %v1459
    %1462 = vset.pattern.permute.xlu0 0
    %1463 = vperm.xlu0 %1462, %v135
    %v1464 = vpop.permute.xlu0 %1463
    %v1466 = vmul.f32 %v1460, %v1464
    %v1467 = vlaneseq
    %v1468 = vshrl.u32 %v1467, 7
    %v1469 = vsub.s32 0, %v1468
    %v1470 = vrot.slane %v1466, %v1469
    %v1471 = vmul.f32 %v1444, %v1470
    %v1472 = vmul.f32 %v1449, %v1470
    %v1473 = vadd.f32 %v1440, %v1471
    %v1474 = vadd.f32 %v1440, %v1472
    %1476 = vset.pattern.permute.xlu0 0
    %1477 = vperm.xlu0 %1476, %v1384
    %v1478 = vpop.permute.xlu0 %1477
    %1481 = vset.pattern.permute.xlu0 0
    %1482 = vperm.xlu0 %1481, %v1385
    %v1483 = vpop.permute.xlu0 %1482
    %v1485 = vmul.f32 %v1478, %v1473
    %v1486 = vmul.f32 %v1483, %v1474
    %v1487 = vsel %vm375, %v1485, 0.0
    %v1488 = vsel %vm375, %v1486, 0.0
    %v1489 = vadd.f32 %v1487, %v1488
    %v1490 = vrot.slane %v1489, 4
    %v1491 = vadd.f32 %v1489, %v1490
    %v1492 = vrot.slane %v1491, 2
    %v1493 = vadd.f32 %v1491, %v1492
    %v1494 = vrot.slane %v1493, 1
    %v1495 = vadd.f32 %v1493, %v1494
    %v1496 = vrot.slane %v188, 1
    %s1497 = vtos %v1496
    %v1498 = vstv %s1497
    %v1500 = vmul.f32 %v1473, %v1498
    %v1501 = vmul.f32 %v1474, %v1498
    %1502 = vset.pattern.permute.xlu0 1
    %1503 = vperm.xlu0 %1502, %v1420
    %v1504 = vpop.permute.xlu0 %1503
    %1506 = vset.pattern.permute.xlu0 1
    %1507 = vperm.xlu0 %1506, %v1421
    %v1508 = vpop.permute.xlu0 %1507
    %v1510 = vmul.f32 %v1504, %v1500
    %v1511 = vmul.f32 %v1508, %v1501
    %v1512 = vsel %vm375, %v1510, 0.0
    %v1513 = vsel %vm375, %v1511, 0.0
    %v1514 = vadd.f32 %v1512, %v1513
    %v1515 = vrot.slane %v1514, 4
    %v1516 = vadd.f32 %v1514, %v1515
    %v1517 = vrot.slane %v1516, 2
    %v1518 = vadd.f32 %v1516, %v1517
    %v1519 = vrot.slane %v1518, 1
    %v1520 = vadd.f32 %v1518, %v1519
    %v1521 = vsub.f32 %v1349, %v1520
    %v1522 = vmul.f32 %v1521, %v1464
    %v1523 = vlaneseq
    %v1524 = vshrl.u32 %v1523, 7
    %v1525 = vsub.s32 1, %v1524
    %v1526 = vrot.slane %v1522, %v1525
    %v1527 = vmul.f32 %v1504, %v1526
    %v1528 = vmul.f32 %v1508, %v1526
    %v1529 = vadd.f32 %v1500, %v1527
    %v1530 = vadd.f32 %v1501, %v1528
    %1531 = vset.pattern.permute.xlu0 1
    %1532 = vperm.xlu0 %1531, %v1384
    %v1533 = vpop.permute.xlu0 %1532
    %1535 = vset.pattern.permute.xlu0 1
    %1536 = vperm.xlu0 %1535, %v1385
    %v1537 = vpop.permute.xlu0 %1536
    %v1539 = vmul.f32 %v1533, %v1529
    %v1540 = vmul.f32 %v1537, %v1530
    %v1541 = vsel %vm375, %v1539, 0.0
    %v1542 = vsel %vm375, %v1540, 0.0
    %v1543 = vadd.f32 %v1541, %v1542
    %v1544 = vrot.slane %v1543, 4
    %v1545 = vadd.f32 %v1543, %v1544
    %v1546 = vrot.slane %v1545, 2
    %v1547 = vadd.f32 %v1545, %v1546
    %v1548 = vrot.slane %v1547, 1
    %v1549 = vadd.f32 %v1547, %v1548
    %v1550 = vrot.slane %v188, 2
    %s1551 = vtos %v1550
    %v1552 = vstv %s1551
    %v1554 = vmul.f32 %v1529, %v1552
    %v1555 = vmul.f32 %v1530, %v1552
    %1556 = vset.pattern.permute.xlu0 2
    %1557 = vperm.xlu0 %1556, %v1420
    %v1558 = vpop.permute.xlu0 %1557
    %1560 = vset.pattern.permute.xlu0 2
    %1561 = vperm.xlu0 %1560, %v1421
    %v1562 = vpop.permute.xlu0 %1561
    %v1564 = vmul.f32 %v1558, %v1554
    %v1565 = vmul.f32 %v1562, %v1555
    %v1566 = vsel %vm375, %v1564, 0.0
    %v1567 = vsel %vm375, %v1565, 0.0
    %v1568 = vadd.f32 %v1566, %v1567
    %v1569 = vrot.slane %v1568, 4
    %v1570 = vadd.f32 %v1568, %v1569
    %v1571 = vrot.slane %v1570, 2
    %v1572 = vadd.f32 %v1570, %v1571
    %v1573 = vrot.slane %v1572, 1
    %v1574 = vadd.f32 %v1572, %v1573
    %v1575 = vsub.f32 %v1349, %v1574
    %v1576 = vmul.f32 %v1575, %v1464
    %v1577 = vlaneseq
    %v1578 = vshrl.u32 %v1577, 7
    %v1579 = vsub.s32 2, %v1578
    %v1580 = vrot.slane %v1576, %v1579
    %v1581 = vmul.f32 %v1558, %v1580
    %v1582 = vmul.f32 %v1562, %v1580
    %v1583 = vadd.f32 %v1554, %v1581
    %v1584 = vadd.f32 %v1555, %v1582
    %1585 = vset.pattern.permute.xlu0 2
    %1586 = vperm.xlu0 %1585, %v1384
    %v1587 = vpop.permute.xlu0 %1586
    %1589 = vset.pattern.permute.xlu0 2
    %1590 = vperm.xlu0 %1589, %v1385
    %v1591 = vpop.permute.xlu0 %1590
    %v1593 = vmul.f32 %v1587, %v1583
    %v1594 = vmul.f32 %v1591, %v1584
    %v1595 = vsel %vm375, %v1593, 0.0
    %v1596 = vsel %vm375, %v1594, 0.0
    %v1597 = vadd.f32 %v1595, %v1596
    %v1598 = vrot.slane %v1597, 4
    %v1599 = vadd.f32 %v1597, %v1598
    %v1600 = vrot.slane %v1599, 2
    %v1601 = vadd.f32 %v1599, %v1600
    %v1602 = vrot.slane %v1601, 1
    %v1603 = vadd.f32 %v1601, %v1602
    %v1604 = vrot.slane %v188, 3
    %s1605 = vtos %v1604
    %v1606 = vstv %s1605
    %v1608 = vmul.f32 %v1583, %v1606
    %v1609 = vmul.f32 %v1584, %v1606
    %1610 = vset.pattern.permute.xlu0 3
    %1611 = vperm.xlu0 %1610, %v1420
    %v1612 = vpop.permute.xlu0 %1611
    %1614 = vset.pattern.permute.xlu0 3
    %1615 = vperm.xlu0 %1614, %v1421
    %v1616 = vpop.permute.xlu0 %1615
    %v1618 = vmul.f32 %v1612, %v1608
    %v1619 = vmul.f32 %v1616, %v1609
    %v1620 = vsel %vm375, %v1618, 0.0
    %v1621 = vsel %vm375, %v1619, 0.0
    %v1622 = vadd.f32 %v1620, %v1621
    %v1623 = vrot.slane %v1622, 4
    %v1624 = vadd.f32 %v1622, %v1623
    %v1625 = vrot.slane %v1624, 2
    %v1626 = vadd.f32 %v1624, %v1625
    %v1627 = vrot.slane %v1626, 1
    %v1628 = vadd.f32 %v1626, %v1627
    %v1629 = vsub.f32 %v1349, %v1628
    %v1630 = vmul.f32 %v1629, %v1464
    %v1631 = vlaneseq
    %v1632 = vshrl.u32 %v1631, 7
    %v1633 = vsub.s32 3, %v1632
    %v1634 = vrot.slane %v1630, %v1633
    %v1635 = vmul.f32 %v1612, %v1634
    %v1636 = vmul.f32 %v1616, %v1634
    %v1637 = vadd.f32 %v1608, %v1635
    %v1638 = vadd.f32 %v1609, %v1636
    %1639 = vset.pattern.permute.xlu0 3
    %1640 = vperm.xlu0 %1639, %v1384
    %v1641 = vpop.permute.xlu0 %1640
    %1643 = vset.pattern.permute.xlu0 3
    %1644 = vperm.xlu0 %1643, %v1385
    %v1645 = vpop.permute.xlu0 %1644
    %v1647 = vmul.f32 %v1641, %v1637
    %v1648 = vmul.f32 %v1645, %v1638
    %v1649 = vsel %vm375, %v1647, 0.0
    %v1650 = vsel %vm375, %v1648, 0.0
    %v1651 = vadd.f32 %v1649, %v1650
    %v1652 = vrot.slane %v1651, 4
    %v1653 = vadd.f32 %v1651, %v1652
    %v1654 = vrot.slane %v1653, 2
    %v1655 = vadd.f32 %v1653, %v1654
    %v1656 = vrot.slane %v1655, 1
    %v1657 = vadd.f32 %v1655, %v1656
    %v1658 = vrot.slane %v188, 4
    %s1659 = vtos %v1658
    %v1660 = vstv %s1659
    %v1662 = vmul.f32 %v1637, %v1660
    %v1663 = vmul.f32 %v1638, %v1660
    %1664 = vset.pattern.permute.xlu0 4
    %1665 = vperm.xlu0 %1664, %v1420
    %v1666 = vpop.permute.xlu0 %1665
    %1668 = vset.pattern.permute.xlu0 4
    %1669 = vperm.xlu0 %1668, %v1421
    %v1670 = vpop.permute.xlu0 %1669
    %v1672 = vmul.f32 %v1666, %v1662
    %v1673 = vmul.f32 %v1670, %v1663
    %v1674 = vsel %vm375, %v1672, 0.0
    %v1675 = vsel %vm375, %v1673, 0.0
    %v1676 = vadd.f32 %v1674, %v1675
    %v1677 = vrot.slane %v1676, 4
    %v1678 = vadd.f32 %v1676, %v1677
    %v1679 = vrot.slane %v1678, 2
    %v1680 = vadd.f32 %v1678, %v1679
    %v1681 = vrot.slane %v1680, 1
    %v1682 = vadd.f32 %v1680, %v1681
    %v1683 = vsub.f32 %v1349, %v1682
    %v1684 = vmul.f32 %v1683, %v1464
    %v1685 = vlaneseq
    %v1686 = vshrl.u32 %v1685, 7
    %v1687 = vsub.s32 4, %v1686
    %v1688 = vrot.slane %v1684, %v1687
    %v1689 = vmul.f32 %v1666, %v1688
    %v1690 = vmul.f32 %v1670, %v1688
    %v1691 = vadd.f32 %v1662, %v1689
    %v1692 = vadd.f32 %v1663, %v1690
    %1693 = vset.pattern.permute.xlu0 4
    %1694 = vperm.xlu0 %1693, %v1384
    %v1695 = vpop.permute.xlu0 %1694
    %1697 = vset.pattern.permute.xlu0 4
    %1698 = vperm.xlu0 %1697, %v1385
    %v1699 = vpop.permute.xlu0 %1698
    %v1701 = vmul.f32 %v1695, %v1691
    %v1702 = vmul.f32 %v1699, %v1692
    %v1703 = vsel %vm375, %v1701, 0.0
    %v1704 = vsel %vm375, %v1702, 0.0
    %v1705 = vadd.f32 %v1703, %v1704
    %v1706 = vrot.slane %v1705, 4
    %v1707 = vadd.f32 %v1705, %v1706
    %v1708 = vrot.slane %v1707, 2
    %v1709 = vadd.f32 %v1707, %v1708
    %v1710 = vrot.slane %v1709, 1
    %v1711 = vadd.f32 %v1709, %v1710
    %v1712 = vrot.slane %v188, 5
    %s1713 = vtos %v1712
    %v1714 = vstv %s1713
    %v1716 = vmul.f32 %v1691, %v1714
    %v1717 = vmul.f32 %v1692, %v1714
    %1718 = vset.pattern.permute.xlu0 5
    %1719 = vperm.xlu0 %1718, %v1420
    %v1720 = vpop.permute.xlu0 %1719
    %1722 = vset.pattern.permute.xlu0 5
    %1723 = vperm.xlu0 %1722, %v1421
    %v1724 = vpop.permute.xlu0 %1723
    %v1726 = vmul.f32 %v1720, %v1716
    %v1727 = vmul.f32 %v1724, %v1717
    %v1728 = vsel %vm375, %v1726, 0.0
    %v1729 = vsel %vm375, %v1727, 0.0
    %v1730 = vadd.f32 %v1728, %v1729
    %v1731 = vrot.slane %v1730, 4
    %v1732 = vadd.f32 %v1730, %v1731
    %v1733 = vrot.slane %v1732, 2
    %v1734 = vadd.f32 %v1732, %v1733
    %v1735 = vrot.slane %v1734, 1
    %v1736 = vadd.f32 %v1734, %v1735
    %v1737 = vsub.f32 %v1349, %v1736
    %v1738 = vmul.f32 %v1737, %v1464
    %v1739 = vlaneseq
    %v1740 = vshrl.u32 %v1739, 7
    %v1741 = vsub.s32 5, %v1740
    %v1742 = vrot.slane %v1738, %v1741
    %v1743 = vmul.f32 %v1720, %v1742
    %v1744 = vmul.f32 %v1724, %v1742
    %v1745 = vadd.f32 %v1716, %v1743
    %v1746 = vadd.f32 %v1717, %v1744
    %1747 = vset.pattern.permute.xlu0 5
    %1748 = vperm.xlu0 %1747, %v1384
    %v1749 = vpop.permute.xlu0 %1748
    %1751 = vset.pattern.permute.xlu0 5
    %1752 = vperm.xlu0 %1751, %v1385
    %v1753 = vpop.permute.xlu0 %1752
    %v1755 = vmul.f32 %v1749, %v1745
    %v1756 = vmul.f32 %v1753, %v1746
    %v1757 = vsel %vm375, %v1755, 0.0
    %v1758 = vsel %vm375, %v1756, 0.0
    %v1759 = vadd.f32 %v1757, %v1758
    %v1760 = vrot.slane %v1759, 4
    %v1761 = vadd.f32 %v1759, %v1760
    %v1762 = vrot.slane %v1761, 2
    %v1763 = vadd.f32 %v1761, %v1762
    %v1764 = vrot.slane %v1763, 1
    %v1765 = vadd.f32 %v1763, %v1764
    %v1766 = vrot.slane %v188, 6
    %s1767 = vtos %v1766
    %v1768 = vstv %s1767
    %v1770 = vmul.f32 %v1745, %v1768
    %v1771 = vmul.f32 %v1746, %v1768
    %1772 = vset.pattern.permute.xlu0 6
    %1773 = vperm.xlu0 %1772, %v1420
    %v1774 = vpop.permute.xlu0 %1773
    %1776 = vset.pattern.permute.xlu0 6
    %1777 = vperm.xlu0 %1776, %v1421
    %v1778 = vpop.permute.xlu0 %1777
    %v1780 = vmul.f32 %v1774, %v1770
    %v1781 = vmul.f32 %v1778, %v1771
    %v1782 = vsel %vm375, %v1780, 0.0
    %v1783 = vsel %vm375, %v1781, 0.0
    %v1784 = vadd.f32 %v1782, %v1783
    %v1785 = vrot.slane %v1784, 4
    %v1786 = vadd.f32 %v1784, %v1785
    %v1787 = vrot.slane %v1786, 2
    %v1788 = vadd.f32 %v1786, %v1787
    %v1789 = vrot.slane %v1788, 1
    %v1790 = vadd.f32 %v1788, %v1789
    %v1791 = vsub.f32 %v1349, %v1790
    %v1792 = vmul.f32 %v1791, %v1464
    %v1793 = vlaneseq
    %v1794 = vshrl.u32 %v1793, 7
    %v1795 = vsub.s32 6, %v1794
    %v1796 = vrot.slane %v1792, %v1795
    %v1797 = vmul.f32 %v1774, %v1796
    %v1798 = vmul.f32 %v1778, %v1796
    %v1799 = vadd.f32 %v1770, %v1797
    %v1800 = vadd.f32 %v1771, %v1798
    %1801 = vset.pattern.permute.xlu0 6
    %1802 = vperm.xlu0 %1801, %v1384
    %v1803 = vpop.permute.xlu0 %1802
    %1805 = vset.pattern.permute.xlu0 6
    %1806 = vperm.xlu0 %1805, %v1385
    %v1807 = vpop.permute.xlu0 %1806
    %v1809 = vmul.f32 %v1803, %v1799
    %v1810 = vmul.f32 %v1807, %v1800
    %v1811 = vsel %vm375, %v1809, 0.0
    %v1812 = vsel %vm375, %v1810, 0.0
    %v1813 = vadd.f32 %v1811, %v1812
    %v1814 = vrot.slane %v1813, 4
    %v1815 = vadd.f32 %v1813, %v1814
    %v1816 = vrot.slane %v1815, 2
    %v1817 = vadd.f32 %v1815, %v1816
    %v1818 = vrot.slane %v1817, 1
    %v1819 = vadd.f32 %v1817, %v1818
    %v1820 = vrot.slane %v188, 7
    %s1821 = vtos %v1820
    %v1822 = vstv %s1821
    %v1824 = vmul.f32 %v1799, %v1822
    %v1825 = vmul.f32 %v1800, %v1822
    %1826 = vset.pattern.permute.xlu0 7
    %1827 = vperm.xlu0 %1826, %v1420
    %v1828 = vpop.permute.xlu0 %1827
    %1830 = vset.pattern.permute.xlu0 7
    %1831 = vperm.xlu0 %1830, %v1421
    %v1832 = vpop.permute.xlu0 %1831
    %v1834 = vmul.f32 %v1828, %v1824
    %v1835 = vmul.f32 %v1832, %v1825
    %v1836 = vsel %vm375, %v1834, 0.0
    %v1837 = vsel %vm375, %v1835, 0.0
    %v1838 = vadd.f32 %v1836, %v1837
    %v1839 = vrot.slane %v1838, 4
    %v1840 = vadd.f32 %v1838, %v1839
    %v1841 = vrot.slane %v1840, 2
    %v1842 = vadd.f32 %v1840, %v1841
    %v1843 = vrot.slane %v1842, 1
    %v1844 = vadd.f32 %v1842, %v1843
    %v1845 = vsub.f32 %v1349, %v1844
    %v1846 = vmul.f32 %v1845, %v1464
    %v1847 = vlaneseq
    %v1848 = vshrl.u32 %v1847, 7
    %v1849 = vsub.s32 7, %v1848
    %v1850 = vrot.slane %v1846, %v1849
    %v1851 = vmul.f32 %v1828, %v1850
    %v1852 = vmul.f32 %v1832, %v1850
    %v1853 = vadd.f32 %v1824, %v1851
    %v1854 = vadd.f32 %v1825, %v1852
    %1855 = vset.pattern.permute.xlu0 7
    %1856 = vperm.xlu0 %1855, %v1384
    %v1857 = vpop.permute.xlu0 %1856
    %1859 = vset.pattern.permute.xlu0 7
    %1860 = vperm.xlu0 %1859, %v1385
    %v1861 = vpop.permute.xlu0 %1860
    %v1863 = vmul.f32 %v1857, %v1853
    %v1864 = vmul.f32 %v1861, %v1854
    %v1865 = vsel %vm375, %v1863, 0.0
    %v1866 = vsel %vm375, %v1864, 0.0
    %v1867 = vadd.f32 %v1865, %v1866
    %v1868 = vrot.slane %v1867, 4
    %v1869 = vadd.f32 %v1867, %v1868
    %v1870 = vrot.slane %v1869, 2
    %v1871 = vadd.f32 %v1869, %v1870
    %v1872 = vrot.slane %v1871, 1
    %v1873 = vadd.f32 %v1871, %v1872
    %v1874 = vsel %vm763, %v1495, %v1549
    %v1875 = vsel %vm765, %v1874, %v1603
    %v1876 = vsel %vm767, %v1875, %v1657
    %v1877 = vsel %vm769, %v1876, %v1711
    %v1878 = vsel %vm771, %v1877, %v1765
    %v1879 = vsel %vm773, %v1878, %v1819
    %v1880 = vsel %vm775, %v1879, %v1873
    %1881 = vrot.lane.b32.xlu0 %v1350, 112
    %v1882 = vpop.permute.xlu0 %1881
    %v1884 = vsel %vm238, %v1882, 0.0
    %1885 = vadd.xlane.f32.xlu0 %v1884
    %v1886 = vpop.xlane.xlu0 %1885
    %v1887 = vadd.f32 %v1886, 1e-06
    %v1888 = vrsqrt.pop %v1887
    %v1889 = vmul.f32 %v1349, %v1888
    %v1890 = vmul.f32 %v1889, 0.25
    %1891 = vrot.lane.b32.xlu0 %v1350, 80
    %v1892 = vpop.permute.xlu0 %1891
    %v1894 = vsel %vm238, %v1892, 0.0
    %1895 = vadd.xlane.f32.xlu0 %v1894
    %v1896 = vpop.xlane.xlu0 %1895
    %v1897 = vadd.f32 %v1896, 1e-06
    %v1898 = vrsqrt.pop %v1897
    %v1899 = vmul.f32 %v1349, %v1898
    %1901 = vrot.lane.b32.xlu0 %v1890, 112
    %v1902 = vpop.permute.xlu0 %1901
    %1904 = vxpose.xlu0.b32.start [1/16] %v1902, 128
    %1905 = vxpose.xlu0.b32.cont [2/16] 0.0, 128
    %1906 = vxpose.xlu0.b32.cont [3/16] 0.0, 128
    %1907 = vxpose.xlu0.b32.cont [4/16] 0.0, 128
    %1908 = vxpose.xlu0.b32.cont [5/16] 0.0, 128
    %1909 = vxpose.xlu0.b32.cont [6/16] 0.0, 128
    %1910 = vxpose.xlu0.b32.cont [7/16] 0.0, 128
    %1911 = vxpose.xlu0.b32.cont [8/16] 0.0, 128
    %1912 = vxpose.xlu0.b32.cont [9/16] 0.0, 128
    %1913 = vxpose.xlu0.b32.cont [10/16] 0.0, 128
    %1914 = vxpose.xlu0.b32.cont [11/16] 0.0, 128
    %1915 = vxpose.xlu0.b32.cont [12/16] 0.0, 128
    %1916 = vxpose.xlu0.b32.cont [13/16] 0.0, 128
    %1917 = vxpose.xlu0.b32.cont [14/16] 0.0, 128
    %1918 = vxpose.xlu0.b32.cont [15/16] 0.0, 128
    %1919 = vxpose.xlu0.b32.end [16/16] 0.0, 128
    %v1920 = vpop.trf.xlu0
    %v1921 = vpop.trf.xlu0
    %v1922 = vpop.trf.xlu0
    %v1923 = vpop.trf.xlu0
    %v1924 = vpop.trf.xlu0
    %v1925 = vpop.trf.xlu0
    %v1926 = vpop.trf.xlu0
    %v1927 = vpop.trf.xlu0
    %v1928 = vpop.trf.xlu0
    %v1929 = vpop.trf.xlu0
    %v1930 = vpop.trf.xlu0
    %v1931 = vpop.trf.xlu0
    %v1932 = vpop.trf.xlu0
    %v1933 = vpop.trf.xlu0
    %v1934 = vpop.trf.xlu0
    %v1935 = vpop.trf.xlu0
    %1937 = vrot.lane.b32.xlu0 %v1899, 80
    %v1938 = vpop.permute.xlu0 %1937
    %1940 = vxpose.xlu0.b32.start [1/16] %v1938, 128
    %1941 = vxpose.xlu0.b32.cont [2/16] 0.0, 128
    %1942 = vxpose.xlu0.b32.cont [3/16] 0.0, 128
    %1943 = vxpose.xlu0.b32.cont [4/16] 0.0, 128
    %1944 = vxpose.xlu0.b32.cont [5/16] 0.0, 128
    %1945 = vxpose.xlu0.b32.cont [6/16] 0.0, 128
    %1946 = vxpose.xlu0.b32.cont [7/16] 0.0, 128
    %1947 = vxpose.xlu0.b32.cont [8/16] 0.0, 128
    %1948 = vxpose.xlu0.b32.cont [9/16] 0.0, 128
    %1949 = vxpose.xlu0.b32.cont [10/16] 0.0, 128
    %1950 = vxpose.xlu0.b32.cont [11/16] 0.0, 128
    %1951 = vxpose.xlu0.b32.cont [12/16] 0.0, 128
    %1952 = vxpose.xlu0.b32.cont [13/16] 0.0, 128
    %1953 = vxpose.xlu0.b32.cont [14/16] 0.0, 128
    %1954 = vxpose.xlu0.b32.cont [15/16] 0.0, 128
    %1955 = vxpose.xlu0.b32.end [16/16] 0.0, 128
    %v1956 = vpop.trf.xlu0
    %v1957 = vpop.trf.xlu0
    %v1958 = vpop.trf.xlu0
    %v1959 = vpop.trf.xlu0
    %v1960 = vpop.trf.xlu0
    %v1961 = vpop.trf.xlu0
    %v1962 = vpop.trf.xlu0
    %v1963 = vpop.trf.xlu0
    %v1964 = vpop.trf.xlu0
    %v1965 = vpop.trf.xlu0
    %v1966 = vpop.trf.xlu0
    %v1967 = vpop.trf.xlu0
    %v1968 = vpop.trf.xlu0
    %v1969 = vpop.trf.xlu0
    %v1970 = vpop.trf.xlu0
    %v1971 = vpop.trf.xlu0
    %1972 = vrot.lane.b32.xlu0 %v188, 127
    %v1973 = vpop.permute.xlu0 %1972
    %s1974 = vtos %v1973
    %v1975 = vstv %s1974
    %v1977 = vmul.f32 %v1975, 0.0
    %1979 = vset.pattern.permute.xlu0 0
    %1980 = vperm.xlu0 %1979, %v1956
    %v1981 = vpop.permute.xlu0 %1980
    %1984 = vset.pattern.permute.xlu0 0
    %1985 = vperm.xlu0 %1984, %v1957
    %v1986 = vpop.permute.xlu0 %1985
    %v1988 = vmul.f32 %v1981, %v1977
    %v1989 = vmul.f32 %v1986, %v1977
    %v1990 = vadd.f32 %v1988, %v1989
    %v1991 = vrot.slane %v1990, 4
    %v1992 = vadd.f32 %v1990, %v1991
    %v1993 = vrot.slane %v1992, 2
    %v1994 = vadd.f32 %v1992, %v1993
    %v1995 = vrot.slane %v1994, 1
    %v1996 = vadd.f32 %v1994, %v1995
    %v1997 = vsub.f32 %v1349, %v1996
    %1998 = vset.pattern.permute.xlu0 1
    %1999 = vperm.xlu0 %1998, %v135
    %v2000 = vpop.permute.xlu0 %1999
    %v2002 = vmul.f32 %v1997, %v2000
    %v2003 = vlaneseq
    %v2004 = vshrl.u32 %v2003, 7
    %v2005 = vsub.s32 0, %v2004
    %v2006 = vrot.slane %v2002, %v2005
    %v2007 = vmul.f32 %v1981, %v2006
    %v2008 = vmul.f32 %v1986, %v2006
    %v2009 = vadd.f32 %v1977, %v2007
    %v2010 = vadd.f32 %v1977, %v2008
    %2012 = vset.pattern.permute.xlu0 0
    %2013 = vperm.xlu0 %2012, %v1920
    %v2014 = vpop.permute.xlu0 %2013
    %2017 = vset.pattern.permute.xlu0 0
    %2018 = vperm.xlu0 %2017, %v1921
    %v2019 = vpop.permute.xlu0 %2018
    %v2021 = vmul.f32 %v2014, %v2009
    %v2022 = vmul.f32 %v2019, %v2010
    %v2023 = vsel %vm919, %v2021, 0.0
    %v2024 = vsel %vm919, %v2022, 0.0
    %v2025 = vadd.f32 %v2023, %v2024
    %v2026 = vrot.slane %v2025, 4
    %v2027 = vadd.f32 %v2025, %v2026
    %v2028 = vrot.slane %v2027, 2
    %v2029 = vadd.f32 %v2027, %v2028
    %v2030 = vrot.slane %v2029, 1
    %v2031 = vadd.f32 %v2029, %v2030
    %2032 = vrot.lane.b32.xlu0 %v1496, 127
    %v2033 = vpop.permute.xlu0 %2032
    %s2034 = vtos %v2033
    %v2035 = vstv %s2034
    %v2037 = vmul.f32 %v2009, %v2035
    %v2038 = vmul.f32 %v2010, %v2035
    %2039 = vset.pattern.permute.xlu0 1
    %2040 = vperm.xlu0 %2039, %v1956
    %v2041 = vpop.permute.xlu0 %2040
    %2043 = vset.pattern.permute.xlu0 1
    %2044 = vperm.xlu0 %2043, %v1957
    %v2045 = vpop.permute.xlu0 %2044
    %v2047 = vmul.f32 %v2041, %v2037
    %v2048 = vmul.f32 %v2045, %v2038
    %v2049 = vsel %vm919, %v2047, 0.0
    %v2050 = vsel %vm919, %v2048, 0.0
    %v2051 = vadd.f32 %v2049, %v2050
    %v2052 = vrot.slane %v2051, 4
    %v2053 = vadd.f32 %v2051, %v2052
    %v2054 = vrot.slane %v2053, 2
    %v2055 = vadd.f32 %v2053, %v2054
    %v2056 = vrot.slane %v2055, 1
    %v2057 = vadd.f32 %v2055, %v2056
    %v2058 = vsub.f32 %v1349, %v2057
    %v2059 = vmul.f32 %v2058, %v2000
    %v2060 = vlaneseq
    %v2061 = vshrl.u32 %v2060, 7
    %v2062 = vsub.s32 1, %v2061
    %v2063 = vrot.slane %v2059, %v2062
    %v2064 = vmul.f32 %v2041, %v2063
    %v2065 = vmul.f32 %v2045, %v2063
    %v2066 = vadd.f32 %v2037, %v2064
    %v2067 = vadd.f32 %v2038, %v2065
    %2068 = vset.pattern.permute.xlu0 1
    %2069 = vperm.xlu0 %2068, %v1920
    %v2070 = vpop.permute.xlu0 %2069
    %2072 = vset.pattern.permute.xlu0 1
    %2073 = vperm.xlu0 %2072, %v1921
    %v2074 = vpop.permute.xlu0 %2073
    %v2076 = vmul.f32 %v2070, %v2066
    %v2077 = vmul.f32 %v2074, %v2067
    %v2078 = vsel %vm919, %v2076, 0.0
    %v2079 = vsel %vm919, %v2077, 0.0
    %v2080 = vadd.f32 %v2078, %v2079
    %v2081 = vrot.slane %v2080, 4
    %v2082 = vadd.f32 %v2080, %v2081
    %v2083 = vrot.slane %v2082, 2
    %v2084 = vadd.f32 %v2082, %v2083
    %v2085 = vrot.slane %v2084, 1
    %v2086 = vadd.f32 %v2084, %v2085
    %2087 = vrot.lane.b32.xlu0 %v1550, 127
    %v2088 = vpop.permute.xlu0 %2087
    %s2089 = vtos %v2088
    %v2090 = vstv %s2089
    %v2092 = vmul.f32 %v2066, %v2090
    %v2093 = vmul.f32 %v2067, %v2090
    %2094 = vset.pattern.permute.xlu0 2
    %2095 = vperm.xlu0 %2094, %v1956
    %v2096 = vpop.permute.xlu0 %2095
    %2098 = vset.pattern.permute.xlu0 2
    %2099 = vperm.xlu0 %2098, %v1957
    %v2100 = vpop.permute.xlu0 %2099
    %v2102 = vmul.f32 %v2096, %v2092
    %v2103 = vmul.f32 %v2100, %v2093
    %v2104 = vsel %vm919, %v2102, 0.0
    %v2105 = vsel %vm919, %v2103, 0.0
    %v2106 = vadd.f32 %v2104, %v2105
    %v2107 = vrot.slane %v2106, 4
    %v2108 = vadd.f32 %v2106, %v2107
    %v2109 = vrot.slane %v2108, 2
    %v2110 = vadd.f32 %v2108, %v2109
    %v2111 = vrot.slane %v2110, 1
    %v2112 = vadd.f32 %v2110, %v2111
    %v2113 = vsub.f32 %v1349, %v2112
    %v2114 = vmul.f32 %v2113, %v2000
    %v2115 = vlaneseq
    %v2116 = vshrl.u32 %v2115, 7
    %v2117 = vsub.s32 2, %v2116
    %v2118 = vrot.slane %v2114, %v2117
    %v2119 = vmul.f32 %v2096, %v2118
    %v2120 = vmul.f32 %v2100, %v2118
    %v2121 = vadd.f32 %v2092, %v2119
    %v2122 = vadd.f32 %v2093, %v2120
    %2123 = vset.pattern.permute.xlu0 2
    %2124 = vperm.xlu0 %2123, %v1920
    %v2125 = vpop.permute.xlu0 %2124
    %2127 = vset.pattern.permute.xlu0 2
    %2128 = vperm.xlu0 %2127, %v1921
    %v2129 = vpop.permute.xlu0 %2128
    %v2131 = vmul.f32 %v2125, %v2121
    %v2132 = vmul.f32 %v2129, %v2122
    %v2133 = vsel %vm919, %v2131, 0.0
    %v2134 = vsel %vm919, %v2132, 0.0
    %v2135 = vadd.f32 %v2133, %v2134
    %v2136 = vrot.slane %v2135, 4
    %v2137 = vadd.f32 %v2135, %v2136
    %v2138 = vrot.slane %v2137, 2
    %v2139 = vadd.f32 %v2137, %v2138
    %v2140 = vrot.slane %v2139, 1
    %v2141 = vadd.f32 %v2139, %v2140
    %2142 = vrot.lane.b32.xlu0 %v1604, 127
    %v2143 = vpop.permute.xlu0 %2142
    %s2144 = vtos %v2143
    %v2145 = vstv %s2144
    %v2147 = vmul.f32 %v2121, %v2145
    %v2148 = vmul.f32 %v2122, %v2145
    %2149 = vset.pattern.permute.xlu0 3
    %2150 = vperm.xlu0 %2149, %v1956
    %v2151 = vpop.permute.xlu0 %2150
    %2153 = vset.pattern.permute.xlu0 3
    %2154 = vperm.xlu0 %2153, %v1957
    %v2155 = vpop.permute.xlu0 %2154
    %v2157 = vmul.f32 %v2151, %v2147
    %v2158 = vmul.f32 %v2155, %v2148
    %v2159 = vsel %vm919, %v2157, 0.0
    %v2160 = vsel %vm919, %v2158, 0.0
    %v2161 = vadd.f32 %v2159, %v2160
    %v2162 = vrot.slane %v2161, 4
    %v2163 = vadd.f32 %v2161, %v2162
    %v2164 = vrot.slane %v2163, 2
    %v2165 = vadd.f32 %v2163, %v2164
    %v2166 = vrot.slane %v2165, 1
    %v2167 = vadd.f32 %v2165, %v2166
    %v2168 = vsub.f32 %v1349, %v2167
    %v2169 = vmul.f32 %v2168, %v2000
    %v2170 = vlaneseq
    %v2171 = vshrl.u32 %v2170, 7
    %v2172 = vsub.s32 3, %v2171
    %v2173 = vrot.slane %v2169, %v2172
    %v2174 = vmul.f32 %v2151, %v2173
    %v2175 = vmul.f32 %v2155, %v2173
    %v2176 = vadd.f32 %v2147, %v2174
    %v2177 = vadd.f32 %v2148, %v2175
    %2178 = vset.pattern.permute.xlu0 3
    %2179 = vperm.xlu0 %2178, %v1920
    %v2180 = vpop.permute.xlu0 %2179
    %2182 = vset.pattern.permute.xlu0 3
    %2183 = vperm.xlu0 %2182, %v1921
    %v2184 = vpop.permute.xlu0 %2183
    %v2186 = vmul.f32 %v2180, %v2176
    %v2187 = vmul.f32 %v2184, %v2177
    %v2188 = vsel %vm919, %v2186, 0.0
    %v2189 = vsel %vm919, %v2187, 0.0
    %v2190 = vadd.f32 %v2188, %v2189
    %v2191 = vrot.slane %v2190, 4
    %v2192 = vadd.f32 %v2190, %v2191
    %v2193 = vrot.slane %v2192, 2
    %v2194 = vadd.f32 %v2192, %v2193
    %v2195 = vrot.slane %v2194, 1
    %v2196 = vadd.f32 %v2194, %v2195
    %2197 = vrot.lane.b32.xlu0 %v1658, 127
    %v2198 = vpop.permute.xlu0 %2197
    %s2199 = vtos %v2198
    %v2200 = vstv %s2199
    %v2202 = vmul.f32 %v2176, %v2200
    %v2203 = vmul.f32 %v2177, %v2200
    %2204 = vset.pattern.permute.xlu0 4
    %2205 = vperm.xlu0 %2204, %v1956
    %v2206 = vpop.permute.xlu0 %2205
    %2208 = vset.pattern.permute.xlu0 4
    %2209 = vperm.xlu0 %2208, %v1957
    %v2210 = vpop.permute.xlu0 %2209
    %v2212 = vmul.f32 %v2206, %v2202
    %v2213 = vmul.f32 %v2210, %v2203
    %v2214 = vsel %vm919, %v2212, 0.0
    %v2215 = vsel %vm919, %v2213, 0.0
    %v2216 = vadd.f32 %v2214, %v2215
    %v2217 = vrot.slane %v2216, 4
    %v2218 = vadd.f32 %v2216, %v2217
    %v2219 = vrot.slane %v2218, 2
    %v2220 = vadd.f32 %v2218, %v2219
    %v2221 = vrot.slane %v2220, 1
    %v2222 = vadd.f32 %v2220, %v2221
    %v2223 = vsub.f32 %v1349, %v2222
    %v2224 = vmul.f32 %v2223, %v2000
    %v2225 = vlaneseq
    %v2226 = vshrl.u32 %v2225, 7
    %v2227 = vsub.s32 4, %v2226
    %v2228 = vrot.slane %v2224, %v2227
    %v2229 = vmul.f32 %v2206, %v2228
    %v2230 = vmul.f32 %v2210, %v2228
    %v2231 = vadd.f32 %v2202, %v2229
    %v2232 = vadd.f32 %v2203, %v2230
    %2233 = vset.pattern.permute.xlu0 4
    %2234 = vperm.xlu0 %2233, %v1920
    %v2235 = vpop.permute.xlu0 %2234
    %2237 = vset.pattern.permute.xlu0 4
    %2238 = vperm.xlu0 %2237, %v1921
    %v2239 = vpop.permute.xlu0 %2238
    %v2241 = vmul.f32 %v2235, %v2231
    %v2242 = vmul.f32 %v2239, %v2232
    %v2243 = vsel %vm919, %v2241, 0.0
    %v2244 = vsel %vm919, %v2242, 0.0
    %v2245 = vadd.f32 %v2243, %v2244
    %v2246 = vrot.slane %v2245, 4
    %v2247 = vadd.f32 %v2245, %v2246
    %v2248 = vrot.slane %v2247, 2
    %v2249 = vadd.f32 %v2247, %v2248
    %v2250 = vrot.slane %v2249, 1
    %v2251 = vadd.f32 %v2249, %v2250
    %2252 = vrot.lane.b32.xlu0 %v1712, 127
    %v2253 = vpop.permute.xlu0 %2252
    %s2254 = vtos %v2253
    %v2255 = vstv %s2254
    %v2257 = vmul.f32 %v2231, %v2255
    %v2258 = vmul.f32 %v2232, %v2255
    %2259 = vset.pattern.permute.xlu0 5
    %2260 = vperm.xlu0 %2259, %v1956
    %v2261 = vpop.permute.xlu0 %2260
    %2263 = vset.pattern.permute.xlu0 5
    %2264 = vperm.xlu0 %2263, %v1957
    %v2265 = vpop.permute.xlu0 %2264
    %v2267 = vmul.f32 %v2261, %v2257
    %v2268 = vmul.f32 %v2265, %v2258
    %v2269 = vsel %vm919, %v2267, 0.0
    %v2270 = vsel %vm919, %v2268, 0.0
    %v2271 = vadd.f32 %v2269, %v2270
    %v2272 = vrot.slane %v2271, 4
    %v2273 = vadd.f32 %v2271, %v2272
    %v2274 = vrot.slane %v2273, 2
    %v2275 = vadd.f32 %v2273, %v2274
    %v2276 = vrot.slane %v2275, 1
    %v2277 = vadd.f32 %v2275, %v2276
    %v2278 = vsub.f32 %v1349, %v2277
    %v2279 = vmul.f32 %v2278, %v2000
    %v2280 = vlaneseq
    %v2281 = vshrl.u32 %v2280, 7
    %v2282 = vsub.s32 5, %v2281
    %v2283 = vrot.slane %v2279, %v2282
    %v2284 = vmul.f32 %v2261, %v2283
    %v2285 = vmul.f32 %v2265, %v2283
    %v2286 = vadd.f32 %v2257, %v2284
    %v2287 = vadd.f32 %v2258, %v2285
    %2288 = vset.pattern.permute.xlu0 5
    %2289 = vperm.xlu0 %2288, %v1920
    %v2290 = vpop.permute.xlu0 %2289
    %2292 = vset.pattern.permute.xlu0 5
    %2293 = vperm.xlu0 %2292, %v1921
    %v2294 = vpop.permute.xlu0 %2293
    %v2296 = vmul.f32 %v2290, %v2286
    %v2297 = vmul.f32 %v2294, %v2287
    %v2298 = vsel %vm919, %v2296, 0.0
    %v2299 = vsel %vm919, %v2297, 0.0
    %v2300 = vadd.f32 %v2298, %v2299
    %v2301 = vrot.slane %v2300, 4
    %v2302 = vadd.f32 %v2300, %v2301
    %v2303 = vrot.slane %v2302, 2
    %v2304 = vadd.f32 %v2302, %v2303
    %v2305 = vrot.slane %v2304, 1
    %v2306 = vadd.f32 %v2304, %v2305
    %2307 = vrot.lane.b32.xlu0 %v1766, 127
    %v2308 = vpop.permute.xlu0 %2307
    %s2309 = vtos %v2308
    %v2310 = vstv %s2309
    %v2312 = vmul.f32 %v2286, %v2310
    %v2313 = vmul.f32 %v2287, %v2310
    %2314 = vset.pattern.permute.xlu0 6
    %2315 = vperm.xlu0 %2314, %v1956
    %v2316 = vpop.permute.xlu0 %2315
    %2318 = vset.pattern.permute.xlu0 6
    %2319 = vperm.xlu0 %2318, %v1957
    %v2320 = vpop.permute.xlu0 %2319
    %v2322 = vmul.f32 %v2316, %v2312
    %v2323 = vmul.f32 %v2320, %v2313
    %v2324 = vsel %vm919, %v2322, 0.0
    %v2325 = vsel %vm919, %v2323, 0.0
    %v2326 = vadd.f32 %v2324, %v2325
    %v2327 = vrot.slane %v2326, 4
    %v2328 = vadd.f32 %v2326, %v2327
    %v2329 = vrot.slane %v2328, 2
    %v2330 = vadd.f32 %v2328, %v2329
    %v2331 = vrot.slane %v2330, 1
    %v2332 = vadd.f32 %v2330, %v2331
    %v2333 = vsub.f32 %v1349, %v2332
    %v2334 = vmul.f32 %v2333, %v2000
    %v2335 = vlaneseq
    %v2336 = vshrl.u32 %v2335, 7
    %v2337 = vsub.s32 6, %v2336
    %v2338 = vrot.slane %v2334, %v2337
    %v2339 = vmul.f32 %v2316, %v2338
    %v2340 = vmul.f32 %v2320, %v2338
    %v2341 = vadd.f32 %v2312, %v2339
    %v2342 = vadd.f32 %v2313, %v2340
    %2343 = vset.pattern.permute.xlu0 6
    %2344 = vperm.xlu0 %2343, %v1920
    %v2345 = vpop.permute.xlu0 %2344
    %2347 = vset.pattern.permute.xlu0 6
    %2348 = vperm.xlu0 %2347, %v1921
    %v2349 = vpop.permute.xlu0 %2348
    %v2351 = vmul.f32 %v2345, %v2341
    %v2352 = vmul.f32 %v2349, %v2342
    %v2353 = vsel %vm919, %v2351, 0.0
    %v2354 = vsel %vm919, %v2352, 0.0
    %v2355 = vadd.f32 %v2353, %v2354
    %v2356 = vrot.slane %v2355, 4
    %v2357 = vadd.f32 %v2355, %v2356
    %v2358 = vrot.slane %v2357, 2
    %v2359 = vadd.f32 %v2357, %v2358
    %v2360 = vrot.slane %v2359, 1
    %v2361 = vadd.f32 %v2359, %v2360
    %2362 = vrot.lane.b32.xlu0 %v1820, 127
    %v2363 = vpop.permute.xlu0 %2362
    %s2364 = vtos %v2363
    %v2365 = vstv %s2364
    %v2367 = vmul.f32 %v2341, %v2365
    %v2368 = vmul.f32 %v2342, %v2365
    %2369 = vset.pattern.permute.xlu0 7
    %2370 = vperm.xlu0 %2369, %v1956
    %v2371 = vpop.permute.xlu0 %2370
    %2373 = vset.pattern.permute.xlu0 7
    %2374 = vperm.xlu0 %2373, %v1957
    %v2375 = vpop.permute.xlu0 %2374
    %v2377 = vmul.f32 %v2371, %v2367
    %v2378 = vmul.f32 %v2375, %v2368
    %v2379 = vsel %vm919, %v2377, 0.0
    %v2380 = vsel %vm919, %v2378, 0.0
    %v2381 = vadd.f32 %v2379, %v2380
    %v2382 = vrot.slane %v2381, 4
    %v2383 = vadd.f32 %v2381, %v2382
    %v2384 = vrot.slane %v2383, 2
    %v2385 = vadd.f32 %v2383, %v2384
    %v2386 = vrot.slane %v2385, 1
    %v2387 = vadd.f32 %v2385, %v2386
    %v2388 = vsub.f32 %v1349, %v2387
    %v2389 = vmul.f32 %v2388, %v2000
    %v2390 = vlaneseq
    %v2391 = vshrl.u32 %v2390, 7
    %v2392 = vsub.s32 7, %v2391
    %v2393 = vrot.slane %v2389, %v2392
    %v2394 = vmul.f32 %v2371, %v2393
    %v2395 = vmul.f32 %v2375, %v2393
    %v2396 = vadd.f32 %v2367, %v2394
    %v2397 = vadd.f32 %v2368, %v2395
    %2398 = vset.pattern.permute.xlu0 7
    %2399 = vperm.xlu0 %2398, %v1920
    %v2400 = vpop.permute.xlu0 %2399
    %2402 = vset.pattern.permute.xlu0 7
    %2403 = vperm.xlu0 %2402, %v1921
    %v2404 = vpop.permute.xlu0 %2403
    %v2406 = vmul.f32 %v2400, %v2396
    %v2407 = vmul.f32 %v2404, %v2397
    %v2408 = vsel %vm919, %v2406, 0.0
    %v2409 = vsel %vm919, %v2407, 0.0
    %v2410 = vadd.f32 %v2408, %v2409
    %v2411 = vrot.slane %v2410, 4
    %v2412 = vadd.f32 %v2410, %v2411
    %v2413 = vrot.slane %v2412, 2
    %v2414 = vadd.f32 %v2412, %v2413
    %v2415 = vrot.slane %v2414, 1
    %v2416 = vadd.f32 %v2414, %v2415
    %v2417 = vsel %vm763, %v2031, %v2086
    %v2418 = vsel %vm765, %v2417, %v2141
    %v2419 = vsel %vm767, %v2418, %v2196
    %v2420 = vsel %vm769, %v2419, %v2251
    %v2421 = vsel %vm771, %v2420, %v2306
    %v2422 = vsel %vm773, %v2421, %v2361
    %v2423 = vsel %vm775, %v2422, %v2416
    %2425 = vrot.lane.b32.xlu0 %v1880, 64
    %v2426 = vpop.permute.xlu0 %2425
    %2429 = vrot.lane.b32.xlu0 %v2423, 64
    %v2430 = vpop.permute.xlu0 %2429
    %v2432 = vsel %vm238, %v2426, %v2430
    %v2433 = vmul.f32 %v1329, %v1329
    %v2434 = vmul.f32 %v2432, %v2432
    %v2435 = vsel %vm238, %v2433, 0.0
    %2436 = vadd.xlane.f32.xlu0 %v2435
    %v2437 = vpop.xlane.xlu0 %2436
    %v2438 = vsel %vm238, %v2434, 0.0
    %2439 = vadd.xlane.f32.xlu0 %v2438
    %v2440 = vpop.xlane.xlu0 %2439
    %v2441 = vrcp.pop 16.0
    %v2442 = vmul.f32 %v2437, %v2441
    %v2443 = vmul.f32 %v2440, %v2441
    %v2444 = vadd.f32 %v2442, 1e-05
    %v2445 = vadd.f32 %v2443, 1e-05
    %v2446 = vrsqrt.pop %v2444
    %v2447 = vrsqrt.pop %v2445
    %v2448 = vmul.f32 %v1329, %v2446
    %v2449 = vmul.f32 %v2432, %v2447
    %v2450 = vsub.f32 0.0, %v116
    %v2451 = vsub.f32 0.0, %v120
    %v2452 = vmul.f32 %v2450, 1.442695
    %v2453 = vpow.pop %v2452
    %v2454 = vmul.f32 %v2451, 1.442695
    %v2455 = vpow.pop %v2454
    %v2456 = vadd.f32 %v2453, 1.0
    %v2457 = vadd.f32 %v2455, 1.0
    %v2458 = vrcp.pop %v2456
    %v2459 = vmul.f32 1.0, %v2458
    %v2460 = vrcp.pop %v2457
    %v2461 = vmul.f32 1.0, %v2460
    %v2462 = vmul.f32 %v116, %v2459
    %v2463 = vmul.f32 %v120, %v2461
    %2466 = vrot.lane.b32.xlu0 %v2462, 32
    %v2467 = vpop.permute.xlu0 %2466
    %2468 = vrot.lane.b32.xlu0 %v2463, 32
    %v2469 = vpop.permute.xlu0 %2468
    %v2472 = vmul.f32 %v2448, %v2467
    %v2473 = vmul.f32 %v2449, %v2469
    %2476 = vrot.lane.b32.xlu0 %v2433, 112
    %v2477 = vpop.permute.xlu0 %2476
    %2478 = vrot.lane.b32.xlu0 %v2434, 112
    %v2479 = vpop.permute.xlu0 %2478
    %v2482 = vsel %vm238, %v2477, 0.0
    %2483 = vadd.xlane.f32.xlu0 %v2482
    %v2484 = vpop.xlane.xlu0 %2483
    %v2485 = vsel %vm238, %v2479, 0.0
    %2486 = vadd.xlane.f32.xlu0 %v2485
    %v2487 = vpop.xlane.xlu0 %2486
    %v2488 = vmul.f32 %v2484, %v2441
    %v2489 = vmul.f32 %v2487, %v2441
    %v2490 = vadd.f32 %v2488, 1e-05
    %v2491 = vadd.f32 %v2489, 1e-05
    %v2492 = vrsqrt.pop %v2490
    %v2493 = vrsqrt.pop %v2491
    %v2494 = vmul.f32 %v1329, %v2492
    %v2495 = vmul.f32 %v2432, %v2493
    %v2496 = vmul.f32 %v2494, %v2467
    %v2497 = vmul.f32 %v2495, %v2469
    %v2498 = vsel %vm238, %v2472, %v2496
    %v2499 = vsel %vm238, %v2473, %v2497
    %v2500 = vld [vmem:[%s5] sm:$0xf]
    %v2501 = vld [vmem:[%s5 + $0x4] sm:$0xf]
    %v2502 = vld [vmem:[%s5 + $0x8] sm:$0xf]
    %v2503 = vld [vmem:[%s5 + $0xc] sm:$0xf]
    %v2504 = vpack.c.bf16 %v2499, %v2498
    %v2509 = vunpack.c.l.b16 %v2500
    %v2510 = vunpack.c.l.b16 %v2501
    %v2511 = vunpack.c.l.b16 %v2502
    %v2512 = vunpack.c.l.b16 %v2503
    %v2513 = vpack.c.b16 %v2510, %v2509
    %v2514 = vpack.c.b16 %v2512, %v2511
    %v2518 = vsel %vm37, %v2504, 0
    %2520 = vmatprep.subr.bf16.mxu0 0
    %2521 = vmatpush1.bf16.msra.mxu0 0
    %2522 = vmatprep.subr.bf16.mxu0 0
    %2523 = vmatpush1.bf16.msra.mxu0 0
    %2524 = vmatprep.subr.bf16.mxu0 0
    %2525 = vmatpush1.bf16.msra.mxu0 0
    %2526 = vmatprep.subr.bf16.mxu0 0
    %2527 = vmatpush1.bf16.msra.mxu0 0
    %2528 = vmatprep.subr.bf16.mxu0 0
    %2529 = vmatpush1.bf16.msra.mxu0 0
    %2530 = vmatprep.subr.bf16.mxu0 0
    %2531 = vmatpush1.bf16.msra.mxu0 0
    %2532 = vmatprep.subr.bf16.mxu0 0
    %2533 = vmatpush1.bf16.msra.mxu0 %v2514
    %2534 = vmatprep.subr.bf16.mxu0 0
    %2535 = vmatpush1.bf16.msra.mxu0 %v2513
    %2536 = vmatprep.subr.bf16.mxu0 0
    %2537 = vmatpush2.bf16.msra.mxu0 0
    %2538 = vmatprep.subr.bf16.mxu0 0
    %2539 = vmatpush2.bf16.msra.mxu0 0
    %2540 = vmatprep.subr.bf16.mxu0 0
    %2541 = vmatpush2.bf16.msra.mxu0 0
    %2542 = vmatprep.subr.bf16.mxu0 0
    %2543 = vmatpush2.bf16.msra.mxu0 0
    %2544 = vmatprep.subr.bf16.mxu0 0
    %2545 = vmatpush2.bf16.msra.mxu0 0
    %2546 = vmatprep.subr.bf16.mxu0 0
    %2547 = vmatpush2.bf16.msra.mxu0 0
    %2548 = vmatprep.subr.bf16.mxu0 0
    %2549 = vmatpush2.bf16.msra.mxu0 0
    %2550 = vmatprep.subr.bf16.mxu0 0
    %2551 = vmatpush2.bf16.msra.mxu0 0
    %2552 = vmatprep.mubr.bf16.mxu0 0
    %2553 = vmatmul.mubr.bf16.gmra.mxu0 %v2518
    %v2554 = vpop.f32.mrf.mxu0
    %v2555 = vadd.f32 0.0, %v2554
    %v2556 = vpop.f32.mrf.mxu0
    %v2557 = vpop.f32.mrf.mxu0
    %v2558 = vadd.f32 0.0, %v2557
    %v2559 = vpop.f32.mrf.mxu0
    %2560 = vdwg.mxu0
    %v2561 = vadd.f32 %v31, %v2555
    %v2562 = vadd.f32 %v32, %v2558
    %v2563 = vmul.f32 %v2561, 0.70710677
    %v2564 = vmul.f32 %v2562, 0.70710677
    %v2565 = vmul.f32 %v2561, %v2561
    %v2566 = vmul.f32 %v2562, %v2562
    %v2567 = vsel %vm37, %v2565, 0.0
    %2568 = vadd.xlane.f32.xlu0 %v2567
    %v2569 = vpop.xlane.xlu0 %2568
    %v2570 = vsel %vm37, %v2566, 0.0
    %2571 = vadd.xlane.f32.xlu0 %v2570
    %v2572 = vpop.xlane.xlu0 %2571
    %v2573 = vmul.f32 %v2569, %v44
    %v2574 = vmul.f32 %v2572, %v44
    %v2575 = vadd.f32 %v2573, 1.1920929e-07
    %v2576 = vadd.f32 %v2574, 1.1920929e-07
    %v2577 = vrsqrt.pop %v2575
    %v2578 = vrsqrt.pop %v2576
    %v2579 = vmul.f32 %v2563, %v2577
    %v2580 = vmul.f32 %v2564, %v2578
    %v2581 = vld [vmem:[%s6] sm:$0xf]
    %v2582 = vld [vmem:[%s6 + $0x4] sm:$0xf]
    %v2583 = vld [vmem:[%s6 + $0x8] sm:$0xf]
    %v2584 = vld [vmem:[%s6 + $0xc] sm:$0xf]
    %v2585 = vpack.c.bf16 %v2580, %v2579
    %v2590 = vunpack.c.l.b16 %v2581
    %v2591 = vunpack.c.l.b16 %v2582
    %v2592 = vunpack.c.l.b16 %v2583
    %v2593 = vunpack.c.l.b16 %v2584
    %v2594 = vpack.c.b16 %v2591, %v2590
    %v2595 = vpack.c.b16 %v2593, %v2592
    %v2599 = vsel %vm37, %v2585, 0
    %2601 = vmatprep.subr.bf16.mxu0 0
    %2602 = vmatpush1.bf16.msra.mxu0 0
    %2603 = vmatprep.subr.bf16.mxu0 0
    %2604 = vmatpush1.bf16.msra.mxu0 0
    %2605 = vmatprep.subr.bf16.mxu0 0
    %2606 = vmatpush1.bf16.msra.mxu0 0
    %2607 = vmatprep.subr.bf16.mxu0 0
    %2608 = vmatpush1.bf16.msra.mxu0 0
    %2609 = vmatprep.subr.bf16.mxu0 0
    %2610 = vmatpush1.bf16.msra.mxu0 0
    %2611 = vmatprep.subr.bf16.mxu0 0
    %2612 = vmatpush1.bf16.msra.mxu0 0
    %2613 = vmatprep.subr.bf16.mxu0 0
    %2614 = vmatpush1.bf16.msra.mxu0 %v2595
    %2615 = vmatprep.subr.bf16.mxu0 0
    %2616 = vmatpush1.bf16.msra.mxu0 %v2594
    %2617 = vmatprep.subr.bf16.mxu0 0
    %2618 = vmatpush2.bf16.msra.mxu0 0
    %2619 = vmatprep.subr.bf16.mxu0 0
    %2620 = vmatpush2.bf16.msra.mxu0 0
    %2621 = vmatprep.subr.bf16.mxu0 0
    %2622 = vmatpush2.bf16.msra.mxu0 0
    %2623 = vmatprep.subr.bf16.mxu0 0
    %2624 = vmatpush2.bf16.msra.mxu0 0
    %2625 = vmatprep.subr.bf16.mxu0 0
    %2626 = vmatpush2.bf16.msra.mxu0 0
    %2627 = vmatprep.subr.bf16.mxu0 0
    %2628 = vmatpush2.bf16.msra.mxu0 0
    %2629 = vmatprep.subr.bf16.mxu0 0
    %2630 = vmatpush2.bf16.msra.mxu0 0
    %2631 = vmatprep.subr.bf16.mxu0 0
    %2632 = vmatpush2.bf16.msra.mxu0 0
    %2633 = vmatprep.mubr.bf16.mxu0 0
    %2634 = vmatmul.mubr.bf16.gmra.mxu0 %v2599
    %v2635 = vpop.f32.mrf.mxu0
    %v2636 = vadd.f32 0.0, %v2635
    %v2637 = vpop.f32.mrf.mxu0
    %v2638 = vpop.f32.mrf.mxu0
    %v2639 = vadd.f32 0.0, %v2638
    %v2640 = vpop.f32.mrf.mxu0
    %2641 = vdwg.mxu0
    %v2642 = vmax.f32 %v2636, 0.0
    %v2643 = vmax.f32 %v2639, 0.0
    %v2644 = vmul.f32 %v2642, %v2642
    %v2645 = vmul.f32 %v2643, %v2643
    %v2646 = vld [vmem:[%s7] sm:$0xf]
    %v2647 = vld [vmem:[%s7 + $0x4] sm:$0xf]
    %v2648 = vld [vmem:[%s7 + $0x8] sm:$0xf]
    %v2649 = vld [vmem:[%s7 + $0xc] sm:$0xf]
    %v2650 = vld [vmem:[%s7 + $0x10] sm:$0xf]
    %v2651 = vld [vmem:[%s7 + $0x14] sm:$0xf]
    %v2652 = vld [vmem:[%s7 + $0x18] sm:$0xf]
    %v2653 = vld [vmem:[%s7 + $0x1c] sm:$0xf]
    %v2654 = vld [vmem:[%s7 + $0x20] sm:$0xf]
    %v2655 = vld [vmem:[%s7 + $0x24] sm:$0xf]
    %v2656 = vld [vmem:[%s7 + $0x28] sm:$0xf]
    %v2657 = vld [vmem:[%s7 + $0x2c] sm:$0xf]
    %v2658 = vld [vmem:[%s7 + $0x30] sm:$0xf]
    %v2659 = vld [vmem:[%s7 + $0x34] sm:$0xf]
    %v2660 = vld [vmem:[%s7 + $0x38] sm:$0xf]
    %v2661 = vld [vmem:[%s7 + $0x3c] sm:$0xf]
    %v2662 = vpack.c.bf16 %v2645, %v2644
    %v2679 = vunpack.c.l.b16 %v2646
    %v2680 = vunpack.c.l.b16 %v2647
    %v2681 = vunpack.c.l.b16 %v2648
    %v2682 = vunpack.c.l.b16 %v2649
    %v2683 = vunpack.c.l.b16 %v2650
    %v2684 = vunpack.c.l.b16 %v2651
    %v2685 = vunpack.c.l.b16 %v2652
    %v2686 = vunpack.c.l.b16 %v2653
    %v2687 = vunpack.c.l.b16 %v2654
    %v2688 = vunpack.c.l.b16 %v2655
    %v2689 = vunpack.c.l.b16 %v2656
    %v2690 = vunpack.c.l.b16 %v2657
    %v2691 = vunpack.c.l.b16 %v2658
    %v2692 = vunpack.c.l.b16 %v2659
    %v2693 = vunpack.c.l.b16 %v2660
    %v2694 = vunpack.c.l.b16 %v2661
    %v2695 = vpack.c.b16 %v2680, %v2679
    %v2696 = vpack.c.b16 %v2682, %v2681
    %v2697 = vpack.c.b16 %v2684, %v2683
    %v2698 = vpack.c.b16 %v2686, %v2685
    %v2699 = vpack.c.b16 %v2688, %v2687
    %v2700 = vpack.c.b16 %v2690, %v2689
    %v2701 = vpack.c.b16 %v2692, %v2691
    %v2702 = vpack.c.b16 %v2694, %v2693
    %2711 = vmatprep.subr.bf16.mxu0 0
    %2712 = vmatpush1.bf16.msra.mxu0 %v2702
    %2713 = vmatprep.subr.bf16.mxu0 0
    %2714 = vmatpush1.bf16.msra.mxu0 %v2701
    %2715 = vmatprep.subr.bf16.mxu0 0
    %2716 = vmatpush1.bf16.msra.mxu0 %v2700
    %2717 = vmatprep.subr.bf16.mxu0 0
    %2718 = vmatpush1.bf16.msra.mxu0 %v2699
    %2719 = vmatprep.subr.bf16.mxu0 0
    %2720 = vmatpush1.bf16.msra.mxu0 %v2698
    %2721 = vmatprep.subr.bf16.mxu0 0
    %2722 = vmatpush1.bf16.msra.mxu0 %v2697
    %2723 = vmatprep.subr.bf16.mxu0 0
    %2724 = vmatpush1.bf16.msra.mxu0 %v2696
    %2725 = vmatprep.subr.bf16.mxu0 0
    %2726 = vmatpush1.bf16.msra.mxu0 %v2695
    %2727 = vmatprep.subr.bf16.mxu0 0
    %2728 = vmatpush2.bf16.msra.mxu0 0
    %2729 = vmatprep.subr.bf16.mxu0 0
    %2730 = vmatpush2.bf16.msra.mxu0 0
    %2731 = vmatprep.subr.bf16.mxu0 0
    %2732 = vmatpush2.bf16.msra.mxu0 0
    %2733 = vmatprep.subr.bf16.mxu0 0
    %2734 = vmatpush2.bf16.msra.mxu0 0
    %2735 = vmatprep.subr.bf16.mxu0 0
    %2736 = vmatpush2.bf16.msra.mxu0 0
    %2737 = vmatprep.subr.bf16.mxu0 0
    %2738 = vmatpush2.bf16.msra.mxu0 0
    %2739 = vmatprep.subr.bf16.mxu0 0
    %2740 = vmatpush2.bf16.msra.mxu0 0
    %2741 = vmatprep.subr.bf16.mxu0 0
    %2742 = vmatpush2.bf16.msra.mxu0 0
    %2743 = vmatprep.mubr.bf16.mxu0 0
    %2744 = vmatmul.mubr.bf16.gmra.mxu0 %v2662
    %v2745 = vpop.f32.mrf.mxu0
    %v2746 = vadd.f32 0.0, %v2745
    %v2747 = vpop.f32.mrf.mxu0
    %v2748 = vpop.f32.mrf.mxu0
    %v2749 = vadd.f32 0.0, %v2748
    %v2750 = vpop.f32.mrf.mxu0
    %2751 = vdwg.mxu0
    %v2752 = vadd.f32 %v2561, %v2746
    %v2753 = vadd.f32 %v2562, %v2749
    %2754 = vst.msk [vmem:[#allocation2] sm:$0xff] %vm37, %v2752
    %2755 = vst.msk [vmem:[#allocation2 + $0x8] sm:$0xff] %vm37, %v2753
    // Predicated region
    $region34: #{block_forward.1} parent=1 // pred_check
      _
    $region35: #{block_forward.1} parent=1 // pred_check_branch
      %2757 = sbr.rel (0) target = $region37
    $region36: #{block_forward.1} parent=1 // pred_region
      %s2759 = ssub.s32 256, 256
      %2760 = vsyncadd [#allocation3], %s2759
      %s2761 = sshll.u32 [#allocation2], 4
      %s2762 = int_to_ptr.vmem [resolvable:$true] %s2761
      %2767 = dma.vmem_to_hbm [thread:$0]  %s2762, 256, %s8, [#allocation3], 128, 128, 8
    $region37: #{block_forward.1} parent=1 // pred_fallthru
      _
    // Predicated region
    $region38: #{block_forward.1} parent=1 // pred_check
      _
    $region39: #{block_forward.1} parent=1 // pred_check_branch
      %2769 = sbr.rel (0) target = $region41
    $region40: #{block_forward.1} parent=1 // pred_region
      %2770 = dma.done [#allocation3], 256
    $region41: #{block_forward.1} parent=1 // pred_fallthru
      _
    %2771 = vsyncpa [#allocation3], 1

</llo_original>
